<compile_context>
chip_gen: v7x
topology: tpu7x:2x2x1
jax: 0.10.0
libtpu: 0.0.40
codegen_flags: <defaults>
</compile_context>

<pallas_src>
import functools
import math

import jax
import jax.numpy as jnp
from jax.experimental import pallas as pl
from jax.experimental.pallas import tpu as pltpu


# ---------------------------------------------------------------------------
# Architecture constants (fixed by the PyTorch module) and blob layouts.
# ---------------------------------------------------------------------------
_HIDDEN = 128          # self-attention hidden size
_SEQ = 4               # AdaptiveMaxPool1d(4) output length
_OUT_DIM = 256         # layer5 Linear output

# conv blob: {layer: (row_offset, n_rows = K*Cin, Cout)}; rows padded to x8.
_CONV = {1: (0, 15, 16), 2: (16, 48, 32), 3: (64, 96, 64), 4: (160, 192, 128)}
_CONV_BLOB_SHAPE = (352, 128)

# dense blob: rows 0:128 = Wqkv (128, 384); rows 128:640 = W5^T (512, 256).
_W5_ROW0 = _HIDDEN
_DENSE_BLOB_SHAPE = (_W5_ROW0 + _SEQ * _HIDDEN, 3 * _HIDDEN)      # (640, 384)

# f32 vector blob rows: s1,t1,s2,t2,s3,t3,s4,t4,bqkv,b5  (one param per row).
_ROW_BQKV, _ROW_B5 = 8, 9
_VEC_BLOB_SHAPE = (10, 3 * _HIDDEN)                               # (10, 384)

_VMEM = pl.BlockSpec(memory_space=pltpu.MemorySpace.VMEM)


# ---------------------------------------------------------------------------
# Fused forward kernel
# ---------------------------------------------------------------------------
def _cnn_fused_kernel(patches_ref,    # (B*L1, K1*Cin) bf16  im2col'd layer1 input
                      wconv_ref,      # (352, 128)     bf16  packed conv weights
                      wdense_ref,     # (640, 384)     bf16  packed Wqkv | W5
                      vec_ref,        # (10, 384)      f32   BN scale/shift + biases
                      o_ref,          # (B, 256)       f32
                      *, batch, num_heads, head_size):
  f32, bf16 = jnp.float32, jnp.bfloat16
  hidden = num_heads * head_size

  def bn_relu(y, layer_idx, cout):
    # Folded BatchNorm1d (running stats + conv bias) + ReLU, f32 epilogue.
    r = 2 * (layer_idx - 1)
    s = vec_ref[r:r + 1, 0:cout]
    t = vec_ref[r + 1:r + 2, 0:cout]
    return jnp.maximum(y * s + t, 0.0)

  def pool_rows(h, pool):
    # Max-pool groups of `pool` consecutive rows (rows are (b, l) flattened,
    # per-batch length divisible by `pool`, so groups never straddle batches).
    rows, cols = h.shape
    return h.reshape(rows // pool, pool, cols).max(axis=1)

  def conv3_bn_relu(h, lin, layer_idx):
    # 3-tap Conv1d as in-kernel im2col + ONE contraction-(3*Cin) matmul.
    row0, nrows, cout = _CONV[layer_idx]
    cin = nrows // 3
    lout = lin - 2
    h3 = h.reshape(batch, lin, cin).astype(bf16)
    win = jnp.concatenate([h3[:, k:k + lout, :] for k in range(3)], axis=-1)
    win = win.reshape(batch * lout, nrows)            # merge batch into M
    y = jnp.dot(win, wconv_ref[row0:row0 + nrows, 0:cout],
                preferred_element_type=f32)
    return bn_relu(y, layer_idx, cout), lout

  # ---- layer1: Conv1d(Cin,16,15) as one im2col matmul + BN + ReLU ----------
  row0, nrows, cout1 = _CONV[1]
  l = patches_ref.shape[0] // batch                   # L1 (= 42 for L=56)
  h = jnp.dot(patches_ref[...], wconv_ref[row0:row0 + nrows, 0:cout1],
              preferred_element_type=f32)
  h = bn_relu(h, 1, cout1)                            # (B*42, 16)

  # ---- layer2: Conv1d(16,32,3)+BN+ReLU+MaxPool1d(2,2) ----------------------
  h, l = conv3_bn_relu(h, l, 2)                       # (B*40, 32)
  h = pool_rows(h, 2)
  l //= 2                                             # (B*20, 32)

  # ---- layer3: Conv1d(32,64,3)+BN+ReLU --------------------------------------
  h, l = conv3_bn_relu(h, l, 3)                       # (B*18, 64)

  # ---- layer4: Conv1d(64,128,3)+BN+ReLU+AdaptiveMaxPool1d(4) ---------------
  h, l = conv3_bn_relu(h, l, 4)                       # (B*16, 128)
  h = pool_rows(h, l // _SEQ)                         # (B*4, 128)

  # ---- SelfAttention(hidden=128, heads=8) -----------------------------------
  # TODO(synk): attention dropout (p=0.1) is identity at inference.
  hb = h.astype(bf16)                                 # (B*S, 128) bf16
  qkv = jnp.dot(hb, wdense_ref[0:hidden, :], preferred_element_type=f32)
  qkv = qkv + vec_ref[_ROW_BQKV:_ROW_BQKV + 1, 0:3 * hidden]      # (B*S, 384)
  # 128-aligned lane slices (free); 1/sqrt(d) already folded into Wq/bq.
  q = qkv[:, 0:hidden].astype(bf16).reshape(batch, _SEQ, hidden)
  k = qkv[:, hidden:2 * hidden].astype(bf16).reshape(batch, _SEQ, hidden)
  v = qkv[:, 2 * hidden:3 * hidden].astype(bf16).reshape(batch, _SEQ, hidden)

  heads = []
  for n in range(num_heads):          # static loop over 8 heads (tiny S=4 tiles)
    lo = n * head_size
    qn = q[:, :, lo:lo + head_size]
    kn = k[:, :, lo:lo + head_size]
    vn = v[:, :, lo:lo + head_size]
    s = jnp.einsum("bqd,bkd->bqk", qn, kn, preferred_element_type=f32)
    s = s - jnp.max(s, axis=-1, keepdims=True)
    e = jnp.exp(s)
    p = e * pl.reciprocal(jnp.sum(e, axis=-1, keepdims=True), approx=True)
    heads.append(jnp.einsum("bqk,bkd->bqd", p.astype(bf16), vn,
                            preferred_element_type=f32))
  ctx = jnp.concatenate(heads, axis=-1)               # (B, 4, 128) f32

  # ---- layer5: Linear(512, 256) + ReLU --------------------------------------
  # TODO(synk): layer5 dropout (p=0.5) is identity at inference.
  # out[b] = sum_s ctx[b,s,:] @ W5[s]  (avoids an in-kernel (B,4,128)->(B,512)
  # sublane->lane reshape; still contraction-128 MXU matmuls).
  out_dim = o_ref.shape[1]
  ctxb = ctx.astype(bf16)
  out = None
  for s_idx in range(_SEQ):
    r0 = _W5_ROW0 + s_idx * hidden
    part = jnp.dot(ctxb[:, s_idx, :], wdense_ref[r0:r0 + hidden, 0:out_dim],
                   preferred_element_type=f32)
    out = part if out is None else out + part
  o_ref[...] = jnp.maximum(out + vec_ref[_ROW_B5:_ROW_B5 + 1, 0:out_dim], 0.0)


# ---------------------------------------------------------------------------
# One-time parameter preparation (hoisted out of the forward pass)
# ---------------------------------------------------------------------------
def prepare_params(p, *, num_heads=8, eps=1e-5):
  """Fold BatchNorm (running stats + conv bias) into per-channel scale/shift,
  transpose all weights to in-major, fuse Wq|Wk|Wv, fold 1/sqrt(head_size)
  into Wq/bq, and pack everything into 3 buffers.  Run once."""
  f32, bf16 = jnp.float32, jnp.bfloat16
  conv_blob = jnp.zeros(_CONV_BLOB_SHAPE, f32)
  vec_blob = jnp.zeros(_VEC_BLOB_SHAPE, f32)

  for i in range(1, 5):
    w, b = p[f"w{i}"], p[f"b{i}"]
    gamma, beta = p[f"g{i}"], p[f"be{i}"]
    mean, var = p[f"m{i}"], p[f"v{i}"]
    cout, cin, ksz = w.shape
    scale = gamma / jnp.sqrt(var + eps)
    shift = beta + (b - mean) * scale
    w_mat = jnp.transpose(w, (2, 1, 0)).reshape(ksz * cin, cout)   # (K*Cin, Cout)
    row0, nrows, ncols = _CONV[i]
    conv_blob = conv_blob.at[row0:row0 + nrows, 0:ncols].set(w_mat)
    vec_blob = vec_blob.at[2 * (i - 1), 0:cout].set(scale)
    vec_blob = vec_blob.at[2 * (i - 1) + 1, 0:cout].set(shift)

  hidden = p["wq"].shape[0]
  head_size = hidden // num_heads
  qscale = 1.0 / math.sqrt(head_size)          # folded into Wq / bq
  wqkv = jnp.concatenate(
      [p["wq"].T * qscale, p["wk"].T, p["wv"].T], axis=1)          # (128, 384)
  bqkv = jnp.concatenate([p["bq"] * qscale, p["bk"], p["bv"]])     # (384,)
  w5t = p["w5"].T                                                  # (512, 256)

  dense_blob = jnp.zeros(_DENSE_BLOB_SHAPE, f32)
  dense_blob = dense_blob.at[0:hidden, 0:3 * hidden].set(wqkv)
  dense_blob = dense_blob.at[_W5_ROW0:_W5_ROW0 + w5t.shape[0],
                             0:w5t.shape[1]].set(w5t)
  vec_blob = vec_blob.at[_ROW_BQKV, 0:3 * hidden].set(bqkv)
  vec_blob = vec_blob.at[_ROW_B5, 0:p["b5"].shape[0]].set(p["b5"])

  return {"wconv": conv_blob.astype(bf16),
          "wdense": dense_blob.astype(bf16),
          "vec": vec_blob}


# ---------------------------------------------------------------------------
# Forward wrapper (single grid-less pallas_call)
# ---------------------------------------------------------------------------
def cnn_forward(x_ncl, prep, *, num_heads=8):
  """x_ncl: (B, in_channel, L) -- same layout as PyTorch CNN.forward input."""
  batch, cin, length = x_ncl.shape
  k1 = _CONV[1][1] // cin
  l1 = length - k1 + 1                       # after layer1 conv
  l2 = l1 - 2                                # after layer2 conv
  assert l2 % 2 == 0, "MaxPool1d(2,2) path assumes even length"
  l4 = l2 // 2 - 2 - 2                       # after layer4 conv
  # TODO(synk): AdaptiveMaxPool1d(4) with uneven bins (l4 % 4 != 0) not implemented.
  assert l4 % _SEQ == 0, "AdaptiveMaxPool1d(4) implemented for lengths divisible by 4"

  # Layer1 im2col windows (tiny XLA producer, overlapped with the custom call):
  # patches[b*L1 + l, k*Cin + c] = x[b, c, l + k]
  x_blc = jnp.transpose(x_ncl, (0, 2, 1)).astype(jnp.bfloat16)     # (B, L, Cin)
  patches = jnp.concatenate([x_blc[:, k:k + l1, :] for k in range(k1)], axis=-1)
  patches = patches.reshape(batch * l1, k1 * cin)

  kern = functools.partial(_cnn_fused_kernel, batch=batch,
                           num_heads=num_heads,
                           head_size=_HIDDEN // num_heads)
  return pl.pallas_call(
      kern,
      out_shape=jax.ShapeDtypeStruct((batch, _OUT_DIM), jnp.float32),
      in_specs=[_VMEM] * 4,
      out_specs=_VMEM,
      cost_estimate=pl.CostEstimate(flops=4_000_000, transcendentals=512,
                                    bytes_accessed=700_000),
  )(patches, prep["wconv"], prep["wdense"], prep["vec"])


# ---------------------------------------------------------------------------
# Pure-JAX reference (PyTorch eval-mode semantics) for a tolerance check
# ---------------------------------------------------------------------------
def _reference_forward(x, p, *, num_heads=8, eps=1e-5):
  def conv_bn_relu(h, w, b, g, be, m, v):
    y = jax.lax.conv_general_dilated(h, w, (1,), "VALID",
                                     dimension_numbers=("NCH", "OIH", "NCH"))
    y = y + b[None, :, None]
    y = (y - m[None, :, None]) / jnp.sqrt(v[None, :, None] + eps)
    y = y * g[None, :, None] + be[None, :, None]
    return jnp.maximum(y, 0.0)

  h = conv_bn_relu(x, p["w1"], p["b1"], p["g1"], p["be1"], p["m1"], p["v1"])
  h = conv_bn_relu(h, p["w2"], p["b2"], p["g2"], p["be2"], p["m2"], p["v2"])
  B, C, L = h.shape
  h = h.reshape(B, C, L // 2, 2).max(axis=-1)                      # MaxPool1d(2,2)
  h = conv_bn_relu(h, p["w3"], p["b3"], p["g3"], p["be3"], p["m3"], p["v3"])
  h = conv_bn_relu(h, p["w4"], p["b4"], p["g4"], p["be4"], p["m4"], p["v4"])
  B, C, L = h.shape
  h = h.reshape(B, C, _SEQ, L // _SEQ).max(axis=-1)                # AdaptiveMaxPool1d(4)
  h = jnp.transpose(h, (0, 2, 1))                                  # (B, 4, 128)

  hs = _HIDDEN // num_heads
  q = h @ p["wq"].T + p["bq"]
  k = h @ p["wk"].T + p["bk"]
  v = h @ p["wv"].T + p["bv"]
  split = lambda t: t.reshape(B, _SEQ, num_heads, hs).transpose(0, 2, 1, 3)
  qh, kh, vh = split(q), split(k), split(v)
  s = jnp.einsum("bhqd,bhkd->bhqk", qh, kh) / math.sqrt(hs)
  probs = jax.nn.softmax(s, axis=-1)
  ctx = jnp.einsum("bhqk,bhkd->bhqd", probs, vh)
  ctx = ctx.transpose(0, 2, 1, 3).reshape(B, _SEQ * _HIDDEN)
  return jnp.maximum(ctx @ p["w5"].T + p["b5"], 0.0)


# ---------------------------------------------------------------------------
# Deterministic parameter init (PyTorch-like uniform bounds)
# ---------------------------------------------------------------------------
def init_params(key):
  ks = iter(jax.random.split(key, 16))

  def uni(k, shape, fan_in):
    bound = 1.0 / math.sqrt(fan_in)
    return jax.random.uniform(k, shape, jnp.float32, -bound, bound)

  p = {}
  conv_cfg = [(16, 1, 15), (32, 16, 3), (64, 32, 3), (128, 64, 3)]
  for i, (co, ci, ksz) in enumerate(conv_cfg, start=1):
    p[f"w{i}"] = uni(next(ks), (co, ci, ksz), ci * ksz)
    p[f"b{i}"] = uni(next(ks), (co,), ci * ksz)
    p[f"g{i}"] = jnp.ones((co,), jnp.float32)        # BN gamma
    p[f"be{i}"] = jnp.zeros((co,), jnp.float32)      # BN beta
    p[f"m{i}"] = jnp.zeros((co,), jnp.float32)       # BN running_mean
    p[f"v{i}"] = jnp.ones((co,), jnp.float32)        # BN running_var
  for name in ("q", "k", "v"):
    p[f"w{name}"] = uni(next(ks), (_HIDDEN, _HIDDEN), _HIDDEN)     # (out, in)
    p[f"b{name}"] = uni(next(ks), (_HIDDEN,), _HIDDEN)
  p["w5"] = uni(next(ks), (_OUT_DIM, _SEQ * _HIDDEN), _SEQ * _HIDDEN)
  p["b5"] = uni(next(ks), (_OUT_DIM,), _SEQ * _HIDDEN)
  return p


if __name__ == "__main__":
  key = jax.random.PRNGKey(0)
  kp, kx = jax.random.split(key)
  params = init_params(kp)
  prep = prepare_params(params)          # weight packing hoisted out of forward

  # Input (B=2, in_channel=1, L=56): 56 -> 42 -> 40 -> 20 -> 18 -> 16 -> pool 4.
  x = jax.random.normal(kx, (2, 1, 56), jnp.float32)

  fwd = jax.jit(cnn_forward)
  out = jax.block_until_ready(fwd(x, prep))
  assert out.shape == (2, _OUT_DIM), out.shape
  assert bool(jnp.all(jnp.isfinite(out)))

  # Loose-tolerance check vs f32 PyTorch-semantics reference (bf16 MXU operands
  # and approx softmax reciprocal intentionally diverge at the ~1% level).
  ref = _reference_forward(x, params)
  assert bool(jnp.allclose(out, ref, atol=8e-2, rtol=1e-1)), (
      float(jnp.max(jnp.abs(out - ref))))

  print("KERNEL_OK")
</pallas_src>

<mosaic_0001>
module attributes {stable_mosaic.version = 11 : i64} {
  func.func @_cnn_fused_kernel(%arg0: memref<84x15xbf16, #tpu.memory_space<vmem>>, %arg1: memref<352x128xbf16, #tpu.memory_space<vmem>>, %arg2: memref<640x384xbf16, #tpu.memory_space<vmem>>, %arg3: memref<10x384xf32, #tpu.memory_space<vmem>>, %arg4: memref<2x256xf32, #tpu.memory_space<vmem>>) attributes {dimension_semantics = [], scalar_prefetch = 0 : i64, scratch_operands = 0 : i64, tpu.core_type = #tpu.core_type<tc>} {
    %c0 = arith.constant 0 : index
    %c0_0 = arith.constant 0 : index
    %0 = vector.load %arg0[%c0, %c0_0] : memref<84x15xbf16, #tpu.memory_space<vmem>>, vector<84x15xbf16>
    %c0_1 = arith.constant 0 : index
    %c0_2 = arith.constant 0 : index
    %1 = vector.load %arg1[%c0_1, %c0_2] : memref<352x128xbf16, #tpu.memory_space<vmem>>, vector<15x16xbf16>
    %cst = arith.constant dense<0.000000e+00> : vector<84x16xf32>
    %2 = tpu.matmul %0, %1, %cst {dimension_numbers = #tpu.dot_dimension_numbers<[1], [0], [0], [1], [0, 0, 1, 1], [], []>} : vector<84x15xbf16>, vector<15x16xbf16>, vector<84x16xf32> -> vector<84x16xf32>
    %c0_3 = arith.constant 0 : index
    %c0_4 = arith.constant 0 : index
    %3 = vector.load %arg3[%c0_3, %c0_4] : memref<10x384xf32, #tpu.memory_space<vmem>>, vector<1x16xf32>
    %c1 = arith.constant 1 : index
    %c0_5 = arith.constant 0 : index
    %4 = vector.load %arg3[%c1, %c0_5] : memref<10x384xf32, #tpu.memory_space<vmem>>, vector<1x16xf32>
    %5 = vector.broadcast %3 : vector<1x16xf32> to vector<84x16xf32>
    %6 = arith.mulf %2, %5 : vector<84x16xf32>
    %7 = vector.broadcast %4 : vector<1x16xf32> to vector<84x16xf32>
    %8 = arith.addf %6, %7 : vector<84x16xf32>
    %cst_6 = arith.constant 0.000000e+00 : f32
    %9 = vector.broadcast %cst_6 : f32 to vector<84x16xf32>
    %10 = arith.maximumf %8, %9 : vector<84x16xf32>
    %11 = vector.shape_cast %10 : vector<84x16xf32> to vector<2x42x16xf32>
    %12 = arith.truncf %11 : vector<2x42x16xf32> to vector<2x42x16xbf16>
    %13 = vector.extract_strided_slice %12 {offsets = [0, 0, 0], sizes = [2, 40, 16], strides = [1, 1, 1]} : vector<2x42x16xbf16> to vector<2x40x16xbf16>
    %14 = vector.extract_strided_slice %12 {offsets = [0, 1, 0], sizes = [2, 40, 16], strides = [1, 1, 1]} : vector<2x42x16xbf16> to vector<2x40x16xbf16>
    %15 = vector.extract_strided_slice %12 {offsets = [0, 2, 0], sizes = [2, 40, 16], strides = [1, 1, 1]} : vector<2x42x16xbf16> to vector<2x40x16xbf16>
    %16 = tpu.concatenate %13, %14, %15 in 2 : vector<2x40x16xbf16>, vector<2x40x16xbf16>, vector<2x40x16xbf16> -> vector<2x40x48xbf16>
    %17 = vector.shape_cast %16 : vector<2x40x48xbf16> to vector<80x48xbf16>
    %c16 = arith.constant 16 : index
    %c0_7 = arith.constant 0 : index
    %18 = vector.load %arg1[%c16, %c0_7] : memref<352x128xbf16, #tpu.memory_space<vmem>>, vector<48x32xbf16>
    %cst_8 = arith.constant dense<0.000000e+00> : vector<80x32xf32>
    %19 = tpu.matmul %17, %18, %cst_8 {dimension_numbers = #tpu.dot_dimension_numbers<[1], [0], [0], [1], [0, 0, 1, 1], [], []>} : vector<80x48xbf16>, vector<48x32xbf16>, vector<80x32xf32> -> vector<80x32xf32>
    %c2 = arith.constant 2 : index
    %c0_9 = arith.constant 0 : index
    %20 = vector.load %arg3[%c2, %c0_9] : memref<10x384xf32, #tpu.memory_space<vmem>>, vector<1x32xf32>
    %c3 = arith.constant 3 : index
    %c0_10 = arith.constant 0 : index
    %21 = vector.load %arg3[%c3, %c0_10] : memref<10x384xf32, #tpu.memory_space<vmem>>, vector<1x32xf32>
    %22 = vector.broadcast %20 : vector<1x32xf32> to vector<80x32xf32>
    %23 = arith.mulf %19, %22 : vector<80x32xf32>
    %24 = vector.broadcast %21 : vector<1x32xf32> to vector<80x32xf32>
    %25 = arith.addf %23, %24 : vector<80x32xf32>
    %cst_11 = arith.constant 0.000000e+00 : f32
    %26 = vector.broadcast %cst_11 : f32 to vector<80x32xf32>
    %27 = arith.maximumf %25, %26 : vector<80x32xf32>
    %28 = vector.shape_cast %27 : vector<80x32xf32> to vector<40x2x32xf32>
    %cst_12 = arith.constant dense<0xFF800000> : vector<40x32xf32>
    %29 = vector.multi_reduction <maximumf>, %28, %cst_12 [1] : vector<40x2x32xf32> to vector<40x32xf32>
    %30 = vector.shape_cast %29 : vector<40x32xf32> to vector<2x20x32xf32>
    %31 = arith.truncf %30 : vector<2x20x32xf32> to vector<2x20x32xbf16>
    %32 = vector.extract_strided_slice %31 {offsets = [0, 0, 0], sizes = [2, 18, 32], strides = [1, 1, 1]} : vector<2x20x32xbf16> to vector<2x18x32xbf16>
    %33 = vector.extract_strided_slice %31 {offsets = [0, 1, 0], sizes = [2, 18, 32], strides = [1, 1, 1]} : vector<2x20x32xbf16> to vector<2x18x32xbf16>
    %34 = vector.extract_strided_slice %31 {offsets = [0, 2, 0], sizes = [2, 18, 32], strides = [1, 1, 1]} : vector<2x20x32xbf16> to vector<2x18x32xbf16>
    %35 = tpu.concatenate %32, %33, %34 in 2 : vector<2x18x32xbf16>, vector<2x18x32xbf16>, vector<2x18x32xbf16> -> vector<2x18x96xbf16>
    %36 = vector.shape_cast %35 : vector<2x18x96xbf16> to vector<36x96xbf16>
    %c64 = arith.constant 64 : index
    %c0_13 = arith.constant 0 : index
    %37 = vector.load %arg1[%c64, %c0_13] : memref<352x128xbf16, #tpu.memory_space<vmem>>, vector<96x64xbf16>
    %cst_14 = arith.constant dense<0.000000e+00> : vector<36x64xf32>
    %38 = tpu.matmul %36, %37, %cst_14 {dimension_numbers = #tpu.dot_dimension_numbers<[1], [0], [0], [1], [0, 0, 1, 1], [], []>} : vector<36x96xbf16>, vector<96x64xbf16>, vector<36x64xf32> -> vector<36x64xf32>
    %c4 = arith.constant 4 : index
    %c0_15 = arith.constant 0 : index
    %39 = vector.load %arg3[%c4, %c0_15] : memref<10x384xf32, #tpu.memory_space<vmem>>, vector<1x64xf32>
    %c5 = arith.constant 5 : index
    %c0_16 = arith.constant 0 : index
    %40 = vector.load %arg3[%c5, %c0_16] : memref<10x384xf32, #tpu.memory_space<vmem>>, vector<1x64xf32>
    %41 = vector.broadcast %39 : vector<1x64xf32> to vector<36x64xf32>
    %42 = arith.mulf %38, %41 : vector<36x64xf32>
    %43 = vector.broadcast %40 : vector<1x64xf32> to vector<36x64xf32>
    %44 = arith.addf %42, %43 : vector<36x64xf32>
    %cst_17 = arith.constant 0.000000e+00 : f32
    %45 = vector.broadcast %cst_17 : f32 to vector<36x64xf32>
    %46 = arith.maximumf %44, %45 : vector<36x64xf32>
    %47 = vector.shape_cast %46 : vector<36x64xf32> to vector<2x18x64xf32>
    %48 = arith.truncf %47 : vector<2x18x64xf32> to vector<2x18x64xbf16>
    %49 = vector.extract_strided_slice %48 {offsets = [0, 0, 0], sizes = [2, 16, 64], strides = [1, 1, 1]} : vector<2x18x64xbf16> to vector<2x16x64xbf16>
    %50 = vector.extract_strided_slice %48 {offsets = [0, 1, 0], sizes = [2, 16, 64], strides = [1, 1, 1]} : vector<2x18x64xbf16> to vector<2x16x64xbf16>
    %51 = vector.extract_strided_slice %48 {offsets = [0, 2, 0], sizes = [2, 16, 64], strides = [1, 1, 1]} : vector<2x18x64xbf16> to vector<2x16x64xbf16>
    %52 = tpu.concatenate %49, %50, %51 in 2 : vector<2x16x64xbf16>, vector<2x16x64xbf16>, vector<2x16x64xbf16> -> vector<2x16x192xbf16>
    %53 = vector.shape_cast %52 : vector<2x16x192xbf16> to vector<32x192xbf16>
    %c160 = arith.constant 160 : index
    %c0_18 = arith.constant 0 : index
    %54 = vector.load %arg1[%c160, %c0_18] : memref<352x128xbf16, #tpu.memory_space<vmem>>, vector<192x128xbf16>
    %cst_19 = arith.constant dense<0.000000e+00> : vector<32x128xf32>
    %55 = tpu.matmul %53, %54, %cst_19 {dimension_numbers = #tpu.dot_dimension_numbers<[1], [0], [0], [1], [0, 0, 1, 1], [], []>} : vector<32x192xbf16>, vector<192x128xbf16>, vector<32x128xf32> -> vector<32x128xf32>
    %c6 = arith.constant 6 : index
    %c0_20 = arith.constant 0 : index
    %56 = vector.load %arg3[%c6, %c0_20] : memref<10x384xf32, #tpu.memory_space<vmem>>, vector<1x128xf32>
    %c7 = arith.constant 7 : index
    %c0_21 = arith.constant 0 : index
    %57 = vector.load %arg3[%c7, %c0_21] : memref<10x384xf32, #tpu.memory_space<vmem>>, vector<1x128xf32>
    %58 = vector.broadcast %56 : vector<1x128xf32> to vector<32x128xf32>
    %59 = arith.mulf %55, %58 : vector<32x128xf32>
    %60 = vector.broadcast %57 : vector<1x128xf32> to vector<32x128xf32>
    %61 = arith.addf %59, %60 : vector<32x128xf32>
    %cst_22 = arith.constant 0.000000e+00 : f32
    %62 = vector.broadcast %cst_22 : f32 to vector<32x128xf32>
    %63 = arith.maximumf %61, %62 : vector<32x128xf32>
    %64 = vector.shape_cast %63 : vector<32x128xf32> to vector<8x4x128xf32>
    %cst_23 = arith.constant dense<0xFF800000> : vector<8x128xf32>
    %65 = vector.multi_reduction <maximumf>, %64, %cst_23 [1] : vector<8x4x128xf32> to vector<8x128xf32>
    %66 = arith.truncf %65 : vector<8x128xf32> to vector<8x128xbf16>
    %c0_24 = arith.constant 0 : index
    %c0_25 = arith.constant 0 : index
    %67 = vector.load %arg2[%c0_24, %c0_25] : memref<640x384xbf16, #tpu.memory_space<vmem>>, vector<128x384xbf16>
    %cst_26 = arith.constant dense<0.000000e+00> : vector<8x384xf32>
    %68 = tpu.matmul %66, %67, %cst_26 {dimension_numbers = #tpu.dot_dimension_numbers<[1], [0], [0], [1], [0, 0, 1, 1], [], []>} : vector<8x128xbf16>, vector<128x384xbf16>, vector<8x384xf32> -> vector<8x384xf32>
    %c8 = arith.constant 8 : index
    %c0_27 = arith.constant 0 : index
    %69 = vector.load %arg3[%c8, %c0_27] : memref<10x384xf32, #tpu.memory_space<vmem>>, vector<1x384xf32>
    %70 = vector.broadcast %69 : vector<1x384xf32> to vector<8x384xf32>
    %71 = arith.addf %68, %70 : vector<8x384xf32>
    %72 = vector.extract_strided_slice %71 {offsets = [0, 0], sizes = [8, 128], strides = [1, 1]} : vector<8x384xf32> to vector<8x128xf32>
    %73 = arith.truncf %72 : vector<8x128xf32> to vector<8x128xbf16>
    %74 = vector.shape_cast %73 : vector<8x128xbf16> to vector<2x4x128xbf16>
    %75 = vector.extract_strided_slice %71 {offsets = [0, 128], sizes = [8, 128], strides = [1, 1]} : vector<8x384xf32> to vector<8x128xf32>
    %76 = arith.truncf %75 : vector<8x128xf32> to vector<8x128xbf16>
    %77 = vector.shape_cast %76 : vector<8x128xbf16> to vector<2x4x128xbf16>
    %78 = vector.extract_strided_slice %71 {offsets = [0, 256], sizes = [8, 128], strides = [1, 1]} : vector<8x384xf32> to vector<8x128xf32>
    %79 = arith.truncf %78 : vector<8x128xf32> to vector<8x128xbf16>
    %80 = vector.shape_cast %79 : vector<8x128xbf16> to vector<2x4x128xbf16>
    %81 = vector.extract_strided_slice %74 {offsets = [0, 0, 0], sizes = [2, 4, 16], strides = [1, 1, 1]} : vector<2x4x128xbf16> to vector<2x4x16xbf16>
    %82 = vector.extract_strided_slice %77 {offsets = [0, 0, 0], sizes = [2, 4, 16], strides = [1, 1, 1]} : vector<2x4x128xbf16> to vector<2x4x16xbf16>
    %83 = vector.extract_strided_slice %80 {offsets = [0, 0, 0], sizes = [2, 4, 16], strides = [1, 1, 1]} : vector<2x4x128xbf16> to vector<2x4x16xbf16>
    "tpu.trace_start"() <{level = 10 : i32, message = "bqd,bkd->bqk"}> : () -> ()
    %cst_28 = arith.constant dense<0.000000e+00> : vector<2x4x4xf32>
    %84 = tpu.matmul %81, %82, %cst_28 {dimension_numbers = #tpu.dot_dimension_numbers<[2], [2], [1], [1], [0, 0, 0, 1, 1, 1], [0], [0]>} : vector<2x4x16xbf16>, vector<2x4x16xbf16>, vector<2x4x4xf32> -> vector<2x4x4xf32>
    "tpu.trace_stop"() : () -> ()
    %cst_29 = arith.constant dense<0xFF800000> : vector<2x4xf32>
    %85 = vector.multi_reduction <maximumf>, %84, %cst_29 [2] : vector<2x4x4xf32> to vector<2x4xf32>
    %86 = vector.shape_cast %85 : vector<2x4xf32> to vector<2x4x1xf32>
    %87 = vector.broadcast %86 : vector<2x4x1xf32> to vector<2x4x4xf32>
    %88 = arith.subf %84, %87 : vector<2x4x4xf32>
    %89 = math.exp %88 : vector<2x4x4xf32>
    %cst_30 = arith.constant dense<0.000000e+00> : vector<2x4xf32>
    %90 = vector.multi_reduction <add>, %89, %cst_30 [2] : vector<2x4x4xf32> to vector<2x4xf32>
    %91 = vector.shape_cast %90 : vector<2x4xf32> to vector<2x4x1xf32>
    %92 = tpu.reciprocal %91 {approx = true} : vector<2x4x1xf32> -> vector<2x4x1xf32>
    %93 = vector.broadcast %92 : vector<2x4x1xf32> to vector<2x4x4xf32>
    %94 = arith.mulf %89, %93 : vector<2x4x4xf32>
    %95 = arith.truncf %94 : vector<2x4x4xf32> to vector<2x4x4xbf16>
    "tpu.trace_start"() <{level = 10 : i32, message = "bqk,bkd->bqd"}> : () -> ()
    %cst_31 = arith.constant dense<0.000000e+00> : vector<2x4x16xf32>
    %96 = tpu.matmul %95, %83, %cst_31 {dimension_numbers = #tpu.dot_dimension_numbers<[2], [1], [1], [2], [0, 0, 0, 1, 1, 2], [0], [0]>} : vector<2x4x4xbf16>, vector<2x4x16xbf16>, vector<2x4x16xf32> -> vector<2x4x16xf32>
    "tpu.trace_stop"() : () -> ()
    %97 = vector.extract_strided_slice %74 {offsets = [0, 0, 16], sizes = [2, 4, 16], strides = [1, 1, 1]} : vector<2x4x128xbf16> to vector<2x4x16xbf16>
    %98 = vector.extract_strided_slice %77 {offsets = [0, 0, 16], sizes = [2, 4, 16], strides = [1, 1, 1]} : vector<2x4x128xbf16> to vector<2x4x16xbf16>
    %99 = vector.extract_strided_slice %80 {offsets = [0, 0, 16], sizes = [2, 4, 16], strides = [1, 1, 1]} : vector<2x4x128xbf16> to vector<2x4x16xbf16>
    "tpu.trace_start"() <{level = 10 : i32, message = "bqd,bkd->bqk"}> : () -> ()
    %cst_32 = arith.constant dense<0.000000e+00> : vector<2x4x4xf32>
    %100 = tpu.matmul %97, %98, %cst_32 {dimension_numbers = #tpu.dot_dimension_numbers<[2], [2], [1], [1], [0, 0, 0, 1, 1, 1], [0], [0]>} : vector<2x4x16xbf16>, vector<2x4x16xbf16>, vector<2x4x4xf32> -> vector<2x4x4xf32>
    "tpu.trace_stop"() : () -> ()
    %cst_33 = arith.constant dense<0xFF800000> : vector<2x4xf32>
    %101 = vector.multi_reduction <maximumf>, %100, %cst_33 [2] : vector<2x4x4xf32> to vector<2x4xf32>
    %102 = vector.shape_cast %101 : vector<2x4xf32> to vector<2x4x1xf32>
    %103 = vector.broadcast %102 : vector<2x4x1xf32> to vector<2x4x4xf32>
    %104 = arith.subf %100, %103 : vector<2x4x4xf32>
    %105 = math.exp %104 : vector<2x4x4xf32>
    %cst_34 = arith.constant dense<0.000000e+00> : vector<2x4xf32>
    %106 = vector.multi_reduction <add>, %105, %cst_34 [2] : vector<2x4x4xf32> to vector<2x4xf32>
    %107 = vector.shape_cast %106 : vector<2x4xf32> to vector<2x4x1xf32>
    %108 = tpu.reciprocal %107 {approx = true} : vector<2x4x1xf32> -> vector<2x4x1xf32>
    %109 = vector.broadcast %108 : vector<2x4x1xf32> to vector<2x4x4xf32>
    %110 = arith.mulf %105, %109 : vector<2x4x4xf32>
    %111 = arith.truncf %110 : vector<2x4x4xf32> to vector<2x4x4xbf16>
    "tpu.trace_start"() <{level = 10 : i32, message = "bqk,bkd->bqd"}> : () -> ()
    %cst_35 = arith.constant dense<0.000000e+00> : vector<2x4x16xf32>
    %112 = tpu.matmul %111, %99, %cst_35 {dimension_numbers = #tpu.dot_dimension_numbers<[2], [1], [1], [2], [0, 0, 0, 1, 1, 2], [0], [0]>} : vector<2x4x4xbf16>, vector<2x4x16xbf16>, vector<2x4x16xf32> -> vector<2x4x16xf32>
    "tpu.trace_stop"() : () -> ()
    %113 = vector.extract_strided_slice %74 {offsets = [0, 0, 32], sizes = [2, 4, 16], strides = [1, 1, 1]} : vector<2x4x128xbf16> to vector<2x4x16xbf16>
    %114 = vector.extract_strided_slice %77 {offsets = [0, 0, 32], sizes = [2, 4, 16], strides = [1, 1, 1]} : vector<2x4x128xbf16> to vector<2x4x16xbf16>
    %115 = vector.extract_strided_slice %80 {offsets = [0, 0, 32], sizes = [2, 4, 16], strides = [1, 1, 1]} : vector<2x4x128xbf16> to vector<2x4x16xbf16>
    "tpu.trace_start"() <{level = 10 : i32, message = "bqd,bkd->bqk"}> : () -> ()
    %cst_36 = arith.constant dense<0.000000e+00> : vector<2x4x4xf32>
    %116 = tpu.matmul %113, %114, %cst_36 {dimension_numbers = #tpu.dot_dimension_numbers<[2], [2], [1], [1], [0, 0, 0, 1, 1, 1], [0], [0]>} : vector<2x4x16xbf16>, vector<2x4x16xbf16>, vector<2x4x4xf32> -> vector<2x4x4xf32>
    "tpu.trace_stop"() : () -> ()
    %cst_37 = arith.constant dense<0xFF800000> : vector<2x4xf32>
    %117 = vector.multi_reduction <maximumf>, %116, %cst_37 [2] : vector<2x4x4xf32> to vector<2x4xf32>
    %118 = vector.shape_cast %117 : vector<2x4xf32> to vector<2x4x1xf32>
    %119 = vector.broadcast %118 : vector<2x4x1xf32> to vector<2x4x4xf32>
    %120 = arith.subf %116, %119 : vector<2x4x4xf32>
    %121 = math.exp %120 : vector<2x4x4xf32>
    %cst_38 = arith.constant dense<0.000000e+00> : vector<2x4xf32>
    %122 = vector.multi_reduction <add>, %121, %cst_38 [2] : vector<2x4x4xf32> to vector<2x4xf32>
    %123 = vector.shape_cast %122 : vector<2x4xf32> to vector<2x4x1xf32>
    %124 = tpu.reciprocal %123 {approx = true} : vector<2x4x1xf32> -> vector<2x4x1xf32>
    %125 = vector.broadcast %124 : vector<2x4x1xf32> to vector<2x4x4xf32>
    %126 = arith.mulf %121, %125 : vector<2x4x4xf32>
    %127 = arith.truncf %126 : vector<2x4x4xf32> to vector<2x4x4xbf16>
    "tpu.trace_start"() <{level = 10 : i32, message = "bqk,bkd->bqd"}> : () -> ()
    %cst_39 = arith.constant dense<0.000000e+00> : vector<2x4x16xf32>
    %128 = tpu.matmul %127, %115, %cst_39 {dimension_numbers = #tpu.dot_dimension_numbers<[2], [1], [1], [2], [0, 0, 0, 1, 1, 2], [0], [0]>} : vector<2x4x4xbf16>, vector<2x4x16xbf16>, vector<2x4x16xf32> -> vector<2x4x16xf32>
    "tpu.trace_stop"() : () -> ()
    %129 = vector.extract_strided_slice %74 {offsets = [0, 0, 48], sizes = [2, 4, 16], strides = [1, 1, 1]} : vector<2x4x128xbf16> to vector<2x4x16xbf16>
    %130 = vector.extract_strided_slice %77 {offsets = [0, 0, 48], sizes = [2, 4, 16], strides = [1, 1, 1]} : vector<2x4x128xbf16> to vector<2x4x16xbf16>
    %131 = vector.extract_strided_slice %80 {offsets = [0, 0, 48], sizes = [2, 4, 16], strides = [1, 1, 1]} : vector<2x4x128xbf16> to vector<2x4x16xbf16>
    "tpu.trace_start"() <{level = 10 : i32, message = "bqd,bkd->bqk"}> : () -> ()
    %cst_40 = arith.constant dense<0.000000e+00> : vector<2x4x4xf32>
    %132 = tpu.matmul %129, %130, %cst_40 {dimension_numbers = #tpu.dot_dimension_numbers<[2], [2], [1], [1], [0, 0, 0, 1, 1, 1], [0], [0]>} : vector<2x4x16xbf16>, vector<2x4x16xbf16>, vector<2x4x4xf32> -> vector<2x4x4xf32>
    "tpu.trace_stop"() : () -> ()
    %cst_41 = arith.constant dense<0xFF800000> : vector<2x4xf32>
    %133 = vector.multi_reduction <maximumf>, %132, %cst_41 [2] : vector<2x4x4xf32> to vector<2x4xf32>
    %134 = vector.shape_cast %133 : vector<2x4xf32> to vector<2x4x1xf32>
    %135 = vector.broadcast %134 : vector<2x4x1xf32> to vector<2x4x4xf32>
    %136 = arith.subf %132, %135 : vector<2x4x4xf32>
    %137 = math.exp %136 : vector<2x4x4xf32>
    %cst_42 = arith.constant dense<0.000000e+00> : vector<2x4xf32>
    %138 = vector.multi_reduction <add>, %137, %cst_42 [2] : vector<2x4x4xf32> to vector<2x4xf32>
    %139 = vector.shape_cast %138 : vector<2x4xf32> to vector<2x4x1xf32>
    %140 = tpu.reciprocal %139 {approx = true} : vector<2x4x1xf32> -> vector<2x4x1xf32>
    %141 = vector.broadcast %140 : vector<2x4x1xf32> to vector<2x4x4xf32>
    %142 = arith.mulf %137, %141 : vector<2x4x4xf32>
    %143 = arith.truncf %142 : vector<2x4x4xf32> to vector<2x4x4xbf16>
    "tpu.trace_start"() <{level = 10 : i32, message = "bqk,bkd->bqd"}> : () -> ()
    %cst_43 = arith.constant dense<0.000000e+00> : vector<2x4x16xf32>
    %144 = tpu.matmul %143, %131, %cst_43 {dimension_numbers = #tpu.dot_dimension_numbers<[2], [1], [1], [2], [0, 0, 0, 1, 1, 2], [0], [0]>} : vector<2x4x4xbf16>, vector<2x4x16xbf16>, vector<2x4x16xf32> -> vector<2x4x16xf32>
    "tpu.trace_stop"() : () -> ()
    %145 = vector.extract_strided_slice %74 {offsets = [0, 0, 64], sizes = [2, 4, 16], strides = [1, 1, 1]} : vector<2x4x128xbf16> to vector<2x4x16xbf16>
    %146 = vector.extract_strided_slice %77 {offsets = [0, 0, 64], sizes = [2, 4, 16], strides = [1, 1, 1]} : vector<2x4x128xbf16> to vector<2x4x16xbf16>
    %147 = vector.extract_strided_slice %80 {offsets = [0, 0, 64], sizes = [2, 4, 16], strides = [1, 1, 1]} : vector<2x4x128xbf16> to vector<2x4x16xbf16>
    "tpu.trace_start"() <{level = 10 : i32, message = "bqd,bkd->bqk"}> : () -> ()
    %cst_44 = arith.constant dense<0.000000e+00> : vector<2x4x4xf32>
    %148 = tpu.matmul %145, %146, %cst_44 {dimension_numbers = #tpu.dot_dimension_numbers<[2], [2], [1], [1], [0, 0, 0, 1, 1, 1], [0], [0]>} : vector<2x4x16xbf16>, vector<2x4x16xbf16>, vector<2x4x4xf32> -> vector<2x4x4xf32>
    "tpu.trace_stop"() : () -> ()
    %cst_45 = arith.constant dense<0xFF800000> : vector<2x4xf32>
    %149 = vector.multi_reduction <maximumf>, %148, %cst_45 [2] : vector<2x4x4xf32> to vector<2x4xf32>
    %150 = vector.shape_cast %149 : vector<2x4xf32> to vector<2x4x1xf32>
    %151 = vector.broadcast %150 : vector<2x4x1xf32> to vector<2x4x4xf32>
    %152 = arith.subf %148, %151 : vector<2x4x4xf32>
    %153 = math.exp %152 : vector<2x4x4xf32>
    %cst_46 = arith.constant dense<0.000000e+00> : vector<2x4xf32>
    %154 = vector.multi_reduction <add>, %153, %cst_46 [2] : vector<2x4x4xf32> to vector<2x4xf32>
    %155 = vector.shape_cast %154 : vector<2x4xf32> to vector<2x4x1xf32>
    %156 = tpu.reciprocal %155 {approx = true} : vector<2x4x1xf32> -> vector<2x4x1xf32>
    %157 = vector.broadcast %156 : vector<2x4x1xf32> to vector<2x4x4xf32>
    %158 = arith.mulf %153, %157 : vector<2x4x4xf32>
    %159 = arith.truncf %158 : vector<2x4x4xf32> to vector<2x4x4xbf16>
    "tpu.trace_start"() <{level = 10 : i32, message = "bqk,bkd->bqd"}> : () -> ()
    %cst_47 = arith.constant dense<0.000000e+00> : vector<2x4x16xf32>
    %160 = tpu.matmul %159, %147, %cst_47 {dimension_numbers = #tpu.dot_dimension_numbers<[2], [1], [1], [2], [0, 0, 0, 1, 1, 2], [0], [0]>} : vector<2x4x4xbf16>, vector<2x4x16xbf16>, vector<2x4x16xf32> -> vector<2x4x16xf32>
    "tpu.trace_stop"() : () -> ()
    %161 = vector.extract_strided_slice %74 {offsets = [0, 0, 80], sizes = [2, 4, 16], strides = [1, 1, 1]} : vector<2x4x128xbf16> to vector<2x4x16xbf16>
    %162 = vector.extract_strided_slice %77 {offsets = [0, 0, 80], sizes = [2, 4, 16], strides = [1, 1, 1]} : vector<2x4x128xbf16> to vector<2x4x16xbf16>
    %163 = vector.extract_strided_slice %80 {offsets = [0, 0, 80], sizes = [2, 4, 16], strides = [1, 1, 1]} : vector<2x4x128xbf16> to vector<2x4x16xbf16>
    "tpu.trace_start"() <{level = 10 : i32, message = "bqd,bkd->bqk"}> : () -> ()
    %cst_48 = arith.constant dense<0.000000e+00> : vector<2x4x4xf32>
    %164 = tpu.matmul %161, %162, %cst_48 {dimension_numbers = #tpu.dot_dimension_numbers<[2], [2], [1], [1], [0, 0, 0, 1, 1, 1], [0], [0]>} : vector<2x4x16xbf16>, vector<2x4x16xbf16>, vector<2x4x4xf32> -> vector<2x4x4xf32>
    "tpu.trace_stop"() : () -> ()
    %cst_49 = arith.constant dense<0xFF800000> : vector<2x4xf32>
    %165 = vector.multi_reduction <maximumf>, %164, %cst_49 [2] : vector<2x4x4xf32> to vector<2x4xf32>
    %166 = vector.shape_cast %165 : vector<2x4xf32> to vector<2x4x1xf32>
    %167 = vector.broadcast %166 : vector<2x4x1xf32> to vector<2x4x4xf32>
    %168 = arith.subf %164, %167 : vector<2x4x4xf32>
    %169 = math.exp %168 : vector<2x4x4xf32>
    %cst_50 = arith.constant dense<0.000000e+00> : vector<2x4xf32>
    %170 = vector.multi_reduction <add>, %169, %cst_50 [2] : vector<2x4x4xf32> to vector<2x4xf32>
    %171 = vector.shape_cast %170 : vector<2x4xf32> to vector<2x4x1xf32>
    %172 = tpu.reciprocal %171 {approx = true} : vector<2x4x1xf32> -> vector<2x4x1xf32>
    %173 = vector.broadcast %172 : vector<2x4x1xf32> to vector<2x4x4xf32>
    %174 = arith.mulf %169, %173 : vector<2x4x4xf32>
    %175 = arith.truncf %174 : vector<2x4x4xf32> to vector<2x4x4xbf16>
    "tpu.trace_start"() <{level = 10 : i32, message = "bqk,bkd->bqd"}> : () -> ()
    %cst_51 = arith.constant dense<0.000000e+00> : vector<2x4x16xf32>
    %176 = tpu.matmul %175, %163, %cst_51 {dimension_numbers = #tpu.dot_dimension_numbers<[2], [1], [1], [2], [0, 0, 0, 1, 1, 2], [0], [0]>} : vector<2x4x4xbf16>, vector<2x4x16xbf16>, vector<2x4x16xf32> -> vector<2x4x16xf32>
    "tpu.trace_stop"() : () -> ()
    %177 = vector.extract_strided_slice %74 {offsets = [0, 0, 96], sizes = [2, 4, 16], strides = [1, 1, 1]} : vector<2x4x128xbf16> to vector<2x4x16xbf16>
    %178 = vector.extract_strided_slice %77 {offsets = [0, 0, 96], sizes = [2, 4, 16], strides = [1, 1, 1]} : vector<2x4x128xbf16> to vector<2x4x16xbf16>
    %179 = vector.extract_strided_slice %80 {offsets = [0, 0, 96], sizes = [2, 4, 16], strides = [1, 1, 1]} : vector<2x4x128xbf16> to vector<2x4x16xbf16>
    "tpu.trace_start"() <{level = 10 : i32, message = "bqd,bkd->bqk"}> : () -> ()
    %cst_52 = arith.constant dense<0.000000e+00> : vector<2x4x4xf32>
    %180 = tpu.matmul %177, %178, %cst_52 {dimension_numbers = #tpu.dot_dimension_numbers<[2], [2], [1], [1], [0, 0, 0, 1, 1, 1], [0], [0]>} : vector<2x4x16xbf16>, vector<2x4x16xbf16>, vector<2x4x4xf32> -> vector<2x4x4xf32>
    "tpu.trace_stop"() : () -> ()
    %cst_53 = arith.constant dense<0xFF800000> : vector<2x4xf32>
    %181 = vector.multi_reduction <maximumf>, %180, %cst_53 [2] : vector<2x4x4xf32> to vector<2x4xf32>
    %182 = vector.shape_cast %181 : vector<2x4xf32> to vector<2x4x1xf32>
    %183 = vector.broadcast %182 : vector<2x4x1xf32> to vector<2x4x4xf32>
    %184 = arith.subf %180, %183 : vector<2x4x4xf32>
    %185 = math.exp %184 : vector<2x4x4xf32>
    %cst_54 = arith.constant dense<0.000000e+00> : vector<2x4xf32>
    %186 = vector.multi_reduction <add>, %185, %cst_54 [2] : vector<2x4x4xf32> to vector<2x4xf32>
    %187 = vector.shape_cast %186 : vector<2x4xf32> to vector<2x4x1xf32>
    %188 = tpu.reciprocal %187 {approx = true} : vector<2x4x1xf32> -> vector<2x4x1xf32>
    %189 = vector.broadcast %188 : vector<2x4x1xf32> to vector<2x4x4xf32>
    %190 = arith.mulf %185, %189 : vector<2x4x4xf32>
    %191 = arith.truncf %190 : vector<2x4x4xf32> to vector<2x4x4xbf16>
    "tpu.trace_start"() <{level = 10 : i32, message = "bqk,bkd->bqd"}> : () -> ()
    %cst_55 = arith.constant dense<0.000000e+00> : vector<2x4x16xf32>
    %192 = tpu.matmul %191, %179, %cst_55 {dimension_numbers = #tpu.dot_dimension_numbers<[2], [1], [1], [2], [0, 0, 0, 1, 1, 2], [0], [0]>} : vector<2x4x4xbf16>, vector<2x4x16xbf16>, vector<2x4x16xf32> -> vector<2x4x16xf32>
    "tpu.trace_stop"() : () -> ()
    %193 = vector.extract_strided_slice %74 {offsets = [0, 0, 112], sizes = [2, 4, 16], strides = [1, 1, 1]} : vector<2x4x128xbf16> to vector<2x4x16xbf16>
    %194 = vector.extract_strided_slice %77 {offsets = [0, 0, 112], sizes = [2, 4, 16], strides = [1, 1, 1]} : vector<2x4x128xbf16> to vector<2x4x16xbf16>
    %195 = vector.extract_strided_slice %80 {offsets = [0, 0, 112], sizes = [2, 4, 16], strides = [1, 1, 1]} : vector<2x4x128xbf16> to vector<2x4x16xbf16>
    "tpu.trace_start"() <{level = 10 : i32, message = "bqd,bkd->bqk"}> : () -> ()
    %cst_56 = arith.constant dense<0.000000e+00> : vector<2x4x4xf32>
    %196 = tpu.matmul %193, %194, %cst_56 {dimension_numbers = #tpu.dot_dimension_numbers<[2], [2], [1], [1], [0, 0, 0, 1, 1, 1], [0], [0]>} : vector<2x4x16xbf16>, vector<2x4x16xbf16>, vector<2x4x4xf32> -> vector<2x4x4xf32>
    "tpu.trace_stop"() : () -> ()
    %cst_57 = arith.constant dense<0xFF800000> : vector<2x4xf32>
    %197 = vector.multi_reduction <maximumf>, %196, %cst_57 [2] : vector<2x4x4xf32> to vector<2x4xf32>
    %198 = vector.shape_cast %197 : vector<2x4xf32> to vector<2x4x1xf32>
    %199 = vector.broadcast %198 : vector<2x4x1xf32> to vector<2x4x4xf32>
    %200 = arith.subf %196, %199 : vector<2x4x4xf32>
    %201 = math.exp %200 : vector<2x4x4xf32>
    %cst_58 = arith.constant dense<0.000000e+00> : vector<2x4xf32>
    %202 = vector.multi_reduction <add>, %201, %cst_58 [2] : vector<2x4x4xf32> to vector<2x4xf32>
    %203 = vector.shape_cast %202 : vector<2x4xf32> to vector<2x4x1xf32>
    %204 = tpu.reciprocal %203 {approx = true} : vector<2x4x1xf32> -> vector<2x4x1xf32>
    %205 = vector.broadcast %204 : vector<2x4x1xf32> to vector<2x4x4xf32>
    %206 = arith.mulf %201, %205 : vector<2x4x4xf32>
    %207 = arith.truncf %206 : vector<2x4x4xf32> to vector<2x4x4xbf16>
    "tpu.trace_start"() <{level = 10 : i32, message = "bqk,bkd->bqd"}> : () -> ()
    %cst_59 = arith.constant dense<0.000000e+00> : vector<2x4x16xf32>
    %208 = tpu.matmul %207, %195, %cst_59 {dimension_numbers = #tpu.dot_dimension_numbers<[2], [1], [1], [2], [0, 0, 0, 1, 1, 2], [0], [0]>} : vector<2x4x4xbf16>, vector<2x4x16xbf16>, vector<2x4x16xf32> -> vector<2x4x16xf32>
    "tpu.trace_stop"() : () -> ()
    %209 = tpu.concatenate %96, %112, %128, %144, %160, %176, %192, %208 in 2 : vector<2x4x16xf32>, vector<2x4x16xf32>, vector<2x4x16xf32>, vector<2x4x16xf32>, vector<2x4x16xf32>, vector<2x4x16xf32>, vector<2x4x16xf32>, vector<2x4x16xf32> -> vector<2x4x128xf32>
    %210 = arith.truncf %209 : vector<2x4x128xf32> to vector<2x4x128xbf16>
    %211 = vector.extract_strided_slice %210 {offsets = [0, 0, 0], sizes = [2, 1, 128], strides = [1, 1, 1]} : vector<2x4x128xbf16> to vector<2x1x128xbf16>
    %212 = vector.shape_cast %211 : vector<2x1x128xbf16> to vector<2x128xbf16>
    %c128 = arith.constant 128 : index
    %c0_60 = arith.constant 0 : index
    %213 = vector.load %arg2[%c128, %c0_60] : memref<640x384xbf16, #tpu.memory_space<vmem>>, vector<128x256xbf16>
    %cst_61 = arith.constant dense<0.000000e+00> : vector<2x256xf32>
    %214 = tpu.matmul %212, %213, %cst_61 {dimension_numbers = #tpu.dot_dimension_numbers<[1], [0], [0], [1], [0, 0, 1, 1], [], []>} : vector<2x128xbf16>, vector<128x256xbf16>, vector<2x256xf32> -> vector<2x256xf32>
    %215 = vector.extract_strided_slice %210 {offsets = [0, 1, 0], sizes = [2, 1, 128], strides = [1, 1, 1]} : vector<2x4x128xbf16> to vector<2x1x128xbf16>
    %216 = vector.shape_cast %215 : vector<2x1x128xbf16> to vector<2x128xbf16>
    %c256 = arith.constant 256 : index
    %c0_62 = arith.constant 0 : index
    %217 = vector.load %arg2[%c256, %c0_62] : memref<640x384xbf16, #tpu.memory_space<vmem>>, vector<128x256xbf16>
    %cst_63 = arith.constant dense<0.000000e+00> : vector<2x256xf32>
    %218 = tpu.matmul %216, %217, %cst_63 {dimension_numbers = #tpu.dot_dimension_numbers<[1], [0], [0], [1], [0, 0, 1, 1], [], []>} : vector<2x128xbf16>, vector<128x256xbf16>, vector<2x256xf32> -> vector<2x256xf32>
    %219 = arith.addf %214, %218 : vector<2x256xf32>
    %220 = vector.extract_strided_slice %210 {offsets = [0, 2, 0], sizes = [2, 1, 128], strides = [1, 1, 1]} : vector<2x4x128xbf16> to vector<2x1x128xbf16>
    %221 = vector.shape_cast %220 : vector<2x1x128xbf16> to vector<2x128xbf16>
    %c384 = arith.constant 384 : index
    %c0_64 = arith.constant 0 : index
    %222 = vector.load %arg2[%c384, %c0_64] : memref<640x384xbf16, #tpu.memory_space<vmem>>, vector<128x256xbf16>
    %cst_65 = arith.constant dense<0.000000e+00> : vector<2x256xf32>
    %223 = tpu.matmul %221, %222, %cst_65 {dimension_numbers = #tpu.dot_dimension_numbers<[1], [0], [0], [1], [0, 0, 1, 1], [], []>} : vector<2x128xbf16>, vector<128x256xbf16>, vector<2x256xf32> -> vector<2x256xf32>
    %224 = arith.addf %219, %223 : vector<2x256xf32>
    %225 = vector.extract_strided_slice %210 {offsets = [0, 3, 0], sizes = [2, 1, 128], strides = [1, 1, 1]} : vector<2x4x128xbf16> to vector<2x1x128xbf16>
    %226 = vector.shape_cast %225 : vector<2x1x128xbf16> to vector<2x128xbf16>
    %c512 = arith.constant 512 : index
    %c0_66 = arith.constant 0 : index
    %227 = vector.load %arg2[%c512, %c0_66] : memref<640x384xbf16, #tpu.memory_space<vmem>>, vector<128x256xbf16>
    %cst_67 = arith.constant dense<0.000000e+00> : vector<2x256xf32>
    %228 = tpu.matmul %226, %227, %cst_67 {dimension_numbers = #tpu.dot_dimension_numbers<[1], [0], [0], [1], [0, 0, 1, 1], [], []>} : vector<2x128xbf16>, vector<128x256xbf16>, vector<2x256xf32> -> vector<2x256xf32>
    %229 = arith.addf %224, %228 : vector<2x256xf32>
    %c9 = arith.constant 9 : index
    %c0_68 = arith.constant 0 : index
    %230 = vector.load %arg3[%c9, %c0_68] : memref<10x384xf32, #tpu.memory_space<vmem>>, vector<1x256xf32>
    %231 = vector.broadcast %230 : vector<1x256xf32> to vector<2x256xf32>
    %232 = arith.addf %229, %231 : vector<2x256xf32>
    %cst_69 = arith.constant 0.000000e+00 : f32
    %233 = vector.broadcast %cst_69 : f32 to vector<2x256xf32>
    %234 = arith.maximumf %232, %233 : vector<2x256xf32>
    %c0_70 = arith.constant 0 : index
    %c0_71 = arith.constant 0 : index
    %235 = vector.load %arg4[%c0_70, %c0_71] : memref<2x256xf32, #tpu.memory_space<vmem>>, vector<2x256xf32>
    tpu.vector_store %arg4[%c0_70, %c0_71], %234 {strides = array<i32>} : memref<2x256xf32, #tpu.memory_space<vmem>>, vector<2x256xf32>,
    return
  }
}

</mosaic_0001>

<llo_original>
// kernel: cnn_forward.1
$region0: #{cnn_forward.1}
  #allocation0 [shape = 'u32[]', space=smem, size = 0x4, offset = 0x4, fixed_abs, tag = 'smem constant byte address 0x4 - core index']
  #allocation1 [shape = 'u32[144,128]{1,0:T(1,128)}', space=vmem, size = 0x12000, scoped, tag = 'internal scratch']
  %s0 = inlined_call_operand.vmem [shape: bf16[84,15], index: 0, kind: input, shape index: {}]
  %s1 = inlined_call_operand.hbm [shape: bf16[352,128], index: 1, kind: input, shape index: {}]
  %s2 = inlined_call_operand.hbm [shape: bf16[640,384], index: 2, kind: input, shape index: {}]
  %s3 = inlined_call_operand.vmem [shape: f32[10,384], index: 3, kind: input, shape index: {}]
  %s4 = inlined_call_operand.hbm [shape: f32[2,256], index: 4, kind: output, shape index: {}]
  %s5 = sld [smem:[#allocation0]]
  $region34: #{cnn_forward.1} parent=0
    _
  %s7 = ssub.s32 1, %s5
  %s8 = scalar_select 0, %s7, %s5
  $region1: #{cnn_forward.1} parent=0
    #allocation2 [shape = 'u8[90112]{0}', space=vmem, size = 0x16000, scoped, tag = 'input window, operand 1, single buffered']
    #allocation3 [shape = 's32[1]{0}', space=sflag, size = 0x4, scoped, tag = 'scoped memory for cnn_forward.1']
    #allocation4 [shape = 's32[1]{0}', space=sflag, size = 0x4, scoped, tag = 'scoped memory for cnn_forward.1']
    #allocation5 [shape = 'u8[491520]{0}', space=vmem, size = 0x78000, scoped, tag = 'input window, operand 2, single buffered']
    #allocation6 [shape = 's32[1]{0}', space=sflag, size = 0x4, scoped, tag = 'scoped memory for cnn_forward.1']
    #allocation7 [shape = 'u8[2048]{0}', space=vmem, size = 0x800, scoped, tag = 'output window, operand 0, single buffered']
    %9 = vsyncpa [#allocation3], 0
    %10 = vsyncpa [#allocation6], 0
    %11 = vsyncpa [#allocation4], 0
    // Predicated region
    $region2: #{cnn_forward.1} parent=1 // pred_check
      _
    $region3: #{cnn_forward.1} parent=1 // pred_check_branch
      %13 = sbr.rel (0) target = $region5
    $region4: #{cnn_forward.1} parent=1 // pred_region
      _
    $region5: #{cnn_forward.1} parent=1 // pred_fallthru
      _
    // Predicated region
    $region6: #{cnn_forward.1} parent=1 // pred_check
      _
    $region7: #{cnn_forward.1} parent=1 // pred_check_branch
      %15 = sbr.rel (0) target = $region9
    $region8: #{cnn_forward.1} parent=1 // pred_region
      %s17 = ssub.s32 2816, 2816
      %18 = vsyncadd [#allocation3], %s17
      %s19 = sshll.u32 [#allocation2], 4
      %s20 = int_to_ptr.vmem [resolvable:$true] %s19
      %25 = dma.hbm_to_vmem [thread:$0]  %s1, 2816, %s20, [#allocation3], 64, 64, 4
    $region9: #{cnn_forward.1} parent=1 // pred_fallthru
      _
    // Predicated region
    $region10: #{cnn_forward.1} parent=1 // pred_check
      _
    $region11: #{cnn_forward.1} parent=1 // pred_check_branch
      %27 = sbr.rel (0) target = $region13
    $region12: #{cnn_forward.1} parent=1 // pred_region
      %s29 = ssub.s32 15360, 15360
      %30 = vsyncadd [#allocation6], %s29
      %s31 = sshll.u32 [#allocation5], 4
      %s32 = int_to_ptr.vmem [resolvable:$true] %s31
      %37 = dma.hbm_to_vmem [thread:$0]  %s2, 15360, %s32, [#allocation6], 192, 192, 12
    $region13: #{cnn_forward.1} parent=1 // pred_fallthru
      _
    // Predicated region
    $region14: #{cnn_forward.1} parent=1 // pred_check
      _
    $region15: #{cnn_forward.1} parent=1 // pred_check_branch
      %39 = sbr.rel (0) target = $region17
    $region16: #{cnn_forward.1} parent=1 // pred_region
      _
    $region17: #{cnn_forward.1} parent=1 // pred_fallthru
      _
    // Predicated region
    $region18: #{cnn_forward.1} parent=1 // pred_check
      _
    $region19: #{cnn_forward.1} parent=1 // pred_check_branch
      %41 = sbr.rel (0) target = $region21
    $region20: #{cnn_forward.1} parent=1 // pred_region
      %42 = dma.done [#allocation3], 2816
    $region21: #{cnn_forward.1} parent=1 // pred_fallthru
      _
    // Predicated region
    $region22: #{cnn_forward.1} parent=1 // pred_check
      _
    $region23: #{cnn_forward.1} parent=1 // pred_check_branch
      %44 = sbr.rel (0) target = $region25
    $region24: #{cnn_forward.1} parent=1 // pred_region
      %45 = dma.done [#allocation6], 15360
    $region25: #{cnn_forward.1} parent=1 // pred_fallthru
      _
    %v47 = vld [vmem:[%s0] sm:$0xf]
    %v48 = vld [vmem:[%s0 + $0x4] sm:$0xf]
    %v49 = vld [vmem:[%s0 + $0x8] sm:$0xf]
    %v50 = vld [vmem:[%s0 + $0xc] sm:$0xf]
    %v51 = vld [vmem:[%s0 + $0x10] sm:$0xf]
    %v52 = vld [vmem:[%s0 + $0x14] sm:$0xf]
    %v53 = vld [vmem:[%s0 + $0x18] sm:$0xf]
    %v54 = vld [vmem:[%s0 + $0x1c] sm:$0xf]
    %v55 = vld [vmem:[%s0 + $0x20] sm:$0xf]
    %v56 = vld [vmem:[%s0 + $0x24] sm:$0xf]
    %v57 = vld [vmem:[%s0 + $0x28] sm:$0x3]
    %v58 = vld [vmem:[#allocation2] sm:$0xf]
    %v59 = vld [vmem:[#allocation2 + $0x4] sm:$0xf]
    %v71 = vunpack.c.l.b16 %v47
    %v72 = vunpack.c.l.b16 %v48
    %v73 = vunpack.c.l.b16 %v49
    %v74 = vunpack.c.l.b16 %v50
    %v75 = vunpack.c.l.b16 %v51
    %v76 = vunpack.c.l.b16 %v52
    %v77 = vunpack.c.l.b16 %v53
    %v78 = vunpack.c.l.b16 %v54
    %v79 = vunpack.c.l.b16 %v55
    %v80 = vunpack.c.l.b16 %v56
    %v81 = vunpack.c.l.b16 %v57
    %v82 = vpack.c.b16 %v72, %v71
    %v83 = vpack.c.b16 %v74, %v73
    %v84 = vpack.c.b16 %v76, %v75
    %v85 = vpack.c.b16 %v78, %v77
    %v86 = vpack.c.b16 %v80, %v79
    %v87 = vpack.c.b16 %v81, %v81
    %v90 = vunpack.c.l.b16 %v58
    %v91 = vunpack.c.l.b16 %v59
    %v92 = vpack.c.b16 %v91, %v90
    %vm93 = vcmask 121856
    %v95 = vsel %vm93, %v82, 0
    %v98 = vsel %vm93, %v83, 0
    %v101 = vsel %vm93, %v84, 0
    %v104 = vsel %vm93, %v85, 0
    %v107 = vsel %vm93, %v86, 0
    %v110 = vsel %vm93, %v87, 0
    %vm112 = vcmask 1046528
    %vm113 = vcmask 1047552
    %v114 = vsel %vm112, 4294967295, 65535
    %v115 = vsel %vm113, %v114, 0
    %v117 = vand.u32 %v92, %v115
    %119 = vmatprep.subr.bf16.mxu0 0
    %120 = vmatpush1.bf16.msra.mxu0 %v117
    %121 = vmatprep.subr.bf16.mxu0 0
    %122 = vmatpush1.bf16.msra.mxu0 0
    %123 = vmatprep.subr.bf16.mxu0 0
    %124 = vmatpush1.bf16.msra.mxu0 0
    %125 = vmatprep.subr.bf16.mxu0 0
    %126 = vmatpush1.bf16.msra.mxu0 0
    %127 = vmatprep.subr.bf16.mxu0 0
    %128 = vmatpush1.bf16.msra.mxu0 0
    %129 = vmatprep.subr.bf16.mxu0 0
    %130 = vmatpush1.bf16.msra.mxu0 0
    %131 = vmatprep.subr.bf16.mxu0 0
    %132 = vmatpush1.bf16.msra.mxu0 0
    %133 = vmatprep.subr.bf16.mxu0 0
    %134 = vmatpush1.bf16.msra.mxu0 0
    %135 = vmatprep.subr.bf16.mxu0 0
    %136 = vmatpush1.bf16.msra.mxu0 0
    %137 = vmatprep.subr.bf16.mxu0 0
    %138 = vmatpush1.bf16.msra.mxu0 0
    %139 = vmatprep.subr.bf16.mxu0 0
    %140 = vmatpush1.bf16.msra.mxu0 0
    %141 = vmatprep.subr.bf16.mxu0 0
    %142 = vmatpush1.bf16.msra.mxu0 0
    %143 = vmatprep.subr.bf16.mxu0 0
    %144 = vmatpush1.bf16.msra.mxu0 0
    %145 = vmatprep.subr.bf16.mxu0 0
    %146 = vmatpush1.bf16.msra.mxu0 0
    %147 = vmatprep.subr.bf16.mxu0 0
    %148 = vmatpush1.bf16.msra.mxu0 0
    %149 = vmatprep.subr.bf16.mxu0 0
    %150 = vmatpush1.bf16.msra.mxu0 0
    %151 = vmatprep.mubr.bf16.mxu0 0
    %152 = vmatmul.mubr.bf16.gmra.mrb[0].mxu0 %v95
    %v153 = vpop.f32.mrb[0].mxu0
    %v154 = vadd.f32 0.0, %v153
    %v155 = vpop.f32.mrb[0].mxu0
    %v156 = vpop.f32.mrb[0].mxu0
    %v157 = vadd.f32 0.0, %v156
    %v158 = vpop.f32.mrb[0].mxu0
    %159 = vmatprep.mubr.bf16.mxu0 0
    %160 = vmatmul.mubr.bf16.gmra.mrb[0].mxu0 %v98
    %v161 = vpop.f32.mrb[0].mxu0
    %v162 = vadd.f32 0.0, %v161
    %v163 = vpop.f32.mrb[0].mxu0
    %v164 = vpop.f32.mrb[0].mxu0
    %v165 = vadd.f32 0.0, %v164
    %v166 = vpop.f32.mrb[0].mxu0
    %167 = vmatprep.mubr.bf16.mxu0 0
    %168 = vmatmul.mubr.bf16.gmra.mrb[0].mxu0 %v101
    %v169 = vpop.f32.mrb[0].mxu0
    %v170 = vadd.f32 0.0, %v169
    %v171 = vpop.f32.mrb[0].mxu0
    %v172 = vpop.f32.mrb[0].mxu0
    %v173 = vadd.f32 0.0, %v172
    %v174 = vpop.f32.mrb[0].mxu0
    %175 = vmatprep.mubr.bf16.mxu0 0
    %176 = vmatmul.mubr.bf16.gmra.mrb[0].mxu0 %v104
    %v177 = vpop.f32.mrb[0].mxu0
    %v178 = vadd.f32 0.0, %v177
    %v179 = vpop.f32.mrb[0].mxu0
    %v180 = vpop.f32.mrb[0].mxu0
    %v181 = vadd.f32 0.0, %v180
    %v182 = vpop.f32.mrb[0].mxu0
    %183 = vmatprep.mubr.bf16.mxu0 0
    %184 = vmatmul.mubr.bf16.gmra.mrb[0].mxu0 %v107
    %v185 = vpop.f32.mrb[0].mxu0
    %v186 = vadd.f32 0.0, %v185
    %v187 = vpop.f32.mrb[0].mxu0
    %v188 = vpop.f32.mrb[0].mxu0
    %v189 = vadd.f32 0.0, %v188
    %v190 = vpop.f32.mrb[0].mxu0
    %191 = vmatprep.mubr.bf16.mxu0 0
    %192 = vmatmul.mubr.bf16.gmra.mrb[0].mxu0 %v110
    %v193 = vpop.f32.mrb[0].mxu0
    %v194 = vadd.f32 0.0, %v193
    %v195 = vpop.f32.mrb[0].mxu0
    %v196 = vpop.f32.mrb[0].mxu0
    %v197 = vpop.f32.mrb[0].mxu0
    %198 = vdwg.mxu0
    %v199 = vld [vmem:[%s3] ss:$0 sm:$0xff]
    %v200 = vld [vmem:[%s3 + $0x1] ss:$0 sm:$0xff]
    %v201 = vmul.f32 %v154, %v199
    %v202 = vmul.f32 %v157, %v199
    %v203 = vmul.f32 %v162, %v199
    %v204 = vmul.f32 %v165, %v199
    %v205 = vmul.f32 %v170, %v199
    %v206 = vmul.f32 %v173, %v199
    %v207 = vmul.f32 %v178, %v199
    %v208 = vmul.f32 %v181, %v199
    %v209 = vmul.f32 %v186, %v199
    %v210 = vmul.f32 %v189, %v199
    %v211 = vmul.f32 %v194, %v199
    %v212 = vadd.f32 %v201, %v200
    %v213 = vadd.f32 %v202, %v200
    %v214 = vadd.f32 %v203, %v200
    %v215 = vadd.f32 %v204, %v200
    %v216 = vadd.f32 %v205, %v200
    %v217 = vadd.f32 %v206, %v200
    %v218 = vadd.f32 %v207, %v200
    %v219 = vadd.f32 %v208, %v200
    %v220 = vadd.f32 %v209, %v200
    %v221 = vadd.f32 %v210, %v200
    %v222 = vadd.f32 %v211, %v200
    %v223 = vmax.f32 %v212, 0.0
    %v224 = vmax.f32 %v213, 0.0
    %v225 = vmax.f32 %v214, 0.0
    %v226 = vmax.f32 %v215, 0.0
    %v227 = vmax.f32 %v216, 0.0
    %v228 = vmax.f32 %v217, 0.0
    %v229 = vmax.f32 %v218, 0.0
    %v230 = vmax.f32 %v219, 0.0
    %v231 = vmax.f32 %v220, 0.0
    %v232 = vmax.f32 %v221, 0.0
    %v233 = vmax.f32 %v222, 0.0
    %v245 = vcombine.high %v223, %v223
    %v247 = vunpack.c.l.s4 1983009808
    %v248 = vunpack.c.0.s8 %v247
    %v249 = vlaneseq
    %v250 = vshrl.u32 %v249, 7
    %v251 = vsub.s32 %v248, %v250
    %v252 = vrot.slane %v223, %v251
    %v254 = vunpack.c.l.s4 1983009808
    %v255 = vunpack.c.0.s8 %v254
    %v256 = vlaneseq
    %v257 = vshrl.u32 %v256, 7
    %v258 = vsub.s32 %v255, %v257
    %v259 = vrot.slane %v245, %v258
    %v260 = vcombine.high %v252, %v252
    %v261 = vcombine.high %v259, %v259
    %v262 = vcombine.high %v224, %v224
    %v264 = vunpack.c.l.s4 1983009808
    %v265 = vunpack.c.0.s8 %v264
    %v266 = vlaneseq
    %v267 = vshrl.u32 %v266, 7
    %v268 = vsub.s32 %v265, %v267
    %v269 = vrot.slane %v224, %v268
    %v271 = vunpack.c.l.s4 1983009808
    %v272 = vunpack.c.0.s8 %v271
    %v273 = vlaneseq
    %v274 = vshrl.u32 %v273, 7
    %v275 = vsub.s32 %v272, %v274
    %v276 = vrot.slane %v262, %v275
    %v277 = vcombine.high %v269, %v269
    %v278 = vcombine.high %v276, %v276
    %v279 = vcombine.high %v225, %v225
    %v281 = vunpack.c.l.s4 1983009808
    %v282 = vunpack.c.0.s8 %v281
    %v283 = vlaneseq
    %v284 = vshrl.u32 %v283, 7
    %v285 = vsub.s32 %v282, %v284
    %v286 = vrot.slane %v225, %v285
    %v288 = vunpack.c.l.s4 1983009808
    %v289 = vunpack.c.0.s8 %v288
    %v290 = vlaneseq
    %v291 = vshrl.u32 %v290, 7
    %v292 = vsub.s32 %v289, %v291
    %v293 = vrot.slane %v279, %v292
    %v294 = vcombine.high %v286, %v286
    %v295 = vcombine.high %v293, %v293
    %v296 = vcombine.high %v226, %v226
    %v298 = vunpack.c.l.s4 1983009808
    %v299 = vunpack.c.0.s8 %v298
    %v300 = vlaneseq
    %v301 = vshrl.u32 %v300, 7
    %v302 = vsub.s32 %v299, %v301
    %v303 = vrot.slane %v226, %v302
    %v305 = vunpack.c.l.s4 1983009808
    %v306 = vunpack.c.0.s8 %v305
    %v307 = vlaneseq
    %v308 = vshrl.u32 %v307, 7
    %v309 = vsub.s32 %v306, %v308
    %v310 = vrot.slane %v296, %v309
    %v311 = vcombine.high %v303, %v303
    %v312 = vcombine.high %v310, %v310
    %v313 = vcombine.high %v227, %v227
    %v315 = vunpack.c.l.s4 1983009808
    %v316 = vunpack.c.0.s8 %v315
    %v317 = vlaneseq
    %v318 = vshrl.u32 %v317, 7
    %v319 = vsub.s32 %v316, %v318
    %v320 = vrot.slane %v227, %v319
    %v322 = vunpack.c.l.s4 1983009808
    %v323 = vunpack.c.0.s8 %v322
    %v324 = vlaneseq
    %v325 = vshrl.u32 %v324, 7
    %v326 = vsub.s32 %v323, %v325
    %v327 = vrot.slane %v313, %v326
    %v328 = vcombine.high %v320, %v320
    %v329 = vcombine.high %v327, %v327
    %v330 = vcombine.high %v228, %v228
    %v332 = vunpack.c.l.s4 1983009808
    %v333 = vunpack.c.0.s8 %v332
    %v334 = vlaneseq
    %v335 = vshrl.u32 %v334, 7
    %v336 = vsub.s32 %v333, %v335
    %v337 = vrot.slane %v228, %v336
    %v339 = vunpack.c.l.s4 1983009808
    %v340 = vunpack.c.0.s8 %v339
    %v341 = vlaneseq
    %v342 = vshrl.u32 %v341, 7
    %v343 = vsub.s32 %v340, %v342
    %v344 = vrot.slane %v330, %v343
    %v345 = vcombine.high %v337, %v337
    %v346 = vcombine.high %v344, %v344
    %v347 = vcombine.high %v229, %v229
    %v349 = vunpack.c.l.s4 1983009808
    %v350 = vunpack.c.0.s8 %v349
    %v351 = vlaneseq
    %v352 = vshrl.u32 %v351, 7
    %v353 = vsub.s32 %v350, %v352
    %v354 = vrot.slane %v229, %v353
    %v356 = vunpack.c.l.s4 1983009808
    %v357 = vunpack.c.0.s8 %v356
    %v358 = vlaneseq
    %v359 = vshrl.u32 %v358, 7
    %v360 = vsub.s32 %v357, %v359
    %v361 = vrot.slane %v347, %v360
    %v362 = vcombine.high %v354, %v354
    %v363 = vcombine.high %v361, %v361
    %v364 = vcombine.high %v230, %v230
    %v366 = vunpack.c.l.s4 1983009808
    %v367 = vunpack.c.0.s8 %v366
    %v368 = vlaneseq
    %v369 = vshrl.u32 %v368, 7
    %v370 = vsub.s32 %v367, %v369
    %v371 = vrot.slane %v230, %v370
    %v373 = vunpack.c.l.s4 1983009808
    %v374 = vunpack.c.0.s8 %v373
    %v375 = vlaneseq
    %v376 = vshrl.u32 %v375, 7
    %v377 = vsub.s32 %v374, %v376
    %v378 = vrot.slane %v364, %v377
    %v379 = vcombine.high %v371, %v371
    %v380 = vcombine.high %v378, %v378
    %v381 = vcombine.high %v231, %v231
    %v383 = vunpack.c.l.s4 1983009808
    %v384 = vunpack.c.0.s8 %v383
    %v385 = vlaneseq
    %v386 = vshrl.u32 %v385, 7
    %v387 = vsub.s32 %v384, %v386
    %v388 = vrot.slane %v231, %v387
    %v390 = vunpack.c.l.s4 1983009808
    %v391 = vunpack.c.0.s8 %v390
    %v392 = vlaneseq
    %v393 = vshrl.u32 %v392, 7
    %v394 = vsub.s32 %v391, %v393
    %v395 = vrot.slane %v381, %v394
    %v396 = vcombine.high %v388, %v388
    %v397 = vcombine.high %v395, %v395
    %v398 = vcombine.high %v232, %v232
    %v400 = vunpack.c.l.s4 1983009808
    %v401 = vunpack.c.0.s8 %v400
    %v402 = vlaneseq
    %v403 = vshrl.u32 %v402, 7
    %v404 = vsub.s32 %v401, %v403
    %v405 = vrot.slane %v232, %v404
    %v407 = vunpack.c.l.s4 1983009808
    %v408 = vunpack.c.0.s8 %v407
    %v409 = vlaneseq
    %v410 = vshrl.u32 %v409, 7
    %v411 = vsub.s32 %v408, %v410
    %v412 = vrot.slane %v398, %v411
    %v413 = vcombine.high %v405, %v405
    %v414 = vcombine.high %v412, %v412
    %v416 = vunpack.c.l.s4 1983009808
    %v417 = vunpack.c.0.s8 %v416
    %v418 = vlaneseq
    %v419 = vshrl.u32 %v418, 7
    %v420 = vsub.s32 %v417, %v419
    %v421 = vrot.slane %v233, %v420
    %v422 = vcombine.high %v421, %v421
    %v423 = vcombine.low %v252, %v260
    %v424 = vcombine.low %v259, %v261
    %v426 = vunpack.c.l.s4 1983009808
    %v427 = vunpack.c.0.s8 %v426
    %v428 = vlaneseq
    %v429 = vshrl.u32 %v428, 7
    %v430 = vsub.s32 %v427, %v429
    %v431 = vrot.slane %v423, %v430
    %v433 = vunpack.c.l.s4 1983009808
    %v434 = vunpack.c.0.s8 %v433
    %v435 = vlaneseq
    %v436 = vshrl.u32 %v435, 7
    %v437 = vsub.s32 %v434, %v436
    %v438 = vrot.slane %v424, %v437
    %v439 = vcombine.low %v431, %v438
    %v440 = vcombine.low %v269, %v277
    %v441 = vcombine.low %v276, %v278
    %v443 = vunpack.c.l.s4 1983009808
    %v444 = vunpack.c.0.s8 %v443
    %v445 = vlaneseq
    %v446 = vshrl.u32 %v445, 7
    %v447 = vsub.s32 %v444, %v446
    %v448 = vrot.slane %v440, %v447
    %v450 = vunpack.c.l.s4 1983009808
    %v451 = vunpack.c.0.s8 %v450
    %v452 = vlaneseq
    %v453 = vshrl.u32 %v452, 7
    %v454 = vsub.s32 %v451, %v453
    %v455 = vrot.slane %v441, %v454
    %v456 = vcombine.low %v448, %v455
    %v457 = vcombine.low %v286, %v294
    %v458 = vcombine.low %v293, %v295
    %v460 = vunpack.c.l.s4 1983009808
    %v461 = vunpack.c.0.s8 %v460
    %v462 = vlaneseq
    %v463 = vshrl.u32 %v462, 7
    %v464 = vsub.s32 %v461, %v463
    %v465 = vrot.slane %v457, %v464
    %v467 = vunpack.c.l.s4 1983009808
    %v468 = vunpack.c.0.s8 %v467
    %v469 = vlaneseq
    %v470 = vshrl.u32 %v469, 7
    %v471 = vsub.s32 %v468, %v470
    %v472 = vrot.slane %v458, %v471
    %v473 = vcombine.low %v465, %v472
    %v474 = vcombine.low %v303, %v311
    %v475 = vcombine.low %v310, %v312
    %v477 = vunpack.c.l.s4 1983009808
    %v478 = vunpack.c.0.s8 %v477
    %v479 = vlaneseq
    %v480 = vshrl.u32 %v479, 7
    %v481 = vsub.s32 %v478, %v480
    %v482 = vrot.slane %v474, %v481
    %v484 = vunpack.c.l.s4 1983009808
    %v485 = vunpack.c.0.s8 %v484
    %v486 = vlaneseq
    %v487 = vshrl.u32 %v486, 7
    %v488 = vsub.s32 %v485, %v487
    %v489 = vrot.slane %v475, %v488
    %v490 = vcombine.low %v482, %v489
    %v491 = vcombine.low %v320, %v328
    %v492 = vcombine.low %v327, %v329
    %v494 = vunpack.c.l.s4 1983009808
    %v495 = vunpack.c.0.s8 %v494
    %v496 = vlaneseq
    %v497 = vshrl.u32 %v496, 7
    %v498 = vsub.s32 %v495, %v497
    %v499 = vrot.slane %v491, %v498
    %v501 = vunpack.c.l.s4 1983009808
    %v502 = vunpack.c.0.s8 %v501
    %v503 = vlaneseq
    %v504 = vshrl.u32 %v503, 7
    %v505 = vsub.s32 %v502, %v504
    %v506 = vrot.slane %v492, %v505
    %v507 = vcombine.low %v499, %v506
    %v509 = vunpack.c.l.s4 1983009808
    %v510 = vunpack.c.0.s8 %v509
    %v511 = vlaneseq
    %v512 = vshrl.u32 %v511, 7
    %v513 = vsub.s32 %v510, %v512
    %v514 = vrot.slane %v337, %v513
    %v515 = vcombine.low %v345, %v344
    %v516 = vcombine.low %v346, %v354
    %v518 = vunpack.c.l.s4 1983009808
    %v519 = vunpack.c.0.s8 %v518
    %v520 = vlaneseq
    %v521 = vshrl.u32 %v520, 7
    %v522 = vsub.s32 %v519, %v521
    %v523 = vrot.slane %v515, %v522
    %v525 = vunpack.c.l.s4 1983009808
    %v526 = vunpack.c.0.s8 %v525
    %v527 = vlaneseq
    %v528 = vshrl.u32 %v527, 7
    %v529 = vsub.s32 %v526, %v528
    %v530 = vrot.slane %v516, %v529
    %v531 = vcombine.low %v523, %v530
    %v532 = vcombine.low %v362, %v361
    %v533 = vcombine.low %v363, %v371
    %v535 = vunpack.c.l.s4 1983009808
    %v536 = vunpack.c.0.s8 %v535
    %v537 = vlaneseq
    %v538 = vshrl.u32 %v537, 7
    %v539 = vsub.s32 %v536, %v538
    %v540 = vrot.slane %v532, %v539
    %v542 = vunpack.c.l.s4 1983009808
    %v543 = vunpack.c.0.s8 %v542
    %v544 = vlaneseq
    %v545 = vshrl.u32 %v544, 7
    %v546 = vsub.s32 %v543, %v545
    %v547 = vrot.slane %v533, %v546
    %v548 = vcombine.low %v540, %v547
    %v549 = vcombine.low %v379, %v378
    %v550 = vcombine.low %v380, %v388
    %v552 = vunpack.c.l.s4 1983009808
    %v553 = vunpack.c.0.s8 %v552
    %v554 = vlaneseq
    %v555 = vshrl.u32 %v554, 7
    %v556 = vsub.s32 %v553, %v555
    %v557 = vrot.slane %v549, %v556
    %v559 = vunpack.c.l.s4 1983009808
    %v560 = vunpack.c.0.s8 %v559
    %v561 = vlaneseq
    %v562 = vshrl.u32 %v561, 7
    %v563 = vsub.s32 %v560, %v562
    %v564 = vrot.slane %v550, %v563
    %v565 = vcombine.low %v557, %v564
    %v566 = vcombine.low %v396, %v395
    %v567 = vcombine.low %v397, %v405
    %v569 = vunpack.c.l.s4 1983009808
    %v570 = vunpack.c.0.s8 %v569
    %v571 = vlaneseq
    %v572 = vshrl.u32 %v571, 7
    %v573 = vsub.s32 %v570, %v572
    %v574 = vrot.slane %v566, %v573
    %v576 = vunpack.c.l.s4 1983009808
    %v577 = vunpack.c.0.s8 %v576
    %v578 = vlaneseq
    %v579 = vshrl.u32 %v578, 7
    %v580 = vsub.s32 %v577, %v579
    %v581 = vrot.slane %v567, %v580
    %v582 = vcombine.low %v574, %v581
    %v583 = vcombine.low %v413, %v412
    %v584 = vcombine.low %v414, %v421
    %v586 = vunpack.c.l.s4 1983009808
    %v587 = vunpack.c.0.s8 %v586
    %v588 = vlaneseq
    %v589 = vshrl.u32 %v588, 7
    %v590 = vsub.s32 %v587, %v589
    %v591 = vrot.slane %v583, %v590
    %v593 = vunpack.c.l.s4 1983009808
    %v594 = vunpack.c.0.s8 %v593
    %v595 = vlaneseq
    %v596 = vshrl.u32 %v595, 7
    %v597 = vsub.s32 %v594, %v596
    %v598 = vrot.slane %v584, %v597
    %v599 = vcombine.low %v591, %v598
    %v601 = vunpack.c.l.s4 1983009808
    %v602 = vunpack.c.0.s8 %v601
    %v603 = vlaneseq
    %v604 = vshrl.u32 %v603, 7
    %v605 = vsub.s32 %v602, %v604
    %v606 = vrot.slane %v422, %v605
    %v619 = vpack.c.bf16 %v456, %v439
    %v620 = vpack.c.bf16 %v490, %v473
    %v621 = vpack.c.bf16 %v514, %v507
    %v622 = vpack.c.bf16 %v548, %v531
    %v623 = vpack.c.bf16 %v582, %v565
    %v624 = vpack.c.bf16 %v606, %v599
    %vm625 = vsmask.f32 7424
    %v627 = vshrl.u32 %v619, 16
    %v629 = vshll.u32 %v619, 16
    %v631 = vrot.slane %v629, 1
    %v632 = vor.u32 %v627, %v631
    %v634 = vshll.u32 %v620, 16
    %v636 = vrot.slane %v634, 1
    %v637 = vsel %vm625, %v632, %v636
    %v638 = vshrl.u32 %v620, 16
    %v640 = vor.u32 %v638, %v636
    %v642 = vshll.u32 %v621, 16
    %v644 = vrot.slane %v642, 1
    %v645 = vsel %vm625, %v640, %v644
    %v646 = vshrl.u32 %v621, 16
    %v648 = vor.u32 %v646, %v644
    %v650 = vshrl.u32 %v622, 16
    %v652 = vshll.u32 %v622, 16
    %v654 = vrot.slane %v652, 1
    %v655 = vor.u32 %v650, %v654
    %v657 = vshll.u32 %v623, 16
    %v659 = vrot.slane %v657, 1
    %v660 = vsel %vm625, %v655, %v659
    %v661 = vshrl.u32 %v623, 16
    %v663 = vor.u32 %v661, %v659
    %v665 = vshll.u32 %v624, 16
    %v667 = vrot.slane %v665, 1
    %v668 = vsel %vm625, %v663, %v667
    %v669 = vshrl.u32 %v624, 16
    %v671 = vor.u32 %v669, %v667
    %672 = vrot.lane.b32.xlu0 %v637, 16
    %v673 = vpop.permute.xlu0 %672
    %674 = vrot.lane.b32.xlu0 %v645, 16
    %v675 = vpop.permute.xlu0 %674
    %676 = vrot.lane.b32.xlu0 %v648, 16
    %v677 = vpop.permute.xlu0 %676
    %678 = vrot.lane.b32.xlu0 %v660, 16
    %v679 = vpop.permute.xlu0 %678
    %680 = vrot.lane.b32.xlu0 %v668, 16
    %v681 = vpop.permute.xlu0 %680
    %682 = vrot.lane.b32.xlu0 %v671, 16
    %v683 = vpop.permute.xlu0 %682
    %vm690 = vcmask 1046528
    %v691 = vrot.slane %v619, 1
    %v692 = vrot.slane %v620, 1
    %v693 = vsel %vm690, %v691, %v692
    %v694 = vrot.slane %v621, 1
    %v695 = vsel %vm690, %v692, %v694
    %v696 = vrot.slane %v622, 1
    %v697 = vrot.slane %v623, 1
    %v698 = vsel %vm690, %v696, %v697
    %v699 = vrot.slane %v624, 1
    %v700 = vsel %vm690, %v697, %v699
    %701 = vrot.lane.b32.xlu0 %v693, 32
    %v702 = vpop.permute.xlu0 %701
    %703 = vrot.lane.b32.xlu0 %v695, 32
    %v704 = vpop.permute.xlu0 %703
    %705 = vrot.lane.b32.xlu0 %v694, 32
    %v706 = vpop.permute.xlu0 %705
    %707 = vrot.lane.b32.xlu0 %v698, 32
    %v708 = vpop.permute.xlu0 %707
    %709 = vrot.lane.b32.xlu0 %v700, 32
    %v710 = vpop.permute.xlu0 %709
    %711 = vrot.lane.b32.xlu0 %v699, 32
    %v712 = vpop.permute.xlu0 %711
    %vm713 = vcmask 130048
    %v715 = vsel %vm713, %v619, %v673
    %v717 = vsel %vm713, %v620, %v675
    %v719 = vsel %vm713, %v621, %v677
    %v721 = vsel %vm713, %v622, %v679
    %v723 = vsel %vm713, %v623, %v681
    %v725 = vsel %vm713, %v624, %v683
    %vm726 = vcmask 261120
    %v728 = vsel %vm726, %v715, %v702
    %v730 = vsel %vm726, %v717, %v704
    %v732 = vsel %vm726, %v719, %v706
    %v734 = vsel %vm726, %v721, %v708
    %v736 = vsel %vm726, %v723, %v710
    %v738 = vsel %vm726, %v725, %v712
    %v745 = vunpack.c.l.b16 %v728
    %v746 = vunpack.c.h.b16 %v728
    %v747 = vunpack.c.l.b16 %v730
    %v748 = vunpack.c.h.b16 %v730
    %v749 = vunpack.c.l.b16 %v732
    %v750 = vunpack.c.l.b16 %v734
    %v751 = vunpack.c.h.b16 %v734
    %v752 = vunpack.c.l.b16 %v736
    %v753 = vunpack.c.h.b16 %v736
    %v754 = vunpack.c.l.b16 %v738
    %v755 = vld [vmem:[#allocation2 + $0x8] sm:$0xf]
    %v756 = vld [vmem:[#allocation2 + $0xc] sm:$0xf]
    %v757 = vld [vmem:[#allocation2 + $0x10] sm:$0xf]
    %v758 = vld [vmem:[#allocation2 + $0x14] sm:$0xf]
    %v759 = vld [vmem:[#allocation2 + $0x18] sm:$0xf]
    %v760 = vld [vmem:[#allocation2 + $0x1c] sm:$0xf]
    %v761 = vpack.c.b16 %v746, %v745
    %v762 = vpack.c.b16 %v748, %v747
    %v763 = vpack.c.b16 %v750, %v749
    %v764 = vpack.c.b16 %v752, %v751
    %v765 = vpack.c.b16 %v754, %v753
    %v772 = vunpack.c.l.b16 %v755
    %v773 = vunpack.c.l.b16 %v756
    %v774 = vunpack.c.l.b16 %v757
    %v775 = vunpack.c.l.b16 %v758
    %v776 = vunpack.c.l.b16 %v759
    %v777 = vunpack.c.l.b16 %v760
    %v778 = vpack.c.b16 %v773, %v772
    %v779 = vpack.c.b16 %v775, %v774
    %v780 = vpack.c.b16 %v777, %v776
    %vm784 = vcmask 392192
    %v786 = vsel %vm784, %v761, 0
    %v789 = vsel %vm784, %v762, 0
    %v792 = vsel %vm784, %v763, 0
    %v795 = vsel %vm784, %v764, 0
    %v798 = vsel %vm784, %v765, 0
    %800 = vmatprep.subr.bf16.mxu0 0
    %801 = vmatpush1.bf16.msra.mxu0 %v778
    %802 = vmatprep.subr.bf16.mxu0 0
    %803 = vmatpush1.bf16.msra.mxu0 %v779
    %804 = vmatprep.subr.bf16.mxu0 0
    %805 = vmatpush1.bf16.msra.mxu0 %v780
    %806 = vmatprep.subr.bf16.mxu0 0
    %807 = vmatpush1.bf16.msra.mxu0 0
    %808 = vmatprep.subr.bf16.mxu0 0
    %809 = vmatpush1.bf16.msra.mxu0 0
    %810 = vmatprep.subr.bf16.mxu0 0
    %811 = vmatpush1.bf16.msra.mxu0 0
    %812 = vmatprep.subr.bf16.mxu0 0
    %813 = vmatpush1.bf16.msra.mxu0 0
    %814 = vmatprep.subr.bf16.mxu0 0
    %815 = vmatpush1.bf16.msra.mxu0 0
    %816 = vmatprep.subr.bf16.mxu0 0
    %817 = vmatpush1.bf16.msra.mxu0 0
    %818 = vmatprep.subr.bf16.mxu0 0
    %819 = vmatpush1.bf16.msra.mxu0 0
    %820 = vmatprep.subr.bf16.mxu0 0
    %821 = vmatpush1.bf16.msra.mxu0 0
    %822 = vmatprep.subr.bf16.mxu0 0
    %823 = vmatpush1.bf16.msra.mxu0 0
    %824 = vmatprep.subr.bf16.mxu0 0
    %825 = vmatpush1.bf16.msra.mxu0 0
    %826 = vmatprep.subr.bf16.mxu0 0
    %827 = vmatpush1.bf16.msra.mxu0 0
    %828 = vmatprep.subr.bf16.mxu0 0
    %829 = vmatpush1.bf16.msra.mxu0 0
    %830 = vmatprep.subr.bf16.mxu0 0
    %831 = vmatpush1.bf16.msra.mxu0 0
    %832 = vmatprep.mubr.bf16.mxu0 0
    %833 = vmatmul.mubr.bf16.gmra.mrb[0].mxu0 %v786
    %v834 = vpop.f32.mrb[0].mxu0
    %v835 = vadd.f32 0.0, %v834
    %v836 = vpop.f32.mrb[0].mxu0
    %v837 = vpop.f32.mrb[0].mxu0
    %v838 = vadd.f32 0.0, %v837
    %v839 = vpop.f32.mrb[0].mxu0
    %840 = vmatprep.mubr.bf16.mxu0 0
    %841 = vmatmul.mubr.bf16.gmra.mrb[0].mxu0 %v789
    %v842 = vpop.f32.mrb[0].mxu0
    %v843 = vadd.f32 0.0, %v842
    %v844 = vpop.f32.mrb[0].mxu0
    %v845 = vpop.f32.mrb[0].mxu0
    %v846 = vadd.f32 0.0, %v845
    %v847 = vpop.f32.mrb[0].mxu0
    %848 = vmatprep.mubr.bf16.mxu0 0
    %849 = vmatmul.mubr.bf16.gmra.mrb[0].mxu0 %v792
    %v850 = vpop.f32.mrb[0].mxu0
    %v851 = vadd.f32 0.0, %v850
    %v852 = vpop.f32.mrb[0].mxu0
    %v853 = vpop.f32.mrb[0].mxu0
    %v854 = vadd.f32 0.0, %v853
    %v855 = vpop.f32.mrb[0].mxu0
    %856 = vmatprep.mubr.bf16.mxu0 0
    %857 = vmatmul.mubr.bf16.gmra.mrb[0].mxu0 %v795
    %v858 = vpop.f32.mrb[0].mxu0
    %v859 = vadd.f32 0.0, %v858
    %v860 = vpop.f32.mrb[0].mxu0
    %v861 = vpop.f32.mrb[0].mxu0
    %v862 = vadd.f32 0.0, %v861
    %v863 = vpop.f32.mrb[0].mxu0
    %864 = vmatprep.mubr.bf16.mxu0 0
    %865 = vmatmul.mubr.bf16.gmra.mrb[0].mxu0 %v798
    %v866 = vpop.f32.mrb[0].mxu0
    %v867 = vadd.f32 0.0, %v866
    %v868 = vpop.f32.mrb[0].mxu0
    %v869 = vpop.f32.mrb[0].mxu0
    %v870 = vadd.f32 0.0, %v869
    %v871 = vpop.f32.mrb[0].mxu0
    %872 = vdwg.mxu0
    %v873 = vld [vmem:[%s3 + $0x2] ss:$0 sm:$0xff]
    %v874 = vld [vmem:[%s3 + $0x3] ss:$0 sm:$0xff]
    %v875 = vmul.f32 %v835, %v873
    %v876 = vmul.f32 %v838, %v873
    %v877 = vmul.f32 %v843, %v873
    %v878 = vmul.f32 %v846, %v873
    %v879 = vmul.f32 %v851, %v873
    %v880 = vmul.f32 %v854, %v873
    %v881 = vmul.f32 %v859, %v873
    %v882 = vmul.f32 %v862, %v873
    %v883 = vmul.f32 %v867, %v873
    %v884 = vmul.f32 %v870, %v873
    %v885 = vadd.f32 %v875, %v874
    %v886 = vadd.f32 %v876, %v874
    %v887 = vadd.f32 %v877, %v874
    %v888 = vadd.f32 %v878, %v874
    %v889 = vadd.f32 %v879, %v874
    %v890 = vadd.f32 %v880, %v874
    %v891 = vadd.f32 %v881, %v874
    %v892 = vadd.f32 %v882, %v874
    %v893 = vadd.f32 %v883, %v874
    %v894 = vadd.f32 %v884, %v874
    %v895 = vmax.f32 %v885, 0.0
    %v896 = vmax.f32 %v886, 0.0
    %v897 = vmax.f32 %v887, 0.0
    %v898 = vmax.f32 %v888, 0.0
    %v899 = vmax.f32 %v889, 0.0
    %v900 = vmax.f32 %v890, 0.0
    %v901 = vmax.f32 %v891, 0.0
    %v902 = vmax.f32 %v892, 0.0
    %v903 = vmax.f32 %v893, 0.0
    %v904 = vmax.f32 %v894, 0.0
    %v915 = vcombine.high %v895, %v895
    %v917 = vunpack.c.l.s4 1983009808
    %v918 = vunpack.c.0.s8 %v917
    %v919 = vlaneseq
    %v920 = vshrl.u32 %v919, 7
    %v921 = vsub.s32 %v918, %v920
    %v922 = vrot.slane %v895, %v921
    %v924 = vunpack.c.l.s4 1983009808
    %v925 = vunpack.c.0.s8 %v924
    %v926 = vlaneseq
    %v927 = vshrl.u32 %v926, 7
    %v928 = vsub.s32 %v925, %v927
    %v929 = vrot.slane %v915, %v928
    %v930 = vcombine.high %v922, %v922
    %v931 = vcombine.high %v929, %v929
    %v932 = vcombine.high %v896, %v896
    %v934 = vunpack.c.l.s4 1983009808
    %v935 = vunpack.c.0.s8 %v934
    %v936 = vlaneseq
    %v937 = vshrl.u32 %v936, 7
    %v938 = vsub.s32 %v935, %v937
    %v939 = vrot.slane %v896, %v938
    %v941 = vunpack.c.l.s4 1983009808
    %v942 = vunpack.c.0.s8 %v941
    %v943 = vlaneseq
    %v944 = vshrl.u32 %v943, 7
    %v945 = vsub.s32 %v942, %v944
    %v946 = vrot.slane %v932, %v945
    %v947 = vcombine.high %v939, %v939
    %v948 = vcombine.high %v946, %v946
    %v949 = vcombine.high %v897, %v897
    %v951 = vunpack.c.l.s4 1983009808
    %v952 = vunpack.c.0.s8 %v951
    %v953 = vlaneseq
    %v954 = vshrl.u32 %v953, 7
    %v955 = vsub.s32 %v952, %v954
    %v956 = vrot.slane %v897, %v955
    %v958 = vunpack.c.l.s4 1983009808
    %v959 = vunpack.c.0.s8 %v958
    %v960 = vlaneseq
    %v961 = vshrl.u32 %v960, 7
    %v962 = vsub.s32 %v959, %v961
    %v963 = vrot.slane %v949, %v962
    %v964 = vcombine.high %v956, %v956
    %v965 = vcombine.high %v963, %v963
    %v966 = vcombine.high %v898, %v898
    %v968 = vunpack.c.l.s4 1983009808
    %v969 = vunpack.c.0.s8 %v968
    %v970 = vlaneseq
    %v971 = vshrl.u32 %v970, 7
    %v972 = vsub.s32 %v969, %v971
    %v973 = vrot.slane %v898, %v972
    %v975 = vunpack.c.l.s4 1983009808
    %v976 = vunpack.c.0.s8 %v975
    %v977 = vlaneseq
    %v978 = vshrl.u32 %v977, 7
    %v979 = vsub.s32 %v976, %v978
    %v980 = vrot.slane %v966, %v979
    %v981 = vcombine.high %v973, %v973
    %v982 = vcombine.high %v980, %v980
    %v983 = vcombine.high %v899, %v899
    %v985 = vunpack.c.l.s4 1983009808
    %v986 = vunpack.c.0.s8 %v985
    %v987 = vlaneseq
    %v988 = vshrl.u32 %v987, 7
    %v989 = vsub.s32 %v986, %v988
    %v990 = vrot.slane %v899, %v989
    %v992 = vunpack.c.l.s4 1983009808
    %v993 = vunpack.c.0.s8 %v992
    %v994 = vlaneseq
    %v995 = vshrl.u32 %v994, 7
    %v996 = vsub.s32 %v993, %v995
    %v997 = vrot.slane %v983, %v996
    %v998 = vcombine.high %v990, %v990
    %v999 = vcombine.high %v997, %v997
    %v1000 = vcombine.high %v900, %v900
    %v1002 = vunpack.c.l.s4 1983009808
    %v1003 = vunpack.c.0.s8 %v1002
    %v1004 = vlaneseq
    %v1005 = vshrl.u32 %v1004, 7
    %v1006 = vsub.s32 %v1003, %v1005
    %v1007 = vrot.slane %v900, %v1006
    %v1009 = vunpack.c.l.s4 1983009808
    %v1010 = vunpack.c.0.s8 %v1009
    %v1011 = vlaneseq
    %v1012 = vshrl.u32 %v1011, 7
    %v1013 = vsub.s32 %v1010, %v1012
    %v1014 = vrot.slane %v1000, %v1013
    %v1015 = vcombine.high %v1007, %v1007
    %v1016 = vcombine.high %v1014, %v1014
    %v1017 = vcombine.high %v901, %v901
    %v1019 = vunpack.c.l.s4 1983009808
    %v1020 = vunpack.c.0.s8 %v1019
    %v1021 = vlaneseq
    %v1022 = vshrl.u32 %v1021, 7
    %v1023 = vsub.s32 %v1020, %v1022
    %v1024 = vrot.slane %v901, %v1023
    %v1026 = vunpack.c.l.s4 1983009808
    %v1027 = vunpack.c.0.s8 %v1026
    %v1028 = vlaneseq
    %v1029 = vshrl.u32 %v1028, 7
    %v1030 = vsub.s32 %v1027, %v1029
    %v1031 = vrot.slane %v1017, %v1030
    %v1032 = vcombine.high %v1024, %v1024
    %v1033 = vcombine.high %v1031, %v1031
    %v1034 = vcombine.high %v902, %v902
    %v1036 = vunpack.c.l.s4 1983009808
    %v1037 = vunpack.c.0.s8 %v1036
    %v1038 = vlaneseq
    %v1039 = vshrl.u32 %v1038, 7
    %v1040 = vsub.s32 %v1037, %v1039
    %v1041 = vrot.slane %v902, %v1040
    %v1043 = vunpack.c.l.s4 1983009808
    %v1044 = vunpack.c.0.s8 %v1043
    %v1045 = vlaneseq
    %v1046 = vshrl.u32 %v1045, 7
    %v1047 = vsub.s32 %v1044, %v1046
    %v1048 = vrot.slane %v1034, %v1047
    %v1049 = vcombine.high %v1041, %v1041
    %v1050 = vcombine.high %v1048, %v1048
    %v1051 = vcombine.high %v903, %v903
    %v1053 = vunpack.c.l.s4 1983009808
    %v1054 = vunpack.c.0.s8 %v1053
    %v1055 = vlaneseq
    %v1056 = vshrl.u32 %v1055, 7
    %v1057 = vsub.s32 %v1054, %v1056
    %v1058 = vrot.slane %v903, %v1057
    %v1060 = vunpack.c.l.s4 1983009808
    %v1061 = vunpack.c.0.s8 %v1060
    %v1062 = vlaneseq
    %v1063 = vshrl.u32 %v1062, 7
    %v1064 = vsub.s32 %v1061, %v1063
    %v1065 = vrot.slane %v1051, %v1064
    %v1066 = vcombine.high %v1058, %v1058
    %v1067 = vcombine.high %v1065, %v1065
    %v1068 = vcombine.high %v904, %v904
    %v1070 = vunpack.c.l.s4 1983009808
    %v1071 = vunpack.c.0.s8 %v1070
    %v1072 = vlaneseq
    %v1073 = vshrl.u32 %v1072, 7
    %v1074 = vsub.s32 %v1071, %v1073
    %v1075 = vrot.slane %v904, %v1074
    %v1077 = vunpack.c.l.s4 1983009808
    %v1078 = vunpack.c.0.s8 %v1077
    %v1079 = vlaneseq
    %v1080 = vshrl.u32 %v1079, 7
    %v1081 = vsub.s32 %v1078, %v1080
    %v1082 = vrot.slane %v1068, %v1081
    %v1083 = vcombine.high %v1075, %v1075
    %v1084 = vcombine.high %v1082, %v1082
    %vm1125 = vcmask 254976
    %v1126 = vsel %vm1125, %v922, -inf
    %v1127 = vrot.slane %v1126, 4
    %v1128 = vmax.f32 %v1126, %v1127
    %v1129 = vrot.slane %v1128, 2
    %v1130 = vmax.f32 %v1128, %v1129
    %v1131 = vrot.slane %v1130, 1
    %v1132 = vmax.f32 %v1130, %v1131
    %v1133 = vsel %vm1125, %v930, -inf
    %v1134 = vrot.slane %v1133, 4
    %v1135 = vmax.f32 %v1133, %v1134
    %v1136 = vrot.slane %v1135, 2
    %v1137 = vmax.f32 %v1135, %v1136
    %v1138 = vrot.slane %v1137, 1
    %v1139 = vmax.f32 %v1137, %v1138
    %v1140 = vsel %vm1125, %v929, -inf
    %v1141 = vrot.slane %v1140, 4
    %v1142 = vmax.f32 %v1140, %v1141
    %v1143 = vrot.slane %v1142, 2
    %v1144 = vmax.f32 %v1142, %v1143
    %v1145 = vrot.slane %v1144, 1
    %v1146 = vmax.f32 %v1144, %v1145
    %v1147 = vsel %vm1125, %v931, -inf
    %v1148 = vrot.slane %v1147, 4
    %v1149 = vmax.f32 %v1147, %v1148
    %v1150 = vrot.slane %v1149, 2
    %v1151 = vmax.f32 %v1149, %v1150
    %v1152 = vrot.slane %v1151, 1
    %v1153 = vmax.f32 %v1151, %v1152
    %v1154 = vsel %vm1125, %v939, -inf
    %v1155 = vrot.slane %v1154, 4
    %v1156 = vmax.f32 %v1154, %v1155
    %v1157 = vrot.slane %v1156, 2
    %v1158 = vmax.f32 %v1156, %v1157
    %v1159 = vrot.slane %v1158, 1
    %v1160 = vmax.f32 %v1158, %v1159
    %v1161 = vsel %vm1125, %v947, -inf
    %v1162 = vrot.slane %v1161, 4
    %v1163 = vmax.f32 %v1161, %v1162
    %v1164 = vrot.slane %v1163, 2
    %v1165 = vmax.f32 %v1163, %v1164
    %v1166 = vrot.slane %v1165, 1
    %v1167 = vmax.f32 %v1165, %v1166
    %v1168 = vsel %vm1125, %v946, -inf
    %v1169 = vrot.slane %v1168, 4
    %v1170 = vmax.f32 %v1168, %v1169
    %v1171 = vrot.slane %v1170, 2
    %v1172 = vmax.f32 %v1170, %v1171
    %v1173 = vrot.slane %v1172, 1
    %v1174 = vmax.f32 %v1172, %v1173
    %v1175 = vsel %vm1125, %v948, -inf
    %v1176 = vrot.slane %v1175, 4
    %v1177 = vmax.f32 %v1175, %v1176
    %v1178 = vrot.slane %v1177, 2
    %v1179 = vmax.f32 %v1177, %v1178
    %v1180 = vrot.slane %v1179, 1
    %v1181 = vmax.f32 %v1179, %v1180
    %v1182 = vsel %vm1125, %v956, -inf
    %v1183 = vrot.slane %v1182, 4
    %v1184 = vmax.f32 %v1182, %v1183
    %v1185 = vrot.slane %v1184, 2
    %v1186 = vmax.f32 %v1184, %v1185
    %v1187 = vrot.slane %v1186, 1
    %v1188 = vmax.f32 %v1186, %v1187
    %v1189 = vsel %vm1125, %v964, -inf
    %v1190 = vrot.slane %v1189, 4
    %v1191 = vmax.f32 %v1189, %v1190
    %v1192 = vrot.slane %v1191, 2
    %v1193 = vmax.f32 %v1191, %v1192
    %v1194 = vrot.slane %v1193, 1
    %v1195 = vmax.f32 %v1193, %v1194
    %v1196 = vsel %vm1125, %v963, -inf
    %v1197 = vrot.slane %v1196, 4
    %v1198 = vmax.f32 %v1196, %v1197
    %v1199 = vrot.slane %v1198, 2
    %v1200 = vmax.f32 %v1198, %v1199
    %v1201 = vrot.slane %v1200, 1
    %v1202 = vmax.f32 %v1200, %v1201
    %v1203 = vsel %vm1125, %v965, -inf
    %v1204 = vrot.slane %v1203, 4
    %v1205 = vmax.f32 %v1203, %v1204
    %v1206 = vrot.slane %v1205, 2
    %v1207 = vmax.f32 %v1205, %v1206
    %v1208 = vrot.slane %v1207, 1
    %v1209 = vmax.f32 %v1207, %v1208
    %v1210 = vsel %vm1125, %v973, -inf
    %v1211 = vrot.slane %v1210, 4
    %v1212 = vmax.f32 %v1210, %v1211
    %v1213 = vrot.slane %v1212, 2
    %v1214 = vmax.f32 %v1212, %v1213
    %v1215 = vrot.slane %v1214, 1
    %v1216 = vmax.f32 %v1214, %v1215
    %v1217 = vsel %vm1125, %v981, -inf
    %v1218 = vrot.slane %v1217, 4
    %v1219 = vmax.f32 %v1217, %v1218
    %v1220 = vrot.slane %v1219, 2
    %v1221 = vmax.f32 %v1219, %v1220
    %v1222 = vrot.slane %v1221, 1
    %v1223 = vmax.f32 %v1221, %v1222
    %v1224 = vsel %vm1125, %v980, -inf
    %v1225 = vrot.slane %v1224, 4
    %v1226 = vmax.f32 %v1224, %v1225
    %v1227 = vrot.slane %v1226, 2
    %v1228 = vmax.f32 %v1226, %v1227
    %v1229 = vrot.slane %v1228, 1
    %v1230 = vmax.f32 %v1228, %v1229
    %v1231 = vsel %vm1125, %v982, -inf
    %v1232 = vrot.slane %v1231, 4
    %v1233 = vmax.f32 %v1231, %v1232
    %v1234 = vrot.slane %v1233, 2
    %v1235 = vmax.f32 %v1233, %v1234
    %v1236 = vrot.slane %v1235, 1
    %v1237 = vmax.f32 %v1235, %v1236
    %v1238 = vsel %vm1125, %v990, -inf
    %v1239 = vrot.slane %v1238, 4
    %v1240 = vmax.f32 %v1238, %v1239
    %v1241 = vrot.slane %v1240, 2
    %v1242 = vmax.f32 %v1240, %v1241
    %v1243 = vrot.slane %v1242, 1
    %v1244 = vmax.f32 %v1242, %v1243
    %v1245 = vsel %vm1125, %v998, -inf
    %v1246 = vrot.slane %v1245, 4
    %v1247 = vmax.f32 %v1245, %v1246
    %v1248 = vrot.slane %v1247, 2
    %v1249 = vmax.f32 %v1247, %v1248
    %v1250 = vrot.slane %v1249, 1
    %v1251 = vmax.f32 %v1249, %v1250
    %v1252 = vsel %vm1125, %v997, -inf
    %v1253 = vrot.slane %v1252, 4
    %v1254 = vmax.f32 %v1252, %v1253
    %v1255 = vrot.slane %v1254, 2
    %v1256 = vmax.f32 %v1254, %v1255
    %v1257 = vrot.slane %v1256, 1
    %v1258 = vmax.f32 %v1256, %v1257
    %v1259 = vsel %vm1125, %v999, -inf
    %v1260 = vrot.slane %v1259, 4
    %v1261 = vmax.f32 %v1259, %v1260
    %v1262 = vrot.slane %v1261, 2
    %v1263 = vmax.f32 %v1261, %v1262
    %v1264 = vrot.slane %v1263, 1
    %v1265 = vmax.f32 %v1263, %v1264
    %v1266 = vsel %vm1125, %v1007, -inf
    %v1267 = vrot.slane %v1266, 4
    %v1268 = vmax.f32 %v1266, %v1267
    %v1269 = vrot.slane %v1268, 2
    %v1270 = vmax.f32 %v1268, %v1269
    %v1271 = vrot.slane %v1270, 1
    %v1272 = vmax.f32 %v1270, %v1271
    %v1273 = vsel %vm1125, %v1015, -inf
    %v1274 = vrot.slane %v1273, 4
    %v1275 = vmax.f32 %v1273, %v1274
    %v1276 = vrot.slane %v1275, 2
    %v1277 = vmax.f32 %v1275, %v1276
    %v1278 = vrot.slane %v1277, 1
    %v1279 = vmax.f32 %v1277, %v1278
    %v1280 = vsel %vm1125, %v1014, -inf
    %v1281 = vrot.slane %v1280, 4
    %v1282 = vmax.f32 %v1280, %v1281
    %v1283 = vrot.slane %v1282, 2
    %v1284 = vmax.f32 %v1282, %v1283
    %v1285 = vrot.slane %v1284, 1
    %v1286 = vmax.f32 %v1284, %v1285
    %v1287 = vsel %vm1125, %v1016, -inf
    %v1288 = vrot.slane %v1287, 4
    %v1289 = vmax.f32 %v1287, %v1288
    %v1290 = vrot.slane %v1289, 2
    %v1291 = vmax.f32 %v1289, %v1290
    %v1292 = vrot.slane %v1291, 1
    %v1293 = vmax.f32 %v1291, %v1292
    %v1294 = vsel %vm1125, %v1024, -inf
    %v1295 = vrot.slane %v1294, 4
    %v1296 = vmax.f32 %v1294, %v1295
    %v1297 = vrot.slane %v1296, 2
    %v1298 = vmax.f32 %v1296, %v1297
    %v1299 = vrot.slane %v1298, 1
    %v1300 = vmax.f32 %v1298, %v1299
    %v1301 = vsel %vm1125, %v1032, -inf
    %v1302 = vrot.slane %v1301, 4
    %v1303 = vmax.f32 %v1301, %v1302
    %v1304 = vrot.slane %v1303, 2
    %v1305 = vmax.f32 %v1303, %v1304
    %v1306 = vrot.slane %v1305, 1
    %v1307 = vmax.f32 %v1305, %v1306
    %v1308 = vsel %vm1125, %v1031, -inf
    %v1309 = vrot.slane %v1308, 4
    %v1310 = vmax.f32 %v1308, %v1309
    %v1311 = vrot.slane %v1310, 2
    %v1312 = vmax.f32 %v1310, %v1311
    %v1313 = vrot.slane %v1312, 1
    %v1314 = vmax.f32 %v1312, %v1313
    %v1315 = vsel %vm1125, %v1033, -inf
    %v1316 = vrot.slane %v1315, 4
    %v1317 = vmax.f32 %v1315, %v1316
    %v1318 = vrot.slane %v1317, 2
    %v1319 = vmax.f32 %v1317, %v1318
    %v1320 = vrot.slane %v1319, 1
    %v1321 = vmax.f32 %v1319, %v1320
    %v1322 = vsel %vm1125, %v1041, -inf
    %v1323 = vrot.slane %v1322, 4
    %v1324 = vmax.f32 %v1322, %v1323
    %v1325 = vrot.slane %v1324, 2
    %v1326 = vmax.f32 %v1324, %v1325
    %v1327 = vrot.slane %v1326, 1
    %v1328 = vmax.f32 %v1326, %v1327
    %v1329 = vsel %vm1125, %v1049, -inf
    %v1330 = vrot.slane %v1329, 4
    %v1331 = vmax.f32 %v1329, %v1330
    %v1332 = vrot.slane %v1331, 2
    %v1333 = vmax.f32 %v1331, %v1332
    %v1334 = vrot.slane %v1333, 1
    %v1335 = vmax.f32 %v1333, %v1334
    %v1336 = vsel %vm1125, %v1048, -inf
    %v1337 = vrot.slane %v1336, 4
    %v1338 = vmax.f32 %v1336, %v1337
    %v1339 = vrot.slane %v1338, 2
    %v1340 = vmax.f32 %v1338, %v1339
    %v1341 = vrot.slane %v1340, 1
    %v1342 = vmax.f32 %v1340, %v1341
    %v1343 = vsel %vm1125, %v1050, -inf
    %v1344 = vrot.slane %v1343, 4
    %v1345 = vmax.f32 %v1343, %v1344
    %v1346 = vrot.slane %v1345, 2
    %v1347 = vmax.f32 %v1345, %v1346
    %v1348 = vrot.slane %v1347, 1
    %v1349 = vmax.f32 %v1347, %v1348
    %v1350 = vsel %vm1125, %v1058, -inf
    %v1351 = vrot.slane %v1350, 4
    %v1352 = vmax.f32 %v1350, %v1351
    %v1353 = vrot.slane %v1352, 2
    %v1354 = vmax.f32 %v1352, %v1353
    %v1355 = vrot.slane %v1354, 1
    %v1356 = vmax.f32 %v1354, %v1355
    %v1357 = vsel %vm1125, %v1066, -inf
    %v1358 = vrot.slane %v1357, 4
    %v1359 = vmax.f32 %v1357, %v1358
    %v1360 = vrot.slane %v1359, 2
    %v1361 = vmax.f32 %v1359, %v1360
    %v1362 = vrot.slane %v1361, 1
    %v1363 = vmax.f32 %v1361, %v1362
    %v1364 = vsel %vm1125, %v1065, -inf
    %v1365 = vrot.slane %v1364, 4
    %v1366 = vmax.f32 %v1364, %v1365
    %v1367 = vrot.slane %v1366, 2
    %v1368 = vmax.f32 %v1366, %v1367
    %v1369 = vrot.slane %v1368, 1
    %v1370 = vmax.f32 %v1368, %v1369
    %v1371 = vsel %vm1125, %v1067, -inf
    %v1372 = vrot.slane %v1371, 4
    %v1373 = vmax.f32 %v1371, %v1372
    %v1374 = vrot.slane %v1373, 2
    %v1375 = vmax.f32 %v1373, %v1374
    %v1376 = vrot.slane %v1375, 1
    %v1377 = vmax.f32 %v1375, %v1376
    %v1378 = vsel %vm1125, %v1075, -inf
    %v1379 = vrot.slane %v1378, 4
    %v1380 = vmax.f32 %v1378, %v1379
    %v1381 = vrot.slane %v1380, 2
    %v1382 = vmax.f32 %v1380, %v1381
    %v1383 = vrot.slane %v1382, 1
    %v1384 = vmax.f32 %v1382, %v1383
    %v1385 = vsel %vm1125, %v1083, -inf
    %v1386 = vrot.slane %v1385, 4
    %v1387 = vmax.f32 %v1385, %v1386
    %v1388 = vrot.slane %v1387, 2
    %v1389 = vmax.f32 %v1387, %v1388
    %v1390 = vrot.slane %v1389, 1
    %v1391 = vmax.f32 %v1389, %v1390
    %v1392 = vsel %vm1125, %v1082, -inf
    %v1393 = vrot.slane %v1392, 4
    %v1394 = vmax.f32 %v1392, %v1393
    %v1395 = vrot.slane %v1394, 2
    %v1396 = vmax.f32 %v1394, %v1395
    %v1397 = vrot.slane %v1396, 1
    %v1398 = vmax.f32 %v1396, %v1397
    %v1399 = vsel %vm1125, %v1084, -inf
    %v1400 = vrot.slane %v1399, 4
    %v1401 = vmax.f32 %v1399, %v1400
    %v1402 = vrot.slane %v1401, 2
    %v1403 = vmax.f32 %v1401, %v1402
    %v1404 = vrot.slane %v1403, 1
    %v1405 = vmax.f32 %v1403, %v1404
    %v1406 = vpack.c.bf16 %v1132, %v1132
    %v1407 = vpack.c.bf16 %v1139, %v1139
    %v1408 = vpack.c.bf16 %v1146, %v1146
    %v1409 = vpack.c.bf16 %v1153, %v1153
    %v1410 = vpack.c.bf16 %v1160, %v1160
    %v1411 = vpack.c.bf16 %v1167, %v1167
    %v1412 = vpack.c.bf16 %v1174, %v1174
    %v1413 = vpack.c.bf16 %v1181, %v1181
    %v1414 = vpack.c.bf16 %v1188, %v1188
    %v1415 = vpack.c.bf16 %v1195, %v1195
    %v1416 = vpack.c.bf16 %v1202, %v1202
    %v1417 = vpack.c.bf16 %v1209, %v1209
    %v1418 = vpack.c.bf16 %v1216, %v1216
    %v1419 = vpack.c.bf16 %v1223, %v1223
    %v1420 = vpack.c.bf16 %v1230, %v1230
    %v1421 = vpack.c.bf16 %v1237, %v1237
    %v1422 = vpack.c.bf16 %v1244, %v1244
    %v1423 = vpack.c.bf16 %v1251, %v1251
    %v1424 = vpack.c.bf16 %v1258, %v1258
    %v1425 = vpack.c.bf16 %v1265, %v1265
    %v1426 = vpack.c.bf16 %v1272, %v1272
    %v1427 = vpack.c.bf16 %v1279, %v1279
    %v1428 = vpack.c.bf16 %v1286, %v1286
    %v1429 = vpack.c.bf16 %v1293, %v1293
    %v1430 = vpack.c.bf16 %v1300, %v1300
    %v1431 = vpack.c.bf16 %v1307, %v1307
    %v1432 = vpack.c.bf16 %v1314, %v1314
    %v1433 = vpack.c.bf16 %v1321, %v1321
    %v1434 = vpack.c.bf16 %v1328, %v1328
    %v1435 = vpack.c.bf16 %v1335, %v1335
    %v1436 = vpack.c.bf16 %v1342, %v1342
    %v1437 = vpack.c.bf16 %v1349, %v1349
    %v1438 = vpack.c.bf16 %v1356, %v1356
    %v1439 = vpack.c.bf16 %v1363, %v1363
    %v1440 = vpack.c.bf16 %v1370, %v1370
    %v1441 = vpack.c.bf16 %v1377, %v1377
    %v1442 = vpack.c.bf16 %v1384, %v1384
    %v1443 = vpack.c.bf16 %v1391, %v1391
    %v1444 = vpack.c.bf16 %v1398, %v1398
    %v1445 = vpack.c.bf16 %v1405, %v1405
    %v1482 = vunpack.c.l.b16 %v1406
    %v1483 = vunpack.c.l.b16 %v1407
    %v1484 = vunpack.c.l.b16 %v1408
    %v1485 = vunpack.c.l.b16 %v1409
    %v1486 = vunpack.c.l.b16 %v1410
    %v1487 = vunpack.c.l.b16 %v1411
    %v1488 = vunpack.c.l.b16 %v1412
    %v1489 = vunpack.c.l.b16 %v1413
    %v1490 = vunpack.c.l.b16 %v1414
    %v1491 = vunpack.c.l.b16 %v1415
    %v1492 = vunpack.c.l.b16 %v1416
    %v1493 = vunpack.c.l.b16 %v1417
    %v1494 = vunpack.c.l.b16 %v1418
    %v1495 = vunpack.c.l.b16 %v1419
    %v1496 = vunpack.c.l.b16 %v1420
    %v1497 = vunpack.c.l.b16 %v1421
    %v1498 = vunpack.c.l.b16 %v1422
    %v1499 = vunpack.c.l.b16 %v1423
    %v1500 = vunpack.c.l.b16 %v1426
    %v1501 = vunpack.c.l.b16 %v1427
    %v1502 = vunpack.c.l.b16 %v1428
    %v1503 = vunpack.c.l.b16 %v1429
    %v1504 = vunpack.c.l.b16 %v1430
    %v1505 = vunpack.c.l.b16 %v1431
    %v1506 = vunpack.c.l.b16 %v1432
    %v1507 = vunpack.c.l.b16 %v1433
    %v1508 = vunpack.c.l.b16 %v1434
    %v1509 = vunpack.c.l.b16 %v1435
    %v1510 = vunpack.c.l.b16 %v1436
    %v1511 = vunpack.c.l.b16 %v1437
    %v1512 = vunpack.c.l.b16 %v1438
    %v1513 = vunpack.c.l.b16 %v1439
    %v1514 = vunpack.c.l.b16 %v1440
    %v1515 = vunpack.c.l.b16 %v1441
    %v1516 = vunpack.c.l.b16 %v1442
    %v1517 = vunpack.c.l.b16 %v1443
    %vm1518 = vcmask 1041409
    %v1519 = vsel %vm1518, %v1483, %v1482
    %vm1520 = vcmask 1042434
    %v1521 = vsel %vm1520, %v1484, %v1519
    %vm1522 = vcmask 1043459
    %v1523 = vsel %vm1522, %v1485, %v1521
    %vm1524 = vcmask 1044484
    %v1525 = vsel %vm1524, %v1486, %v1523
    %vm1526 = vcmask 1045509
    %v1527 = vsel %vm1526, %v1487, %v1525
    %vm1528 = vcmask 1046534
    %v1529 = vsel %vm1528, %v1488, %v1527
    %vm1530 = vcmask 1047559
    %v1531 = vsel %vm1530, %v1489, %v1529
    %v1532 = vsel %vm1518, %v1491, %v1490
    %v1533 = vsel %vm1520, %v1492, %v1532
    %v1534 = vsel %vm1522, %v1493, %v1533
    %v1535 = vsel %vm1524, %v1494, %v1534
    %v1536 = vsel %vm1526, %v1495, %v1535
    %v1537 = vsel %vm1528, %v1496, %v1536
    %v1538 = vsel %vm1530, %v1497, %v1537
    %v1539 = vsel %vm1518, %v1499, %v1498
    %v1540 = vsel %vm1518, %v1501, %v1500
    %v1541 = vsel %vm1520, %v1502, %v1540
    %v1542 = vsel %vm1522, %v1503, %v1541
    %v1543 = vsel %vm1524, %v1504, %v1542
    %v1544 = vsel %vm1526, %v1505, %v1543
    %v1545 = vsel %vm1528, %v1506, %v1544
    %v1546 = vsel %vm1530, %v1507, %v1545
    %v1547 = vsel %vm1518, %v1509, %v1508
    %v1548 = vsel %vm1520, %v1510, %v1547
    %v1549 = vsel %vm1522, %v1511, %v1548
    %v1550 = vsel %vm1524, %v1512, %v1549
    %v1551 = vsel %vm1526, %v1513, %v1550
    %v1552 = vsel %vm1528, %v1514, %v1551
    %v1553 = vsel %vm1530, %v1515, %v1552
    %v1554 = vsel %vm1518, %v1517, %v1516
    %v1555 = vpack.c.b16 %v1538, %v1531
    %v1556 = vpack.c.b16 %v1539, %v1539
    %v1557 = vpack.c.b16 %v1553, %v1546
    %v1558 = vpack.c.b16 %v1554, %v1554
    %v1561 = vunpack.c.l.b16 %v1424
    %v1562 = vunpack.c.l.b16 %v1444
    %v1563 = vsel %vm1518, %v1484, %v1483
    %v1564 = vsel %vm1520, %v1485, %v1563
    %v1565 = vsel %vm1522, %v1486, %v1564
    %v1566 = vsel %vm1524, %v1487, %v1565
    %v1567 = vsel %vm1526, %v1488, %v1566
    %v1568 = vsel %vm1528, %v1489, %v1567
    %v1569 = vsel %vm1530, %v1490, %v1568
    %v1570 = vsel %vm1518, %v1492, %v1491
    %v1571 = vsel %vm1520, %v1493, %v1570
    %v1572 = vsel %vm1522, %v1494, %v1571
    %v1573 = vsel %vm1524, %v1495, %v1572
    %v1574 = vsel %vm1526, %v1496, %v1573
    %v1575 = vsel %vm1528, %v1497, %v1574
    %v1576 = vsel %vm1530, %v1498, %v1575
    %v1577 = vsel %vm1518, %v1561, %v1499
    %v1578 = vsel %vm1518, %v1502, %v1501
    %v1579 = vsel %vm1520, %v1503, %v1578
    %v1580 = vsel %vm1522, %v1504, %v1579
    %v1581 = vsel %vm1524, %v1505, %v1580
    %v1582 = vsel %vm1526, %v1506, %v1581
    %v1583 = vsel %vm1528, %v1507, %v1582
    %v1584 = vsel %vm1530, %v1508, %v1583
    %v1585 = vsel %vm1518, %v1510, %v1509
    %v1586 = vsel %vm1520, %v1511, %v1585
    %v1587 = vsel %vm1522, %v1512, %v1586
    %v1588 = vsel %vm1524, %v1513, %v1587
    %v1589 = vsel %vm1526, %v1514, %v1588
    %v1590 = vsel %vm1528, %v1515, %v1589
    %v1591 = vsel %vm1530, %v1516, %v1590
    %v1592 = vsel %vm1518, %v1562, %v1517
    %v1593 = vpack.c.b16 %v1576, %v1569
    %v1594 = vpack.c.b16 %v1577, %v1577
    %v1595 = vpack.c.b16 %v1591, %v1584
    %v1596 = vpack.c.b16 %v1592, %v1592
    %1597 = vrot.lane.b32.xlu0 %v1593, 32
    %v1598 = vpop.permute.xlu0 %1597
    %1599 = vrot.lane.b32.xlu0 %v1594, 32
    %v1600 = vpop.permute.xlu0 %1599
    %1601 = vrot.lane.b32.xlu0 %v1595, 32
    %v1602 = vpop.permute.xlu0 %1601
    %1603 = vrot.lane.b32.xlu0 %v1596, 32
    %v1604 = vpop.permute.xlu0 %1603
    %v1607 = vunpack.c.l.b16 %v1425
    %v1608 = vunpack.c.l.b16 %v1445
    %v1609 = vsel %vm1518, %v1485, %v1484
    %v1610 = vsel %vm1520, %v1486, %v1609
    %v1611 = vsel %vm1522, %v1487, %v1610
    %v1612 = vsel %vm1524, %v1488, %v1611
    %v1613 = vsel %vm1526, %v1489, %v1612
    %v1614 = vsel %vm1528, %v1490, %v1613
    %v1615 = vsel %vm1530, %v1491, %v1614
    %v1616 = vsel %vm1518, %v1493, %v1492
    %v1617 = vsel %vm1520, %v1494, %v1616
    %v1618 = vsel %vm1522, %v1495, %v1617
    %v1619 = vsel %vm1524, %v1496, %v1618
    %v1620 = vsel %vm1526, %v1497, %v1619
    %v1621 = vsel %vm1528, %v1498, %v1620
    %v1622 = vsel %vm1530, %v1499, %v1621
    %v1623 = vsel %vm1518, %v1607, %v1561
    %v1624 = vsel %vm1518, %v1503, %v1502
    %v1625 = vsel %vm1520, %v1504, %v1624
    %v1626 = vsel %vm1522, %v1505, %v1625
    %v1627 = vsel %vm1524, %v1506, %v1626
    %v1628 = vsel %vm1526, %v1507, %v1627
    %v1629 = vsel %vm1528, %v1508, %v1628
    %v1630 = vsel %vm1530, %v1509, %v1629
    %v1631 = vsel %vm1518, %v1511, %v1510
    %v1632 = vsel %vm1520, %v1512, %v1631
    %v1633 = vsel %vm1522, %v1513, %v1632
    %v1634 = vsel %vm1524, %v1514, %v1633
    %v1635 = vsel %vm1526, %v1515, %v1634
    %v1636 = vsel %vm1528, %v1516, %v1635
    %v1637 = vsel %vm1530, %v1517, %v1636
    %v1638 = vsel %vm1518, %v1608, %v1562
    %v1639 = vpack.c.b16 %v1622, %v1615
    %v1640 = vpack.c.b16 %v1623, %v1623
    %v1641 = vpack.c.b16 %v1637, %v1630
    %v1642 = vpack.c.b16 %v1638, %v1638
    %1643 = vrot.lane.b32.xlu0 %v1639, 64
    %v1644 = vpop.permute.xlu0 %1643
    %1645 = vrot.lane.b32.xlu0 %v1640, 64
    %v1646 = vpop.permute.xlu0 %1645
    %1647 = vrot.lane.b32.xlu0 %v1641, 64
    %v1648 = vpop.permute.xlu0 %1647
    %1649 = vrot.lane.b32.xlu0 %v1642, 64
    %v1650 = vpop.permute.xlu0 %1649
    %v1653 = vsel %vm726, %v1555, %v1598
    %v1656 = vsel %vm726, %v1556, %v1600
    %v1659 = vsel %vm726, %v1557, %v1602
    %v1662 = vsel %vm726, %v1558, %v1604
    %vm1663 = vcmask 523264
    %v1665 = vsel %vm1663, %v1653, %v1644
    %v1667 = vsel %vm1663, %v1656, %v1646
    %v1669 = vsel %vm1663, %v1659, %v1648
    %v1671 = vsel %vm1663, %v1662, %v1650
    %v1676 = vcombine.high %v1665, %v1665
    %v1678 = vunpack.c.l.s4 1966171168
    %v1679 = vunpack.c.0.s8 %v1678
    %v1680 = vlaneseq
    %v1681 = vshrl.u32 %v1680, 7
    %v1682 = vsub.s32 %v1679, %v1681
    %v1683 = vrot.slane %v1665, %v1682
    %v1685 = vunpack.c.l.s4 1966171168
    %v1686 = vunpack.c.0.s8 %v1685
    %v1687 = vlaneseq
    %v1688 = vshrl.u32 %v1687, 7
    %v1689 = vsub.s32 %v1686, %v1688
    %v1690 = vrot.slane %v1676, %v1689
    %v1691 = vcombine.high %v1683, %v1683
    %v1692 = vcombine.high %v1690, %v1690
    %v1694 = vunpack.c.l.s4 1966171168
    %v1695 = vunpack.c.0.s8 %v1694
    %v1696 = vlaneseq
    %v1697 = vshrl.u32 %v1696, 7
    %v1698 = vsub.s32 %v1695, %v1697
    %v1699 = vrot.slane %v1683, %v1698
    %v1701 = vunpack.c.l.s4 1966171168
    %v1702 = vunpack.c.0.s8 %v1701
    %v1703 = vlaneseq
    %v1704 = vshrl.u32 %v1703, 7
    %v1705 = vsub.s32 %v1702, %v1704
    %v1706 = vrot.slane %v1690, %v1705
    %v1708 = vunpack.c.l.s4 1966171168
    %v1709 = vunpack.c.0.s8 %v1708
    %v1710 = vlaneseq
    %v1711 = vshrl.u32 %v1710, 7
    %v1712 = vsub.s32 %v1709, %v1711
    %v1713 = vrot.slane %v1691, %v1712
    %v1715 = vunpack.c.l.s4 1966171168
    %v1716 = vunpack.c.0.s8 %v1715
    %v1717 = vlaneseq
    %v1718 = vshrl.u32 %v1717, 7
    %v1719 = vsub.s32 %v1716, %v1718
    %v1720 = vrot.slane %v1692, %v1719
    %v1721 = vcombine.high %v1699, %v1699
    %v1722 = vcombine.high %v1706, %v1706
    %v1723 = vcombine.high %v1713, %v1713
    %v1724 = vcombine.high %v1720, %v1720
    %v1726 = vunpack.c.l.s4 1966171168
    %v1727 = vunpack.c.0.s8 %v1726
    %v1728 = vlaneseq
    %v1729 = vshrl.u32 %v1728, 7
    %v1730 = vsub.s32 %v1727, %v1729
    %v1731 = vrot.slane %v1667, %v1730
    %v1733 = vunpack.c.l.s4 1966171168
    %v1734 = vunpack.c.0.s8 %v1733
    %v1735 = vlaneseq
    %v1736 = vshrl.u32 %v1735, 7
    %v1737 = vsub.s32 %v1734, %v1736
    %v1738 = vrot.slane %v1731, %v1737
    %v1739 = vcombine.high %v1669, %v1669
    %v1741 = vunpack.c.l.s4 1966171168
    %v1742 = vunpack.c.0.s8 %v1741
    %v1743 = vlaneseq
    %v1744 = vshrl.u32 %v1743, 7
    %v1745 = vsub.s32 %v1742, %v1744
    %v1746 = vrot.slane %v1669, %v1745
    %v1748 = vunpack.c.l.s4 1966171168
    %v1749 = vunpack.c.0.s8 %v1748
    %v1750 = vlaneseq
    %v1751 = vshrl.u32 %v1750, 7
    %v1752 = vsub.s32 %v1749, %v1751
    %v1753 = vrot.slane %v1739, %v1752
    %v1754 = vcombine.high %v1746, %v1746
    %v1755 = vcombine.high %v1753, %v1753
    %v1757 = vunpack.c.l.s4 1966171168
    %v1758 = vunpack.c.0.s8 %v1757
    %v1759 = vlaneseq
    %v1760 = vshrl.u32 %v1759, 7
    %v1761 = vsub.s32 %v1758, %v1760
    %v1762 = vrot.slane %v1746, %v1761
    %v1764 = vunpack.c.l.s4 1966171168
    %v1765 = vunpack.c.0.s8 %v1764
    %v1766 = vlaneseq
    %v1767 = vshrl.u32 %v1766, 7
    %v1768 = vsub.s32 %v1765, %v1767
    %v1769 = vrot.slane %v1753, %v1768
    %v1771 = vunpack.c.l.s4 1966171168
    %v1772 = vunpack.c.0.s8 %v1771
    %v1773 = vlaneseq
    %v1774 = vshrl.u32 %v1773, 7
    %v1775 = vsub.s32 %v1772, %v1774
    %v1776 = vrot.slane %v1754, %v1775
    %v1778 = vunpack.c.l.s4 1966171168
    %v1779 = vunpack.c.0.s8 %v1778
    %v1780 = vlaneseq
    %v1781 = vshrl.u32 %v1780, 7
    %v1782 = vsub.s32 %v1779, %v1781
    %v1783 = vrot.slane %v1755, %v1782
    %v1784 = vcombine.high %v1762, %v1762
    %v1785 = vcombine.high %v1769, %v1769
    %v1786 = vcombine.high %v1776, %v1776
    %v1787 = vcombine.high %v1783, %v1783
    %v1789 = vunpack.c.l.s4 1966171168
    %v1790 = vunpack.c.0.s8 %v1789
    %v1791 = vlaneseq
    %v1792 = vshrl.u32 %v1791, 7
    %v1793 = vsub.s32 %v1790, %v1792
    %v1794 = vrot.slane %v1671, %v1793
    %v1796 = vunpack.c.l.s4 1966171168
    %v1797 = vunpack.c.0.s8 %v1796
    %v1798 = vlaneseq
    %v1799 = vshrl.u32 %v1798, 7
    %v1800 = vsub.s32 %v1797, %v1799
    %v1801 = vrot.slane %v1794, %v1800
    %v1802 = vld [vmem:[#allocation2 + $0x20] sm:$0xf]
    %v1803 = vld [vmem:[#allocation2 + $0x24] sm:$0xf]
    %v1804 = vld [vmem:[#allocation2 + $0x28] sm:$0xf]
    %v1805 = vld [vmem:[#allocation2 + $0x2c] sm:$0xf]
    %v1806 = vld [vmem:[#allocation2 + $0x30] sm:$0xf]
    %v1807 = vld [vmem:[#allocation2 + $0x34] sm:$0xf]
    %v1808 = vld [vmem:[#allocation2 + $0x38] sm:$0xf]
    %v1809 = vld [vmem:[#allocation2 + $0x3c] sm:$0xf]
    %v1810 = vld [vmem:[#allocation2 + $0x40] sm:$0xf]
    %v1811 = vld [vmem:[#allocation2 + $0x44] sm:$0xf]
    %v1812 = vld [vmem:[#allocation2 + $0x48] sm:$0xf]
    %v1813 = vld [vmem:[#allocation2 + $0x4c] sm:$0xf]
    %v1814 = vcombine.low %v1699, %v1713
    %v1815 = vcombine.low %v1721, %v1723
    %v1816 = vcombine.low %v1706, %v1720
    %v1817 = vcombine.low %v1722, %v1724
    %v1819 = vunpack.c.l.s4 1966171168
    %v1820 = vunpack.c.0.s8 %v1819
    %v1821 = vlaneseq
    %v1822 = vshrl.u32 %v1821, 7
    %v1823 = vsub.s32 %v1820, %v1822
    %v1824 = vrot.slane %v1814, %v1823
    %v1826 = vunpack.c.l.s4 1966171168
    %v1827 = vunpack.c.0.s8 %v1826
    %v1828 = vlaneseq
    %v1829 = vshrl.u32 %v1828, 7
    %v1830 = vsub.s32 %v1827, %v1829
    %v1831 = vrot.slane %v1815, %v1830
    %v1833 = vunpack.c.l.s4 1966171168
    %v1834 = vunpack.c.0.s8 %v1833
    %v1835 = vlaneseq
    %v1836 = vshrl.u32 %v1835, 7
    %v1837 = vsub.s32 %v1834, %v1836
    %v1838 = vrot.slane %v1816, %v1837
    %v1840 = vunpack.c.l.s4 1966171168
    %v1841 = vunpack.c.0.s8 %v1840
    %v1842 = vlaneseq
    %v1843 = vshrl.u32 %v1842, 7
    %v1844 = vsub.s32 %v1841, %v1843
    %v1845 = vrot.slane %v1817, %v1844
    %v1846 = vcombine.low %v1824, %v1831
    %v1847 = vcombine.low %v1838, %v1845
    %v1849 = vunpack.c.l.s4 1966171168
    %v1850 = vunpack.c.0.s8 %v1849
    %v1851 = vlaneseq
    %v1852 = vshrl.u32 %v1851, 7
    %v1853 = vsub.s32 %v1850, %v1852
    %v1854 = vrot.slane %v1846, %v1853
    %v1856 = vunpack.c.l.s4 1966171168
    %v1857 = vunpack.c.0.s8 %v1856
    %v1858 = vlaneseq
    %v1859 = vshrl.u32 %v1858, 7
    %v1860 = vsub.s32 %v1857, %v1859
    %v1861 = vrot.slane %v1847, %v1860
    %v1862 = vcombine.low %v1854, %v1861
    %v1863 = vcombine.low %v1738, %v1762
    %v1864 = vcombine.low %v1776, %v1784
    %v1865 = vcombine.low %v1786, %v1769
    %v1866 = vcombine.low %v1783, %v1785
    %v1868 = vunpack.c.l.s4 1966171168
    %v1869 = vunpack.c.0.s8 %v1868
    %v1870 = vlaneseq
    %v1871 = vshrl.u32 %v1870, 7
    %v1872 = vsub.s32 %v1869, %v1871
    %v1873 = vrot.slane %v1863, %v1872
    %v1875 = vunpack.c.l.s4 1966171168
    %v1876 = vunpack.c.0.s8 %v1875
    %v1877 = vlaneseq
    %v1878 = vshrl.u32 %v1877, 7
    %v1879 = vsub.s32 %v1876, %v1878
    %v1880 = vrot.slane %v1864, %v1879
    %v1882 = vunpack.c.l.s4 1966171168
    %v1883 = vunpack.c.0.s8 %v1882
    %v1884 = vlaneseq
    %v1885 = vshrl.u32 %v1884, 7
    %v1886 = vsub.s32 %v1883, %v1885
    %v1887 = vrot.slane %v1865, %v1886
    %v1889 = vunpack.c.l.s4 1966171168
    %v1890 = vunpack.c.0.s8 %v1889
    %v1891 = vlaneseq
    %v1892 = vshrl.u32 %v1891, 7
    %v1893 = vsub.s32 %v1890, %v1892
    %v1894 = vrot.slane %v1866, %v1893
    %v1895 = vcombine.low %v1873, %v1880
    %v1896 = vcombine.low %v1887, %v1894
    %v1898 = vunpack.c.l.s4 1966171168
    %v1899 = vunpack.c.0.s8 %v1898
    %v1900 = vlaneseq
    %v1901 = vshrl.u32 %v1900, 7
    %v1902 = vsub.s32 %v1899, %v1901
    %v1903 = vrot.slane %v1895, %v1902
    %v1905 = vunpack.c.l.s4 1966171168
    %v1906 = vunpack.c.0.s8 %v1905
    %v1907 = vlaneseq
    %v1908 = vshrl.u32 %v1907, 7
    %v1909 = vsub.s32 %v1906, %v1908
    %v1910 = vrot.slane %v1896, %v1909
    %v1911 = vcombine.low %v1903, %v1910
    %v1912 = vcombine.low %v1787, %v1801
    %v1914 = vunpack.c.l.s4 1966171168
    %v1915 = vunpack.c.0.s8 %v1914
    %v1916 = vlaneseq
    %v1917 = vshrl.u32 %v1916, 7
    %v1918 = vsub.s32 %v1915, %v1917
    %v1919 = vrot.slane %v1912, %v1918
    %v1921 = vunpack.c.l.s4 1966171168
    %v1922 = vunpack.c.0.s8 %v1921
    %v1923 = vlaneseq
    %v1924 = vshrl.u32 %v1923, 7
    %v1925 = vsub.s32 %v1922, %v1924
    %v1926 = vrot.slane %v1919, %v1925
    %v1939 = vunpack.c.l.b16 %v1802
    %v1940 = vunpack.c.l.b16 %v1803
    %v1941 = vunpack.c.l.b16 %v1804
    %v1942 = vunpack.c.l.b16 %v1805
    %v1943 = vunpack.c.l.b16 %v1806
    %v1944 = vunpack.c.l.b16 %v1807
    %v1945 = vunpack.c.l.b16 %v1808
    %v1946 = vunpack.c.l.b16 %v1809
    %v1947 = vunpack.c.l.b16 %v1810
    %v1948 = vunpack.c.l.b16 %v1811
    %v1949 = vunpack.c.l.b16 %v1812
    %v1950 = vunpack.c.l.b16 %v1813
    %v1951 = vpack.c.b16 %v1940, %v1939
    %v1952 = vpack.c.b16 %v1942, %v1941
    %v1953 = vpack.c.b16 %v1944, %v1943
    %v1954 = vpack.c.b16 %v1946, %v1945
    %v1955 = vpack.c.b16 %v1948, %v1947
    %v1956 = vpack.c.b16 %v1950, %v1949
    %vm1963 = vcmask 785408
    %v1965 = vsel %vm1963, %v1862, 0
    %v1968 = vsel %vm1963, %v1911, 0
    %v1971 = vsel %vm1963, %v1926, 0
    %1973 = vmatprep.subr.bf16.mxu0 0
    %1974 = vmatpush1.bf16.msra.mxu0 %v1951
    %1975 = vmatprep.subr.bf16.mxu0 0
    %1976 = vmatpush1.bf16.msra.mxu0 %v1952
    %1977 = vmatprep.subr.bf16.mxu0 0
    %1978 = vmatpush1.bf16.msra.mxu0 %v1953
    %1979 = vmatprep.subr.bf16.mxu0 0
    %1980 = vmatpush1.bf16.msra.mxu0 %v1954
    %1981 = vmatprep.subr.bf16.mxu0 0
    %1982 = vmatpush1.bf16.msra.mxu0 %v1955
    %1983 = vmatprep.subr.bf16.mxu0 0
    %1984 = vmatpush1.bf16.msra.mxu0 %v1956
    %1985 = vmatprep.subr.bf16.mxu0 0
    %1986 = vmatpush1.bf16.msra.mxu0 0
    %1987 = vmatprep.subr.bf16.mxu0 0
    %1988 = vmatpush1.bf16.msra.mxu0 0
    %1989 = vmatprep.subr.bf16.mxu0 0
    %1990 = vmatpush1.bf16.msra.mxu0 0
    %1991 = vmatprep.subr.bf16.mxu0 0
    %1992 = vmatpush1.bf16.msra.mxu0 0
    %1993 = vmatprep.subr.bf16.mxu0 0
    %1994 = vmatpush1.bf16.msra.mxu0 0
    %1995 = vmatprep.subr.bf16.mxu0 0
    %1996 = vmatpush1.bf16.msra.mxu0 0
    %1997 = vmatprep.subr.bf16.mxu0 0
    %1998 = vmatpush1.bf16.msra.mxu0 0
    %1999 = vmatprep.subr.bf16.mxu0 0
    %2000 = vmatpush1.bf16.msra.mxu0 0
    %2001 = vmatprep.subr.bf16.mxu0 0
    %2002 = vmatpush1.bf16.msra.mxu0 0
    %2003 = vmatprep.subr.bf16.mxu0 0
    %2004 = vmatpush1.bf16.msra.mxu0 0
    %2005 = vmatprep.mubr.bf16.mxu0 0
    %2006 = vmatmul.mubr.bf16.gmra.mrb[0].mxu0 %v1965
    %v2007 = vpop.f32.mrb[0].mxu0
    %v2008 = vadd.f32 0.0, %v2007
    %v2009 = vpop.f32.mrb[0].mxu0
    %v2010 = vpop.f32.mrb[0].mxu0
    %v2011 = vadd.f32 0.0, %v2010
    %v2012 = vpop.f32.mrb[0].mxu0
    %2013 = vmatprep.mubr.bf16.mxu0 0
    %2014 = vmatmul.mubr.bf16.gmra.mrb[0].mxu0 %v1968
    %v2015 = vpop.f32.mrb[0].mxu0
    %v2016 = vadd.f32 0.0, %v2015
    %v2017 = vpop.f32.mrb[0].mxu0
    %v2018 = vpop.f32.mrb[0].mxu0
    %v2019 = vadd.f32 0.0, %v2018
    %v2020 = vpop.f32.mrb[0].mxu0
    %2021 = vmatprep.mubr.bf16.mxu0 0
    %2022 = vmatmul.mubr.bf16.gmra.mrb[0].mxu0 %v1971
    %v2023 = vpop.f32.mrb[0].mxu0
    %v2024 = vadd.f32 0.0, %v2023
    %v2025 = vpop.f32.mrb[0].mxu0
    %v2026 = vpop.f32.mrb[0].mxu0
    %v2027 = vpop.f32.mrb[0].mxu0
    %2028 = vdwg.mxu0
    %v2029 = vld [vmem:[%s3 + $0x4] ss:$0 sm:$0xff]
    %v2030 = vld [vmem:[%s3 + $0x5] ss:$0 sm:$0xff]
    %v2031 = vmul.f32 %v2008, %v2029
    %v2032 = vmul.f32 %v2011, %v2029
    %v2033 = vmul.f32 %v2016, %v2029
    %v2034 = vmul.f32 %v2019, %v2029
    %v2035 = vmul.f32 %v2024, %v2029
    %v2036 = vadd.f32 %v2031, %v2030
    %v2037 = vadd.f32 %v2032, %v2030
    %v2038 = vadd.f32 %v2033, %v2030
    %v2039 = vadd.f32 %v2034, %v2030
    %v2040 = vadd.f32 %v2035, %v2030
    %v2041 = vmax.f32 %v2036, 0.0
    %v2042 = vmax.f32 %v2037, 0.0
    %v2043 = vmax.f32 %v2038, 0.0
    %v2044 = vmax.f32 %v2039, 0.0
    %v2045 = vmax.f32 %v2040, 0.0
    %v2051 = vcombine.high %v2041, %v2041
    %v2053 = vunpack.c.l.s4 1983009808
    %v2054 = vunpack.c.0.s8 %v2053
    %v2055 = vlaneseq
    %v2056 = vshrl.u32 %v2055, 7
    %v2057 = vsub.s32 %v2054, %v2056
    %v2058 = vrot.slane %v2041, %v2057
    %v2060 = vunpack.c.l.s4 1983009808
    %v2061 = vunpack.c.0.s8 %v2060
    %v2062 = vlaneseq
    %v2063 = vshrl.u32 %v2062, 7
    %v2064 = vsub.s32 %v2061, %v2063
    %v2065 = vrot.slane %v2051, %v2064
    %v2066 = vcombine.high %v2058, %v2058
    %v2067 = vcombine.high %v2065, %v2065
    %v2068 = vcombine.high %v2042, %v2042
    %v2070 = vunpack.c.l.s4 1983009808
    %v2071 = vunpack.c.0.s8 %v2070
    %v2072 = vlaneseq
    %v2073 = vshrl.u32 %v2072, 7
    %v2074 = vsub.s32 %v2071, %v2073
    %v2075 = vrot.slane %v2042, %v2074
    %v2077 = vunpack.c.l.s4 1983009808
    %v2078 = vunpack.c.0.s8 %v2077
    %v2079 = vlaneseq
    %v2080 = vshrl.u32 %v2079, 7
    %v2081 = vsub.s32 %v2078, %v2080
    %v2082 = vrot.slane %v2068, %v2081
    %v2083 = vcombine.high %v2075, %v2075
    %v2084 = vcombine.high %v2082, %v2082
    %v2085 = vcombine.high %v2043, %v2043
    %v2087 = vunpack.c.l.s4 1983009808
    %v2088 = vunpack.c.0.s8 %v2087
    %v2089 = vlaneseq
    %v2090 = vshrl.u32 %v2089, 7
    %v2091 = vsub.s32 %v2088, %v2090
    %v2092 = vrot.slane %v2043, %v2091
    %v2094 = vunpack.c.l.s4 1983009808
    %v2095 = vunpack.c.0.s8 %v2094
    %v2096 = vlaneseq
    %v2097 = vshrl.u32 %v2096, 7
    %v2098 = vsub.s32 %v2095, %v2097
    %v2099 = vrot.slane %v2085, %v2098
    %v2100 = vcombine.high %v2092, %v2092
    %v2101 = vcombine.high %v2099, %v2099
    %v2102 = vcombine.high %v2044, %v2044
    %v2104 = vunpack.c.l.s4 1983009808
    %v2105 = vunpack.c.0.s8 %v2104
    %v2106 = vlaneseq
    %v2107 = vshrl.u32 %v2106, 7
    %v2108 = vsub.s32 %v2105, %v2107
    %v2109 = vrot.slane %v2044, %v2108
    %v2111 = vunpack.c.l.s4 1983009808
    %v2112 = vunpack.c.0.s8 %v2111
    %v2113 = vlaneseq
    %v2114 = vshrl.u32 %v2113, 7
    %v2115 = vsub.s32 %v2112, %v2114
    %v2116 = vrot.slane %v2102, %v2115
    %v2117 = vcombine.high %v2109, %v2109
    %v2118 = vcombine.high %v2116, %v2116
    %v2120 = vunpack.c.l.s4 1983009808
    %v2121 = vunpack.c.0.s8 %v2120
    %v2122 = vlaneseq
    %v2123 = vshrl.u32 %v2122, 7
    %v2124 = vsub.s32 %v2121, %v2123
    %v2125 = vrot.slane %v2045, %v2124
    %v2126 = vcombine.high %v2125, %v2125
    %v2127 = vcombine.low %v2058, %v2066
    %v2128 = vcombine.low %v2065, %v2067
    %v2130 = vunpack.c.l.s4 1983009808
    %v2131 = vunpack.c.0.s8 %v2130
    %v2132 = vlaneseq
    %v2133 = vshrl.u32 %v2132, 7
    %v2134 = vsub.s32 %v2131, %v2133
    %v2135 = vrot.slane %v2127, %v2134
    %v2137 = vunpack.c.l.s4 1983009808
    %v2138 = vunpack.c.0.s8 %v2137
    %v2139 = vlaneseq
    %v2140 = vshrl.u32 %v2139, 7
    %v2141 = vsub.s32 %v2138, %v2140
    %v2142 = vrot.slane %v2128, %v2141
    %v2143 = vcombine.low %v2135, %v2142
    %v2144 = vcombine.low %v2075, %v2083
    %v2145 = vcombine.low %v2082, %v2084
    %v2147 = vunpack.c.l.s4 1983009808
    %v2148 = vunpack.c.0.s8 %v2147
    %v2149 = vlaneseq
    %v2150 = vshrl.u32 %v2149, 7
    %v2151 = vsub.s32 %v2148, %v2150
    %v2152 = vrot.slane %v2144, %v2151
    %v2154 = vunpack.c.l.s4 1983009808
    %v2155 = vunpack.c.0.s8 %v2154
    %v2156 = vlaneseq
    %v2157 = vshrl.u32 %v2156, 7
    %v2158 = vsub.s32 %v2155, %v2157
    %v2159 = vrot.slane %v2145, %v2158
    %v2160 = vcombine.low %v2152, %v2159
    %v2162 = vunpack.c.l.s4 1983009808
    %v2163 = vunpack.c.0.s8 %v2162
    %v2164 = vlaneseq
    %v2165 = vshrl.u32 %v2164, 7
    %v2166 = vsub.s32 %v2163, %v2165
    %v2167 = vrot.slane %v2092, %v2166
    %v2168 = vcombine.low %v2100, %v2099
    %v2169 = vcombine.low %v2101, %v2109
    %v2171 = vunpack.c.l.s4 1983009808
    %v2172 = vunpack.c.0.s8 %v2171
    %v2173 = vlaneseq
    %v2174 = vshrl.u32 %v2173, 7
    %v2175 = vsub.s32 %v2172, %v2174
    %v2176 = vrot.slane %v2168, %v2175
    %v2178 = vunpack.c.l.s4 1983009808
    %v2179 = vunpack.c.0.s8 %v2178
    %v2180 = vlaneseq
    %v2181 = vshrl.u32 %v2180, 7
    %v2182 = vsub.s32 %v2179, %v2181
    %v2183 = vrot.slane %v2169, %v2182
    %v2184 = vcombine.low %v2176, %v2183
    %v2185 = vcombine.low %v2117, %v2116
    %v2186 = vcombine.low %v2118, %v2125
    %v2188 = vunpack.c.l.s4 1983009808
    %v2189 = vunpack.c.0.s8 %v2188
    %v2190 = vlaneseq
    %v2191 = vshrl.u32 %v2190, 7
    %v2192 = vsub.s32 %v2189, %v2191
    %v2193 = vrot.slane %v2185, %v2192
    %v2195 = vunpack.c.l.s4 1983009808
    %v2196 = vunpack.c.0.s8 %v2195
    %v2197 = vlaneseq
    %v2198 = vshrl.u32 %v2197, 7
    %v2199 = vsub.s32 %v2196, %v2198
    %v2200 = vrot.slane %v2186, %v2199
    %v2201 = vcombine.low %v2193, %v2200
    %v2203 = vunpack.c.l.s4 1983009808
    %v2204 = vunpack.c.0.s8 %v2203
    %v2205 = vlaneseq
    %v2206 = vshrl.u32 %v2205, 7
    %v2207 = vsub.s32 %v2204, %v2206
    %v2208 = vrot.slane %v2126, %v2207
    %v2215 = vpack.c.bf16 %v2160, %v2143
    %v2216 = vpack.c.bf16 %v2167, %v2167
    %v2217 = vpack.c.bf16 %v2201, %v2184
    %v2218 = vpack.c.bf16 %v2208, %v2208
    %v2220 = vshrl.u32 %v2215, 16
    %v2222 = vshll.u32 %v2215, 16
    %v2224 = vrot.slane %v2222, 1
    %v2225 = vor.u32 %v2220, %v2224
    %v2227 = vshll.u32 %v2216, 16
    %v2229 = vrot.slane %v2227, 1
    %v2230 = vsel %vm625, %v2225, %v2229
    %v2232 = vshrl.u32 %v2217, 16
    %v2234 = vshll.u32 %v2217, 16
    %v2236 = vrot.slane %v2234, 1
    %v2237 = vor.u32 %v2232, %v2236
    %v2239 = vshll.u32 %v2218, 16
    %v2241 = vrot.slane %v2239, 1
    %v2242 = vsel %vm625, %v2237, %v2241
    %2243 = vrot.lane.b32.xlu0 %v2230, 64
    %v2244 = vpop.permute.xlu0 %2243
    %2245 = vrot.lane.b32.xlu0 %v2242, 64
    %v2246 = vpop.permute.xlu0 %2245
    %v2251 = vrot.slane %v2215, 1
    %v2252 = vrot.slane %v2216, 1
    %v2253 = vsel %vm690, %v2251, %v2252
    %v2254 = vrot.slane %v2217, 1
    %v2255 = vrot.slane %v2218, 1
    %v2256 = vsel %vm690, %v2254, %v2255
    %v2258 = vsel %vm1663, %v2215, %v2244
    %v2261 = vsel %vm1663, %v2217, %v2246
    %v2263 = vld [vmem:[#allocation2 + $0x50] sm:$0xf]
    %v2264 = vld [vmem:[#allocation2 + $0x54] sm:$0xf]
    %v2265 = vld [vmem:[#allocation2 + $0x58] sm:$0xf]
    %v2266 = vld [vmem:[#allocation2 + $0x5c] sm:$0xf]
    %v2267 = vld [vmem:[#allocation2 + $0x60] sm:$0xf]
    %v2268 = vld [vmem:[#allocation2 + $0x64] sm:$0xf]
    %v2269 = vld [vmem:[#allocation2 + $0x68] sm:$0xf]
    %v2270 = vld [vmem:[#allocation2 + $0x6c] sm:$0xf]
    %v2271 = vld [vmem:[#allocation2 + $0x70] sm:$0xf]
    %v2272 = vld [vmem:[#allocation2 + $0x74] sm:$0xf]
    %v2273 = vld [vmem:[#allocation2 + $0x78] sm:$0xf]
    %v2274 = vld [vmem:[#allocation2 + $0x7c] sm:$0xf]
    %v2275 = vld [vmem:[#allocation2 + $0x80] sm:$0xf]
    %v2276 = vld [vmem:[#allocation2 + $0x84] sm:$0xf]
    %v2277 = vld [vmem:[#allocation2 + $0x88] sm:$0xf]
    %v2278 = vld [vmem:[#allocation2 + $0x8c] sm:$0xf]
    %v2279 = vld [vmem:[#allocation2 + $0x90] sm:$0xf]
    %v2280 = vld [vmem:[#allocation2 + $0x94] sm:$0xf]
    %v2281 = vld [vmem:[#allocation2 + $0x98] sm:$0xf]
    %v2282 = vld [vmem:[#allocation2 + $0x9c] sm:$0xf]
    %v2283 = vld [vmem:[#allocation2 + $0xa0] sm:$0xf]
    %v2284 = vld [vmem:[#allocation2 + $0xa4] sm:$0xf]
    %v2285 = vld [vmem:[#allocation2 + $0xa8] sm:$0xf]
    %v2286 = vld [vmem:[#allocation2 + $0xac] sm:$0xf]
    %v2311 = vunpack.c.l.b16 %v2263
    %v2312 = vunpack.c.l.b16 %v2264
    %v2313 = vunpack.c.l.b16 %v2265
    %v2314 = vunpack.c.l.b16 %v2266
    %v2315 = vunpack.c.l.b16 %v2267
    %v2316 = vunpack.c.l.b16 %v2268
    %v2317 = vunpack.c.l.b16 %v2269
    %v2318 = vunpack.c.l.b16 %v2270
    %v2319 = vunpack.c.l.b16 %v2271
    %v2320 = vunpack.c.l.b16 %v2272
    %v2321 = vunpack.c.l.b16 %v2273
    %v2322 = vunpack.c.l.b16 %v2274
    %v2323 = vunpack.c.l.b16 %v2275
    %v2324 = vunpack.c.l.b16 %v2276
    %v2325 = vunpack.c.l.b16 %v2277
    %v2326 = vunpack.c.l.b16 %v2278
    %v2327 = vunpack.c.l.b16 %v2279
    %v2328 = vunpack.c.l.b16 %v2280
    %v2329 = vunpack.c.l.b16 %v2281
    %v2330 = vunpack.c.l.b16 %v2282
    %v2331 = vunpack.c.l.b16 %v2283
    %v2332 = vunpack.c.l.b16 %v2284
    %v2333 = vunpack.c.l.b16 %v2285
    %v2334 = vunpack.c.l.b16 %v2286
    %v2335 = vpack.c.b16 %v2312, %v2311
    %v2336 = vpack.c.b16 %v2314, %v2313
    %v2337 = vpack.c.b16 %v2316, %v2315
    %v2338 = vpack.c.b16 %v2318, %v2317
    %v2339 = vpack.c.b16 %v2320, %v2319
    %v2340 = vpack.c.b16 %v2322, %v2321
    %v2341 = vpack.c.b16 %v2324, %v2323
    %v2342 = vpack.c.b16 %v2326, %v2325
    %v2343 = vpack.c.b16 %v2328, %v2327
    %v2344 = vpack.c.b16 %v2330, %v2329
    %v2345 = vpack.c.b16 %v2332, %v2331
    %v2346 = vpack.c.b16 %v2334, %v2333
    %v2360 = vsel %vm1663, %v2253, 0
    %v2363 = vsel %vm1663, %v2256, 0
    %2365 = vmatprep.subr.bf16.mxu0 0
    %2366 = vmatpush1.bf16.msra.mxu0 %v2335
    %2367 = vmatprep.subr.bf16.mxu0 0
    %2368 = vmatpush1.bf16.msra.mxu0 %v2336
    %2369 = vmatprep.subr.bf16.mxu0 0
    %2370 = vmatpush1.bf16.msra.mxu0 %v2337
    %2371 = vmatprep.subr.bf16.mxu0 0
    %2372 = vmatpush1.bf16.msra.mxu0 %v2338
    %2373 = vmatprep.subr.bf16.mxu0 0
    %2374 = vmatpush1.bf16.msra.mxu0 %v2339
    %2375 = vmatprep.subr.bf16.mxu0 0
    %2376 = vmatpush1.bf16.msra.mxu0 %v2340
    %2377 = vmatprep.subr.bf16.mxu0 0
    %2378 = vmatpush1.bf16.msra.mxu0 %v2341
    %2379 = vmatprep.subr.bf16.mxu0 0
    %2380 = vmatpush1.bf16.msra.mxu0 %v2342
    %2381 = vmatprep.subr.bf16.mxu0 0
    %2382 = vmatpush1.bf16.msra.mxu0 %v2343
    %2383 = vmatprep.subr.bf16.mxu0 0
    %2384 = vmatpush1.bf16.msra.mxu0 %v2344
    %2385 = vmatprep.subr.bf16.mxu0 0
    %2386 = vmatpush1.bf16.msra.mxu0 %v2345
    %2387 = vmatprep.subr.bf16.mxu0 0
    %2388 = vmatpush1.bf16.msra.mxu0 %v2346
    %2389 = vmatprep.subr.bf16.mxu0 0
    %2390 = vmatpush1.bf16.msra.mxu0 0
    %2391 = vmatprep.subr.bf16.mxu0 0
    %2392 = vmatpush1.bf16.msra.mxu0 0
    %2393 = vmatprep.subr.bf16.mxu0 0
    %2394 = vmatpush1.bf16.msra.mxu0 0
    %2395 = vmatprep.subr.bf16.mxu0 0
    %2396 = vmatpush1.bf16.msra.mxu0 0
    %2397 = vmatprep.mubr.bf16.mxu0 %v2360
    %2398 = vmatmul.mubr.bf16.gmra.mrb[0].mxu0 %v2258
    %v2399 = vpop.f32.mrb[0].mxu0
    %v2400 = vadd.f32 0.0, %v2399
    %v2401 = vpop.f32.mrb[0].mxu0
    %v2402 = vpop.f32.mrb[0].mxu0
    %v2403 = vadd.f32 0.0, %v2402
    %v2404 = vpop.f32.mrb[0].mxu0
    %2405 = vmatprep.mubr.bf16.mxu0 %v2363
    %2406 = vmatmul.mubr.bf16.gmra.mrb[0].mxu0 %v2261
    %v2407 = vpop.f32.mrb[0].mxu0
    %v2408 = vadd.f32 0.0, %v2407
    %v2409 = vpop.f32.mrb[0].mxu0
    %v2410 = vpop.f32.mrb[0].mxu0
    %v2411 = vadd.f32 0.0, %v2410
    %v2412 = vpop.f32.mrb[0].mxu0
    %2413 = vdwg.mxu0
    %v2414 = vld [vmem:[%s3 + $0x6] ss:$0 sm:$0xff]
    %v2415 = vld [vmem:[%s3 + $0x7] ss:$0 sm:$0xff]
    %v2416 = vmul.f32 %v2400, %v2414
    %v2417 = vmul.f32 %v2403, %v2414
    %v2418 = vmul.f32 %v2408, %v2414
    %v2419 = vmul.f32 %v2411, %v2414
    %v2420 = vadd.f32 %v2416, %v2415
    %v2421 = vadd.f32 %v2417, %v2415
    %v2422 = vadd.f32 %v2418, %v2415
    %v2423 = vadd.f32 %v2419, %v2415
    %v2424 = vmax.f32 %v2420, 0.0
    %v2425 = vmax.f32 %v2421, 0.0
    %v2426 = vmax.f32 %v2422, 0.0
    %v2427 = vmax.f32 %v2423, 0.0
    %v2432 = vcombine.high %v2424, %v2424
    %v2433 = vcombine.high %v2425, %v2425
    %v2434 = vcombine.high %v2426, %v2426
    %v2435 = vcombine.high %v2427, %v2427
    %vm2440 = vcmask 1043456
    %v2441 = vsel %vm2440, %v2424, -inf
    %v2442 = vrot.slane %v2441, 4
    %v2443 = vmax.f32 %v2441, %v2442
    %v2444 = vrot.slane %v2443, 2
    %v2445 = vmax.f32 %v2443, %v2444
    %v2446 = vrot.slane %v2445, 1
    %v2447 = vmax.f32 %v2445, %v2446
    %v2448 = vsel %vm2440, %v2432, -inf
    %v2449 = vrot.slane %v2448, 4
    %v2450 = vmax.f32 %v2448, %v2449
    %v2451 = vrot.slane %v2450, 2
    %v2452 = vmax.f32 %v2450, %v2451
    %v2453 = vrot.slane %v2452, 1
    %v2454 = vmax.f32 %v2452, %v2453
    %v2455 = vsel %vm2440, %v2425, -inf
    %v2456 = vrot.slane %v2455, 4
    %v2457 = vmax.f32 %v2455, %v2456
    %v2458 = vrot.slane %v2457, 2
    %v2459 = vmax.f32 %v2457, %v2458
    %v2460 = vrot.slane %v2459, 1
    %v2461 = vmax.f32 %v2459, %v2460
    %v2462 = vsel %vm2440, %v2433, -inf
    %v2463 = vrot.slane %v2462, 4
    %v2464 = vmax.f32 %v2462, %v2463
    %v2465 = vrot.slane %v2464, 2
    %v2466 = vmax.f32 %v2464, %v2465
    %v2467 = vrot.slane %v2466, 1
    %v2468 = vmax.f32 %v2466, %v2467
    %v2469 = vsel %vm2440, %v2426, -inf
    %v2470 = vrot.slane %v2469, 4
    %v2471 = vmax.f32 %v2469, %v2470
    %v2472 = vrot.slane %v2471, 2
    %v2473 = vmax.f32 %v2471, %v2472
    %v2474 = vrot.slane %v2473, 1
    %v2475 = vmax.f32 %v2473, %v2474
    %v2476 = vsel %vm2440, %v2434, -inf
    %v2477 = vrot.slane %v2476, 4
    %v2478 = vmax.f32 %v2476, %v2477
    %v2479 = vrot.slane %v2478, 2
    %v2480 = vmax.f32 %v2478, %v2479
    %v2481 = vrot.slane %v2480, 1
    %v2482 = vmax.f32 %v2480, %v2481
    %v2483 = vsel %vm2440, %v2427, -inf
    %v2484 = vrot.slane %v2483, 4
    %v2485 = vmax.f32 %v2483, %v2484
    %v2486 = vrot.slane %v2485, 2
    %v2487 = vmax.f32 %v2485, %v2486
    %v2488 = vrot.slane %v2487, 1
    %v2489 = vmax.f32 %v2487, %v2488
    %v2490 = vsel %vm2440, %v2435, -inf
    %v2491 = vrot.slane %v2490, 4
    %v2492 = vmax.f32 %v2490, %v2491
    %v2493 = vrot.slane %v2492, 2
    %v2494 = vmax.f32 %v2492, %v2493
    %v2495 = vrot.slane %v2494, 1
    %v2496 = vmax.f32 %v2494, %v2495
    %v2497 = vpack.c.bf16 %v2447, %v2447
    %v2498 = vpack.c.bf16 %v2454, %v2454
    %v2499 = vpack.c.bf16 %v2461, %v2461
    %v2500 = vpack.c.bf16 %v2468, %v2468
    %v2501 = vpack.c.bf16 %v2475, %v2475
    %v2502 = vpack.c.bf16 %v2482, %v2482
    %v2503 = vpack.c.bf16 %v2489, %v2489
    %v2504 = vpack.c.bf16 %v2496, %v2496
    %v2505 = vld [vmem:[#allocation5] sm:$0xff]
    %v2506 = vld [vmem:[#allocation5 + $0x8] sm:$0xf]
    %v2507 = vld [vmem:[#allocation5 + $0xc] sm:$0xff]
    %v2508 = vld [vmem:[#allocation5 + $0x14] sm:$0xf]
    %v2509 = vld [vmem:[#allocation5 + $0x18] sm:$0xff]
    %v2510 = vld [vmem:[#allocation5 + $0x20] sm:$0xf]
    %v2511 = vld [vmem:[#allocation5 + $0x24] sm:$0xff]
    %v2512 = vld [vmem:[#allocation5 + $0x2c] sm:$0xf]
    %v2513 = vld [vmem:[#allocation5 + $0x30] sm:$0xff]
    %v2514 = vld [vmem:[#allocation5 + $0x38] sm:$0xf]
    %v2515 = vld [vmem:[#allocation5 + $0x3c] sm:$0xff]
    %v2516 = vld [vmem:[#allocation5 + $0x44] sm:$0xf]
    %v2517 = vld [vmem:[#allocation5 + $0x48] sm:$0xff]
    %v2518 = vld [vmem:[#allocation5 + $0x50] sm:$0xf]
    %v2519 = vld [vmem:[#allocation5 + $0x54] sm:$0xff]
    %v2520 = vld [vmem:[#allocation5 + $0x5c] sm:$0xf]
    %v2521 = vld [vmem:[#allocation5 + $0x60] sm:$0xff]
    %v2522 = vld [vmem:[#allocation5 + $0x68] sm:$0xf]
    %v2523 = vld [vmem:[#allocation5 + $0x6c] sm:$0xff]
    %v2524 = vld [vmem:[#allocation5 + $0x74] sm:$0xf]
    %v2525 = vld [vmem:[#allocation5 + $0x78] sm:$0xff]
    %v2526 = vld [vmem:[#allocation5 + $0x80] sm:$0xf]
    %v2527 = vld [vmem:[#allocation5 + $0x84] sm:$0xff]
    %v2528 = vld [vmem:[#allocation5 + $0x8c] sm:$0xf]
    %v2529 = vld [vmem:[#allocation5 + $0x90] sm:$0xff]
    %v2530 = vld [vmem:[#allocation5 + $0x98] sm:$0xf]
    %v2531 = vld [vmem:[#allocation5 + $0x9c] sm:$0xff]
    %v2532 = vld [vmem:[#allocation5 + $0xa4] sm:$0xf]
    %v2533 = vld [vmem:[#allocation5 + $0xa8] sm:$0xff]
    %v2534 = vld [vmem:[#allocation5 + $0xb0] sm:$0xf]
    %v2535 = vld [vmem:[#allocation5 + $0xb4] sm:$0xff]
    %v2536 = vld [vmem:[#allocation5 + $0xbc] sm:$0xf]
    %s2537 = scalar_lea.vmem %s3, 24
    %v2538 = vld [vmem:[%s2537] ss:$8 sm:$0x7]
    %v2540 = vlaneseq
    %v2541 = vshrl.u32 %v2540, 7
    %v2542 = vsub.s32 0, %v2541
    %v2543 = vrot.slane %v2538, %v2542
    %v2544 = vlaneseq
    %v2545 = vshrl.u32 %v2544, 7
    %v2546 = vsub.s32 1, %v2545
    %v2547 = vrot.slane %v2538, %v2546
    %v2548 = vlaneseq
    %v2549 = vshrl.u32 %v2548, 7
    %v2550 = vsub.s32 2, %v2549
    %v2551 = vrot.slane %v2538, %v2550
    %v2563 = vunpack.c.l.b16 %v2497
    %v2564 = vunpack.c.l.b16 %v2498
    %v2565 = vunpack.c.l.b16 %v2499
    %v2566 = vunpack.c.l.b16 %v2500
    %v2567 = vunpack.c.l.b16 %v2501
    %v2568 = vunpack.c.l.b16 %v2502
    %v2569 = vunpack.c.l.b16 %v2503
    %v2570 = vunpack.c.l.b16 %v2504
    %v2571 = vsel %vm1518, %v2564, %v2563
    %v2572 = vsel %vm1520, %v2565, %v2571
    %v2573 = vsel %vm1522, %v2566, %v2572
    %v2574 = vsel %vm1524, %v2567, %v2573
    %v2575 = vsel %vm1526, %v2568, %v2574
    %v2576 = vsel %vm1528, %v2569, %v2575
    %v2577 = vsel %vm1530, %v2570, %v2576
    %v2578 = vpack.c.b16 %v2577, %v2577
    %v2612 = vunpack.c.l.b16 %v2505
    %v2613 = vunpack.c.h.b16 %v2505
    %v2614 = vunpack.c.l.b16 %v2506
    %v2615 = vunpack.c.l.b16 %v2507
    %v2616 = vunpack.c.h.b16 %v2507
    %v2617 = vunpack.c.l.b16 %v2508
    %v2618 = vunpack.c.l.b16 %v2509
    %v2619 = vunpack.c.h.b16 %v2509
    %v2620 = vunpack.c.l.b16 %v2510
    %v2621 = vunpack.c.l.b16 %v2511
    %v2622 = vunpack.c.h.b16 %v2511
    %v2623 = vunpack.c.l.b16 %v2512
    %v2624 = vunpack.c.l.b16 %v2513
    %v2625 = vunpack.c.h.b16 %v2513
    %v2626 = vunpack.c.l.b16 %v2514
    %v2627 = vunpack.c.l.b16 %v2515
    %v2628 = vunpack.c.h.b16 %v2515
    %v2629 = vunpack.c.l.b16 %v2516
    %v2630 = vunpack.c.l.b16 %v2517
    %v2631 = vunpack.c.h.b16 %v2517
    %v2632 = vunpack.c.l.b16 %v2518
    %v2633 = vunpack.c.l.b16 %v2519
    %v2634 = vunpack.c.h.b16 %v2519
    %v2635 = vunpack.c.l.b16 %v2520
    %v2636 = vunpack.c.l.b16 %v2521
    %v2637 = vunpack.c.h.b16 %v2521
    %v2638 = vunpack.c.l.b16 %v2522
    %v2639 = vunpack.c.l.b16 %v2523
    %v2640 = vunpack.c.h.b16 %v2523
    %v2641 = vunpack.c.l.b16 %v2524
    %v2642 = vunpack.c.l.b16 %v2525
    %v2643 = vunpack.c.h.b16 %v2525
    %v2644 = vunpack.c.l.b16 %v2526
    %v2645 = vunpack.c.l.b16 %v2527
    %v2646 = vunpack.c.h.b16 %v2527
    %v2647 = vunpack.c.l.b16 %v2528
    %v2648 = vunpack.c.l.b16 %v2529
    %v2649 = vunpack.c.h.b16 %v2529
    %v2650 = vunpack.c.l.b16 %v2530
    %v2651 = vunpack.c.l.b16 %v2531
    %v2652 = vunpack.c.h.b16 %v2531
    %v2653 = vunpack.c.l.b16 %v2532
    %v2654 = vunpack.c.l.b16 %v2533
    %v2655 = vunpack.c.h.b16 %v2533
    %v2656 = vunpack.c.l.b16 %v2534
    %v2657 = vunpack.c.l.b16 %v2535
    %v2658 = vunpack.c.h.b16 %v2535
    %v2659 = vunpack.c.l.b16 %v2536
    %v2660 = vpack.c.b16 %v2615, %v2612
    %v2661 = vpack.c.b16 %v2616, %v2613
    %v2662 = vpack.c.b16 %v2617, %v2614
    %v2663 = vpack.c.b16 %v2621, %v2618
    %v2664 = vpack.c.b16 %v2622, %v2619
    %v2665 = vpack.c.b16 %v2623, %v2620
    %v2666 = vpack.c.b16 %v2627, %v2624
    %v2667 = vpack.c.b16 %v2628, %v2625
    %v2668 = vpack.c.b16 %v2629, %v2626
    %v2669 = vpack.c.b16 %v2633, %v2630
    %v2670 = vpack.c.b16 %v2634, %v2631
    %v2671 = vpack.c.b16 %v2635, %v2632
    %v2672 = vpack.c.b16 %v2639, %v2636
    %v2673 = vpack.c.b16 %v2640, %v2637
    %v2674 = vpack.c.b16 %v2641, %v2638
    %v2675 = vpack.c.b16 %v2645, %v2642
    %v2676 = vpack.c.b16 %v2646, %v2643
    %v2677 = vpack.c.b16 %v2647, %v2644
    %v2678 = vpack.c.b16 %v2651, %v2648
    %v2679 = vpack.c.b16 %v2652, %v2649
    %v2680 = vpack.c.b16 %v2653, %v2650
    %v2681 = vpack.c.b16 %v2657, %v2654
    %v2682 = vpack.c.b16 %v2658, %v2655
    %v2683 = vpack.c.b16 %v2659, %v2656
    %2708 = vmatprep.subr.bf16.mxu0 %v2661
    %2709 = vmatpush1.bf16.msra.mxu0 %v2660
    %2710 = vmatprep.subr.bf16.mxu0 %v2664
    %2711 = vmatpush1.bf16.msra.mxu0 %v2663
    %2712 = vmatprep.subr.bf16.mxu0 %v2667
    %2713 = vmatpush1.bf16.msra.mxu0 %v2666
    %2714 = vmatprep.subr.bf16.mxu0 %v2670
    %2715 = vmatpush1.bf16.msra.mxu0 %v2669
    %2716 = vmatprep.subr.bf16.mxu0 %v2673
    %2717 = vmatpush1.bf16.msra.mxu0 %v2672
    %2718 = vmatprep.subr.bf16.mxu0 %v2676
    %2719 = vmatpush1.bf16.msra.mxu0 %v2675
    %2720 = vmatprep.subr.bf16.mxu0 %v2679
    %2721 = vmatpush1.bf16.msra.mxu0 %v2678
    %2722 = vmatprep.subr.bf16.mxu0 %v2682
    %2723 = vmatpush1.bf16.msra.mxu0 %v2681
    %2724 = vmatprep.subr.bf16.mxu0 0
    %2725 = vmatpush1.bf16.msra.mxu0 0
    %2726 = vmatprep.subr.bf16.mxu0 0
    %2727 = vmatpush1.bf16.msra.mxu0 0
    %2728 = vmatprep.subr.bf16.mxu0 0
    %2729 = vmatpush1.bf16.msra.mxu0 0
    %2730 = vmatprep.subr.bf16.mxu0 0
    %2731 = vmatpush1.bf16.msra.mxu0 0
    %2732 = vmatprep.subr.bf16.mxu0 0
    %2733 = vmatpush1.bf16.msra.mxu0 0
    %2734 = vmatprep.subr.bf16.mxu0 0
    %2735 = vmatpush1.bf16.msra.mxu0 0
    %2736 = vmatprep.subr.bf16.mxu0 0
    %2737 = vmatpush1.bf16.msra.mxu0 0
    %2738 = vmatprep.subr.bf16.mxu0 0
    %2739 = vmatpush1.bf16.msra.mxu0 0
    %2740 = vmatprep.mubr.bf16.mxu0 0
    %2741 = vmatmul.mubr.bf16.gmra.mrb[0].mxu0 %v2578
    %v2742 = vpop.f32.mrb[0].mxu0
    %v2743 = vadd.f32 %v2543, %v2742
    %v2744 = vpop.f32.mrb[0].mxu0
    %v2745 = vadd.f32 %v2547, %v2744
    %v2746 = vpop.f32.mrb[0].mxu0
    %v2747 = vpop.f32.mrb[0].mxu0
    %2748 = vdwg.mxu0
    %2749 = vmatprep.subr.bf16.mxu0 0
    %2750 = vmatpush1.bf16.msra.mxu0 %v2662
    %2751 = vmatprep.subr.bf16.mxu0 0
    %2752 = vmatpush1.bf16.msra.mxu0 %v2665
    %2753 = vmatprep.subr.bf16.mxu0 0
    %2754 = vmatpush1.bf16.msra.mxu0 %v2668
    %2755 = vmatprep.subr.bf16.mxu0 0
    %2756 = vmatpush1.bf16.msra.mxu0 %v2671
    %2757 = vmatprep.subr.bf16.mxu0 0
    %2758 = vmatpush1.bf16.msra.mxu0 %v2674
    %2759 = vmatprep.subr.bf16.mxu0 0
    %2760 = vmatpush1.bf16.msra.mxu0 %v2677
    %2761 = vmatprep.subr.bf16.mxu0 0
    %2762 = vmatpush1.bf16.msra.mxu0 %v2680
    %2763 = vmatprep.subr.bf16.mxu0 0
    %2764 = vmatpush1.bf16.msra.mxu0 %v2683
    %2765 = vmatprep.subr.bf16.mxu0 0
    %2766 = vmatpush1.bf16.msra.mxu0 0
    %2767 = vmatprep.subr.bf16.mxu0 0
    %2768 = vmatpush1.bf16.msra.mxu0 0
    %2769 = vmatprep.subr.bf16.mxu0 0
    %2770 = vmatpush1.bf16.msra.mxu0 0
    %2771 = vmatprep.subr.bf16.mxu0 0
    %2772 = vmatpush1.bf16.msra.mxu0 0
    %2773 = vmatprep.subr.bf16.mxu0 0
    %2774 = vmatpush1.bf16.msra.mxu0 0
    %2775 = vmatprep.subr.bf16.mxu0 0
    %2776 = vmatpush1.bf16.msra.mxu0 0
    %2777 = vmatprep.subr.bf16.mxu0 0
    %2778 = vmatpush1.bf16.msra.mxu0 0
    %2779 = vmatprep.subr.bf16.mxu0 0
    %2780 = vmatpush1.bf16.msra.mxu0 0
    %2781 = vmatprep.mubr.bf16.mxu0 0
    %2782 = vmatmul.mubr.bf16.gmra.mrb[0].mxu0 %v2578
    %v2783 = vpop.f32.mrb[0].mxu0
    %v2784 = vadd.f32 %v2551, %v2783
    %v2785 = vpop.f32.mrb[0].mxu0
    %v2786 = vpop.f32.mrb[0].mxu0
    %v2787 = vpop.f32.mrb[0].mxu0
    %2788 = vdwg.mxu0
    %v2789 = vpack.c.bf16 %v2743, %v2743
    %v2792 = vunpack.c.l.s4 1983009808
    %v2793 = vunpack.c.0.s8 %v2792
    %v2794 = vlaneseq
    %v2795 = vshrl.u32 %v2794, 7
    %v2796 = vsub.s32 %v2793, %v2795
    %v2797 = vrot.slane %v2789, %v2796
    %v2798 = vcombine.high %v2797, %v2797
    %v2799 = vpack.c.bf16 %v2745, %v2745
    %v2802 = vunpack.c.l.s4 1983009808
    %v2803 = vunpack.c.0.s8 %v2802
    %v2804 = vlaneseq
    %v2805 = vshrl.u32 %v2804, 7
    %v2806 = vsub.s32 %v2803, %v2805
    %v2807 = vrot.slane %v2799, %v2806
    %v2808 = vcombine.high %v2807, %v2807
    %v2809 = vpack.c.bf16 %v2784, %v2784
    %v2812 = vunpack.c.l.s4 1983009808
    %v2813 = vunpack.c.0.s8 %v2812
    %v2814 = vlaneseq
    %v2815 = vshrl.u32 %v2814, 7
    %v2816 = vsub.s32 %v2813, %v2815
    %v2817 = vrot.slane %v2809, %v2816
    %v2818 = vcombine.high %v2817, %v2817
    %v2820 = vsel %vm713, %v2797, 0
    %v2823 = vsel %vm713, %v2807, 0
    %2825 = vmatprep.subr.bf16.mxu0 0
    %2826 = vmatpush1.bf16.xpose.msra.mxu0 %v2823
    %2827 = vmatprep.subr.bf16.mxu0 0
    %2828 = vmatpush1.bf16.xpose.msra.mxu0 0
    %2829 = vmatprep.subr.bf16.mxu0 0
    %2830 = vmatpush1.bf16.xpose.msra.mxu0 0
    %2831 = vmatprep.subr.bf16.mxu0 0
    %2832 = vmatpush1.bf16.xpose.msra.mxu0 0
    %2833 = vmatprep.subr.bf16.mxu0 0
    %2834 = vmatpush1.bf16.xpose.msra.mxu0 0
    %2835 = vmatprep.subr.bf16.mxu0 0
    %2836 = vmatpush1.bf16.xpose.msra.mxu0 0
    %2837 = vmatprep.subr.bf16.mxu0 0
    %2838 = vmatpush1.bf16.xpose.msra.mxu0 0
    %2839 = vmatprep.subr.bf16.mxu0 0
    %2840 = vmatpush1.bf16.xpose.msra.mxu0 0
    %2841 = vmatprep.subr.bf16.mxu0 0
    %2842 = vmatpush1.bf16.xpose.msra.mxu0 0
    %2843 = vmatprep.subr.bf16.mxu0 0
    %2844 = vmatpush1.bf16.xpose.msra.mxu0 0
    %2845 = vmatprep.subr.bf16.mxu0 0
    %2846 = vmatpush1.bf16.xpose.msra.mxu0 0
    %2847 = vmatprep.subr.bf16.mxu0 0
    %2848 = vmatpush1.bf16.xpose.msra.mxu0 0
    %2849 = vmatprep.subr.bf16.mxu0 0
    %2850 = vmatpush1.bf16.xpose.msra.mxu0 0
    %2851 = vmatprep.subr.bf16.mxu0 0
    %2852 = vmatpush1.bf16.xpose.msra.mxu0 0
    %2853 = vmatprep.subr.bf16.mxu0 0
    %2854 = vmatpush1.bf16.xpose.msra.mxu0 0
    %2855 = vmatprep.subr.bf16.mxu0 0
    %2856 = vmatpush1.bf16.xpose.msra.mxu0 0
    %2857 = vmatprep.mubr.bf16.mxu0 0
    %2858 = vmatmul.mubr.bf16.gmra.mrb[0].mxu0 %v2820
    %v2859 = vpop.f32.mrb[0].mxu0
    %v2860 = vadd.f32 0.0, %v2859
    %v2861 = vpop.f32.mrb[0].mxu0
    %v2862 = vpop.f32.mrb[0].mxu0
    %v2863 = vpop.f32.mrb[0].mxu0
    %2864 = vdwg.mxu0
    %v2866 = vsel %vm713, %v2798, 0
    %v2869 = vsel %vm713, %v2808, 0
    %2871 = vmatprep.subr.bf16.mxu0 0
    %2872 = vmatpush1.bf16.xpose.msra.mxu0 %v2869
    %2873 = vmatprep.subr.bf16.mxu0 0
    %2874 = vmatpush1.bf16.xpose.msra.mxu0 0
    %2875 = vmatprep.subr.bf16.mxu0 0
    %2876 = vmatpush1.bf16.xpose.msra.mxu0 0
    %2877 = vmatprep.subr.bf16.mxu0 0
    %2878 = vmatpush1.bf16.xpose.msra.mxu0 0
    %2879 = vmatprep.subr.bf16.mxu0 0
    %2880 = vmatpush1.bf16.xpose.msra.mxu0 0
    %2881 = vmatprep.subr.bf16.mxu0 0
    %2882 = vmatpush1.bf16.xpose.msra.mxu0 0
    %2883 = vmatprep.subr.bf16.mxu0 0
    %2884 = vmatpush1.bf16.xpose.msra.mxu0 0
    %2885 = vmatprep.subr.bf16.mxu0 0
    %2886 = vmatpush1.bf16.xpose.msra.mxu0 0
    %2887 = vmatprep.subr.bf16.mxu0 0
    %2888 = vmatpush1.bf16.xpose.msra.mxu0 0
    %2889 = vmatprep.subr.bf16.mxu0 0
    %2890 = vmatpush1.bf16.xpose.msra.mxu0 0
    %2891 = vmatprep.subr.bf16.mxu0 0
    %2892 = vmatpush1.bf16.xpose.msra.mxu0 0
    %2893 = vmatprep.subr.bf16.mxu0 0
    %2894 = vmatpush1.bf16.xpose.msra.mxu0 0
    %2895 = vmatprep.subr.bf16.mxu0 0
    %2896 = vmatpush1.bf16.xpose.msra.mxu0 0
    %2897 = vmatprep.subr.bf16.mxu0 0
    %2898 = vmatpush1.bf16.xpose.msra.mxu0 0
    %2899 = vmatprep.subr.bf16.mxu0 0
    %2900 = vmatpush1.bf16.xpose.msra.mxu0 0
    %2901 = vmatprep.subr.bf16.mxu0 0
    %2902 = vmatpush1.bf16.xpose.msra.mxu0 0
    %2903 = vmatprep.mubr.bf16.mxu0 0
    %2904 = vmatmul.mubr.bf16.gmra.mrb[0].mxu0 %v2866
    %v2905 = vpop.f32.mrb[0].mxu0
    %v2906 = vadd.f32 0.0, %v2905
    %v2907 = vpop.f32.mrb[0].mxu0
    %v2908 = vpop.f32.mrb[0].mxu0
    %v2909 = vpop.f32.mrb[0].mxu0
    %2910 = vdwg.mxu0
    %vm2911 = vcmask 27648
    %v2912 = vsel %vm2911, %v2860, -inf
    %2913 = vmax.xlane.f32.xlu0 %v2912
    %v2914 = vpop.xlane.xlu0 %2913
    %v2915 = vsel %vm2911, %v2906, -inf
    %2916 = vmax.xlane.f32.xlu0 %v2915
    %v2917 = vpop.xlane.xlu0 %2916
    %v2918 = vsub.f32 %v2860, %v2914
    %v2919 = vsub.f32 %v2906, %v2917
    %v2920 = vmul.f32 %v2918, 1.442695
    %v2921 = vpow.pop %v2920
    %v2922 = vmul.f32 %v2919, 1.442695
    %v2923 = vpow.pop %v2922
    %v2924 = vsel %vm2911, %v2921, 0.0
    %2925 = vadd.xlane.f32.xlu0 %v2924
    %v2926 = vpop.xlane.xlu0 %2925
    %v2927 = vsel %vm2911, %v2923, 0.0
    %2928 = vadd.xlane.f32.xlu0 %v2927
    %v2929 = vpop.xlane.xlu0 %2928
    %v2930 = vrcp.pop %v2926
    %v2931 = vrcp.pop %v2929
    %v2932 = vmul.f32 %v2921, %v2930
    %v2933 = vmul.f32 %v2923, %v2931
    %v2934 = vpack.c.bf16 %v2932, %v2932
    %v2935 = vpack.c.bf16 %v2933, %v2933
    %vm2936 = vcmask 31744
    %v2938 = vsel %vm2936, %v2934, 0
    %vm2940 = vcmask 1041408
    %v2942 = vsel %vm2940, %v2817, 0
    %2944 = vmatprep.subr.bf16.mxu0 0
    %2945 = vmatpush1.bf16.msra.mxu0 %v2942
    %2946 = vmatprep.subr.bf16.mxu0 0
    %2947 = vmatpush1.bf16.msra.mxu0 0
    %2948 = vmatprep.subr.bf16.mxu0 0
    %2949 = vmatpush1.bf16.msra.mxu0 0
    %2950 = vmatprep.subr.bf16.mxu0 0
    %2951 = vmatpush1.bf16.msra.mxu0 0
    %2952 = vmatprep.subr.bf16.mxu0 0
    %2953 = vmatpush1.bf16.msra.mxu0 0
    %2954 = vmatprep.subr.bf16.mxu0 0
    %2955 = vmatpush1.bf16.msra.mxu0 0
    %2956 = vmatprep.subr.bf16.mxu0 0
    %2957 = vmatpush1.bf16.msra.mxu0 0
    %2958 = vmatprep.subr.bf16.mxu0 0
    %2959 = vmatpush1.bf16.msra.mxu0 0
    %2960 = vmatprep.subr.bf16.mxu0 0
    %2961 = vmatpush1.bf16.msra.mxu0 0
    %2962 = vmatprep.subr.bf16.mxu0 0
    %2963 = vmatpush1.bf16.msra.mxu0 0
    %2964 = vmatprep.subr.bf16.mxu0 0
    %2965 = vmatpush1.bf16.msra.mxu0 0
    %2966 = vmatprep.subr.bf16.mxu0 0
    %2967 = vmatpush1.bf16.msra.mxu0 0
    %2968 = vmatprep.subr.bf16.mxu0 0
    %2969 = vmatpush1.bf16.msra.mxu0 0
    %2970 = vmatprep.subr.bf16.mxu0 0
    %2971 = vmatpush1.bf16.msra.mxu0 0
    %2972 = vmatprep.subr.bf16.mxu0 0
    %2973 = vmatpush1.bf16.msra.mxu0 0
    %2974 = vmatprep.subr.bf16.mxu0 0
    %2975 = vmatpush1.bf16.msra.mxu0 0
    %2976 = vmatprep.mubr.bf16.mxu0 0
    %2977 = vmatmul.mubr.bf16.gmra.mrb[0].mxu0 %v2938
    %v2978 = vpop.f32.mrb[0].mxu0
    %v2979 = vadd.f32 0.0, %v2978
    %v2980 = vpop.f32.mrb[0].mxu0
    %v2981 = vpop.f32.mrb[0].mxu0
    %v2982 = vpop.f32.mrb[0].mxu0
    %2983 = vdwg.mxu0
    %v2985 = vsel %vm2936, %v2935, 0
    %v2988 = vsel %vm2940, %v2818, 0
    %2990 = vmatprep.subr.bf16.mxu0 0
    %2991 = vmatpush1.bf16.msra.mxu0 %v2988
    %2992 = vmatprep.subr.bf16.mxu0 0
    %2993 = vmatpush1.bf16.msra.mxu0 0
    %2994 = vmatprep.subr.bf16.mxu0 0
    %2995 = vmatpush1.bf16.msra.mxu0 0
    %2996 = vmatprep.subr.bf16.mxu0 0
    %2997 = vmatpush1.bf16.msra.mxu0 0
    %2998 = vmatprep.subr.bf16.mxu0 0
    %2999 = vmatpush1.bf16.msra.mxu0 0
    %3000 = vmatprep.subr.bf16.mxu0 0
    %3001 = vmatpush1.bf16.msra.mxu0 0
    %3002 = vmatprep.subr.bf16.mxu0 0
    %3003 = vmatpush1.bf16.msra.mxu0 0
    %3004 = vmatprep.subr.bf16.mxu0 0
    %3005 = vmatpush1.bf16.msra.mxu0 0
    %3006 = vmatprep.subr.bf16.mxu0 0
    %3007 = vmatpush1.bf16.msra.mxu0 0
    %3008 = vmatprep.subr.bf16.mxu0 0
    %3009 = vmatpush1.bf16.msra.mxu0 0
    %3010 = vmatprep.subr.bf16.mxu0 0
    %3011 = vmatpush1.bf16.msra.mxu0 0
    %3012 = vmatprep.subr.bf16.mxu0 0
    %3013 = vmatpush1.bf16.msra.mxu0 0
    %3014 = vmatprep.subr.bf16.mxu0 0
    %3015 = vmatpush1.bf16.msra.mxu0 0
    %3016 = vmatprep.subr.bf16.mxu0 0
    %3017 = vmatpush1.bf16.msra.mxu0 0
    %3018 = vmatprep.subr.bf16.mxu0 0
    %3019 = vmatpush1.bf16.msra.mxu0 0
    %3020 = vmatprep.subr.bf16.mxu0 0
    %3021 = vmatpush1.bf16.msra.mxu0 0
    %3022 = vmatprep.mubr.bf16.mxu0 0
    %3023 = vmatmul.mubr.bf16.gmra.mrb[0].mxu0 %v2985
    %v3024 = vpop.f32.mrb[0].mxu0
    %v3025 = vadd.f32 0.0, %v3024
    %v3026 = vpop.f32.mrb[0].mxu0
    %v3027 = vpop.f32.mrb[0].mxu0
    %v3028 = vpop.f32.mrb[0].mxu0
    %3029 = vdwg.mxu0
    %v3031 = vunpack.c.l.s4 1983009808
    %v3032 = vunpack.c.0.s8 %v3031
    %v3033 = vlaneseq
    %v3034 = vshrl.u32 %v3033, 7
    %v3035 = vsub.s32 %v3032, %v3034
    %v3036 = vrot.slane %v2797, %v3035
    %3037 = vrot.lane.b32.xlu0 %v3036, 112
    %v3038 = vpop.permute.xlu0 %3037
    %v3040 = vunpack.c.l.s4 1983009808
    %v3041 = vunpack.c.0.s8 %v3040
    %v3042 = vlaneseq
    %v3043 = vshrl.u32 %v3042, 7
    %v3044 = vsub.s32 %v3041, %v3043
    %v3045 = vrot.slane %v2807, %v3044
    %3046 = vrot.lane.b32.xlu0 %v3045, 112
    %v3047 = vpop.permute.xlu0 %3046
    %v3049 = vsel %vm713, %v3038, 0
    %v3052 = vsel %vm713, %v3047, 0
    %3054 = vmatprep.subr.bf16.mxu0 0
    %3055 = vmatpush1.bf16.xpose.msra.mxu0 %v3052
    %3056 = vmatprep.subr.bf16.mxu0 0
    %3057 = vmatpush1.bf16.xpose.msra.mxu0 0
    %3058 = vmatprep.subr.bf16.mxu0 0
    %3059 = vmatpush1.bf16.xpose.msra.mxu0 0
    %3060 = vmatprep.subr.bf16.mxu0 0
    %3061 = vmatpush1.bf16.xpose.msra.mxu0 0
    %3062 = vmatprep.subr.bf16.mxu0 0
    %3063 = vmatpush1.bf16.xpose.msra.mxu0 0
    %3064 = vmatprep.subr.bf16.mxu0 0
    %3065 = vmatpush1.bf16.xpose.msra.mxu0 0
    %3066 = vmatprep.subr.bf16.mxu0 0
    %3067 = vmatpush1.bf16.xpose.msra.mxu0 0
    %3068 = vmatprep.subr.bf16.mxu0 0
    %3069 = vmatpush1.bf16.xpose.msra.mxu0 0
    %3070 = vmatprep.subr.bf16.mxu0 0
    %3071 = vmatpush1.bf16.xpose.msra.mxu0 0
    %3072 = vmatprep.subr.bf16.mxu0 0
    %3073 = vmatpush1.bf16.xpose.msra.mxu0 0
    %3074 = vmatprep.subr.bf16.mxu0 0
    %3075 = vmatpush1.bf16.xpose.msra.mxu0 0
    %3076 = vmatprep.subr.bf16.mxu0 0
    %3077 = vmatpush1.bf16.xpose.msra.mxu0 0
    %3078 = vmatprep.subr.bf16.mxu0 0
    %3079 = vmatpush1.bf16.xpose.msra.mxu0 0
    %3080 = vmatprep.subr.bf16.mxu0 0
    %3081 = vmatpush1.bf16.xpose.msra.mxu0 0
    %3082 = vmatprep.subr.bf16.mxu0 0
    %3083 = vmatpush1.bf16.xpose.msra.mxu0 0
    %3084 = vmatprep.subr.bf16.mxu0 0
    %3085 = vmatpush1.bf16.xpose.msra.mxu0 0
    %3086 = vmatprep.mubr.bf16.mxu0 0
    %3087 = vmatmul.mubr.bf16.gmra.mrb[0].mxu0 %v3049
    %v3088 = vpop.f32.mrb[0].mxu0
    %v3089 = vadd.f32 0.0, %v3088
    %v3090 = vpop.f32.mrb[0].mxu0
    %v3091 = vpop.f32.mrb[0].mxu0
    %v3092 = vpop.f32.mrb[0].mxu0
    %3093 = vdwg.mxu0
    %v3095 = vunpack.c.l.s4 1983009808
    %v3096 = vunpack.c.0.s8 %v3095
    %v3097 = vlaneseq
    %v3098 = vshrl.u32 %v3097, 7
    %v3099 = vsub.s32 %v3096, %v3098
    %v3100 = vrot.slane %v2798, %v3099
    %3101 = vrot.lane.b32.xlu0 %v3100, 112
    %v3102 = vpop.permute.xlu0 %3101
    %v3104 = vunpack.c.l.s4 1983009808
    %v3105 = vunpack.c.0.s8 %v3104
    %v3106 = vlaneseq
    %v3107 = vshrl.u32 %v3106, 7
    %v3108 = vsub.s32 %v3105, %v3107
    %v3109 = vrot.slane %v2808, %v3108
    %3110 = vrot.lane.b32.xlu0 %v3109, 112
    %v3111 = vpop.permute.xlu0 %3110
    %v3113 = vsel %vm713, %v3102, 0
    %v3116 = vsel %vm713, %v3111, 0
    %3118 = vmatprep.subr.bf16.mxu0 0
    %3119 = vmatpush1.bf16.xpose.msra.mxu0 %v3116
    %3120 = vmatprep.subr.bf16.mxu0 0
    %3121 = vmatpush1.bf16.xpose.msra.mxu0 0
    %3122 = vmatprep.subr.bf16.mxu0 0
    %3123 = vmatpush1.bf16.xpose.msra.mxu0 0
    %3124 = vmatprep.subr.bf16.mxu0 0
    %3125 = vmatpush1.bf16.xpose.msra.mxu0 0
    %3126 = vmatprep.subr.bf16.mxu0 0
    %3127 = vmatpush1.bf16.xpose.msra.mxu0 0
    %3128 = vmatprep.subr.bf16.mxu0 0
    %3129 = vmatpush1.bf16.xpose.msra.mxu0 0
    %3130 = vmatprep.subr.bf16.mxu0 0
    %3131 = vmatpush1.bf16.xpose.msra.mxu0 0
    %3132 = vmatprep.subr.bf16.mxu0 0
    %3133 = vmatpush1.bf16.xpose.msra.mxu0 0
    %3134 = vmatprep.subr.bf16.mxu0 0
    %3135 = vmatpush1.bf16.xpose.msra.mxu0 0
    %3136 = vmatprep.subr.bf16.mxu0 0
    %3137 = vmatpush1.bf16.xpose.msra.mxu0 0
    %3138 = vmatprep.subr.bf16.mxu0 0
    %3139 = vmatpush1.bf16.xpose.msra.mxu0 0
    %3140 = vmatprep.subr.bf16.mxu0 0
    %3141 = vmatpush1.bf16.xpose.msra.mxu0 0
    %3142 = vmatprep.subr.bf16.mxu0 0
    %3143 = vmatpush1.bf16.xpose.msra.mxu0 0
    %3144 = vmatprep.subr.bf16.mxu0 0
    %3145 = vmatpush1.bf16.xpose.msra.mxu0 0
    %3146 = vmatprep.subr.bf16.mxu0 0
    %3147 = vmatpush1.bf16.xpose.msra.mxu0 0
    %3148 = vmatprep.subr.bf16.mxu0 0
    %3149 = vmatpush1.bf16.xpose.msra.mxu0 0
    %3150 = vmatprep.mubr.bf16.mxu0 0
    %3151 = vmatmul.mubr.bf16.gmra.mrb[0].mxu0 %v3113
    %v3152 = vpop.f32.mrb[0].mxu0
    %v3153 = vadd.f32 0.0, %v3152
    %v3154 = vpop.f32.mrb[0].mxu0
    %v3155 = vpop.f32.mrb[0].mxu0
    %v3156 = vpop.f32.mrb[0].mxu0
    %3157 = vdwg.mxu0
    %v3158 = vsel %vm2911, %v3089, -inf
    %3159 = vmax.xlane.f32.xlu0 %v3158
    %v3160 = vpop.xlane.xlu0 %3159
    %v3161 = vsel %vm2911, %v3153, -inf
    %3162 = vmax.xlane.f32.xlu0 %v3161
    %v3163 = vpop.xlane.xlu0 %3162
    %v3164 = vsub.f32 %v3089, %v3160
    %v3165 = vsub.f32 %v3153, %v3163
    %v3166 = vmul.f32 %v3164, 1.442695
    %v3167 = vpow.pop %v3166
    %v3168 = vmul.f32 %v3165, 1.442695
    %v3169 = vpow.pop %v3168
    %v3170 = vsel %vm2911, %v3167, 0.0
    %3171 = vadd.xlane.f32.xlu0 %v3170
    %v3172 = vpop.xlane.xlu0 %3171
    %v3173 = vsel %vm2911, %v3169, 0.0
    %3174 = vadd.xlane.f32.xlu0 %v3173
    %v3175 = vpop.xlane.xlu0 %3174
    %v3176 = vrcp.pop %v3172
    %v3177 = vrcp.pop %v3175
    %v3178 = vmul.f32 %v3167, %v3176
    %v3179 = vmul.f32 %v3169, %v3177
    %v3180 = vpack.c.bf16 %v3178, %v3178
    %v3181 = vpack.c.bf16 %v3179, %v3179
    %v3183 = vunpack.c.l.s4 1983009808
    %v3184 = vunpack.c.0.s8 %v3183
    %v3185 = vlaneseq
    %v3186 = vshrl.u32 %v3185, 7
    %v3187 = vsub.s32 %v3184, %v3186
    %v3188 = vrot.slane %v2817, %v3187
    %3189 = vrot.lane.b32.xlu0 %v3188, 112
    %v3190 = vpop.permute.xlu0 %3189
    %v3192 = vsel %vm2936, %v3180, 0
    %v3195 = vsel %vm2940, %v3190, 0
    %3197 = vmatprep.subr.bf16.mxu0 0
    %3198 = vmatpush1.bf16.msra.mxu0 %v3195
    %3199 = vmatprep.subr.bf16.mxu0 0
    %3200 = vmatpush1.bf16.msra.mxu0 0
    %3201 = vmatprep.subr.bf16.mxu0 0
    %3202 = vmatpush1.bf16.msra.mxu0 0
    %3203 = vmatprep.subr.bf16.mxu0 0
    %3204 = vmatpush1.bf16.msra.mxu0 0
    %3205 = vmatprep.subr.bf16.mxu0 0
    %3206 = vmatpush1.bf16.msra.mxu0 0
    %3207 = vmatprep.subr.bf16.mxu0 0
    %3208 = vmatpush1.bf16.msra.mxu0 0
    %3209 = vmatprep.subr.bf16.mxu0 0
    %3210 = vmatpush1.bf16.msra.mxu0 0
    %3211 = vmatprep.subr.bf16.mxu0 0
    %3212 = vmatpush1.bf16.msra.mxu0 0
    %3213 = vmatprep.subr.bf16.mxu0 0
    %3214 = vmatpush1.bf16.msra.mxu0 0
    %3215 = vmatprep.subr.bf16.mxu0 0
    %3216 = vmatpush1.bf16.msra.mxu0 0
    %3217 = vmatprep.subr.bf16.mxu0 0
    %3218 = vmatpush1.bf16.msra.mxu0 0
    %3219 = vmatprep.subr.bf16.mxu0 0
    %3220 = vmatpush1.bf16.msra.mxu0 0
    %3221 = vmatprep.subr.bf16.mxu0 0
    %3222 = vmatpush1.bf16.msra.mxu0 0
    %3223 = vmatprep.subr.bf16.mxu0 0
    %3224 = vmatpush1.bf16.msra.mxu0 0
    %3225 = vmatprep.subr.bf16.mxu0 0
    %3226 = vmatpush1.bf16.msra.mxu0 0
    %3227 = vmatprep.subr.bf16.mxu0 0
    %3228 = vmatpush1.bf16.msra.mxu0 0
    %3229 = vmatprep.mubr.bf16.mxu0 0
    %3230 = vmatmul.mubr.bf16.gmra.mrb[0].mxu0 %v3192
    %v3231 = vpop.f32.mrb[0].mxu0
    %v3232 = vadd.f32 0.0, %v3231
    %v3233 = vpop.f32.mrb[0].mxu0
    %v3234 = vpop.f32.mrb[0].mxu0
    %v3235 = vpop.f32.mrb[0].mxu0
    %3236 = vdwg.mxu0
    %v3238 = vunpack.c.l.s4 1983009808
    %v3239 = vunpack.c.0.s8 %v3238
    %v3240 = vlaneseq
    %v3241 = vshrl.u32 %v3240, 7
    %v3242 = vsub.s32 %v3239, %v3241
    %v3243 = vrot.slane %v2818, %v3242
    %3244 = vrot.lane.b32.xlu0 %v3243, 112
    %v3245 = vpop.permute.xlu0 %3244
    %v3247 = vsel %vm2936, %v3181, 0
    %v3250 = vsel %vm2940, %v3245, 0
    %3252 = vmatprep.subr.bf16.mxu0 0
    %3253 = vmatpush1.bf16.msra.mxu0 %v3250
    %3254 = vmatprep.subr.bf16.mxu0 0
    %3255 = vmatpush1.bf16.msra.mxu0 0
    %3256 = vmatprep.subr.bf16.mxu0 0
    %3257 = vmatpush1.bf16.msra.mxu0 0
    %3258 = vmatprep.subr.bf16.mxu0 0
    %3259 = vmatpush1.bf16.msra.mxu0 0
    %3260 = vmatprep.subr.bf16.mxu0 0
    %3261 = vmatpush1.bf16.msra.mxu0 0
    %3262 = vmatprep.subr.bf16.mxu0 0
    %3263 = vmatpush1.bf16.msra.mxu0 0
    %3264 = vmatprep.subr.bf16.mxu0 0
    %3265 = vmatpush1.bf16.msra.mxu0 0
    %3266 = vmatprep.subr.bf16.mxu0 0
    %3267 = vmatpush1.bf16.msra.mxu0 0
    %3268 = vmatprep.subr.bf16.mxu0 0
    %3269 = vmatpush1.bf16.msra.mxu0 0
    %3270 = vmatprep.subr.bf16.mxu0 0
    %3271 = vmatpush1.bf16.msra.mxu0 0
    %3272 = vmatprep.subr.bf16.mxu0 0
    %3273 = vmatpush1.bf16.msra.mxu0 0
    %3274 = vmatprep.subr.bf16.mxu0 0
    %3275 = vmatpush1.bf16.msra.mxu0 0
    %3276 = vmatprep.subr.bf16.mxu0 0
    %3277 = vmatpush1.bf16.msra.mxu0 0
    %3278 = vmatprep.subr.bf16.mxu0 0
    %3279 = vmatpush1.bf16.msra.mxu0 0
    %3280 = vmatprep.subr.bf16.mxu0 0
    %3281 = vmatpush1.bf16.msra.mxu0 0
    %3282 = vmatprep.subr.bf16.mxu0 0
    %3283 = vmatpush1.bf16.msra.mxu0 0
    %3284 = vmatprep.mubr.bf16.mxu0 0
    %3285 = vmatmul.mubr.bf16.gmra.mrb[0].mxu0 %v3247
    %v3286 = vpop.f32.mrb[0].mxu0
    %v3287 = vadd.f32 0.0, %v3286
    %v3288 = vpop.f32.mrb[0].mxu0
    %v3289 = vpop.f32.mrb[0].mxu0
    %v3290 = vpop.f32.mrb[0].mxu0
    %3291 = vdwg.mxu0
    %3292 = vrot.lane.b32.xlu0 %v3036, 96
    %v3293 = vpop.permute.xlu0 %3292
    %3294 = vrot.lane.b32.xlu0 %v3045, 96
    %v3295 = vpop.permute.xlu0 %3294
    %v3297 = vsel %vm713, %v3293, 0
    %v3300 = vsel %vm713, %v3295, 0
    %3302 = vmatprep.subr.bf16.mxu0 0
    %3303 = vmatpush1.bf16.xpose.msra.mxu0 %v3300
    %3304 = vmatprep.subr.bf16.mxu0 0
    %3305 = vmatpush1.bf16.xpose.msra.mxu0 0
    %3306 = vmatprep.subr.bf16.mxu0 0
    %3307 = vmatpush1.bf16.xpose.msra.mxu0 0
    %3308 = vmatprep.subr.bf16.mxu0 0
    %3309 = vmatpush1.bf16.xpose.msra.mxu0 0
    %3310 = vmatprep.subr.bf16.mxu0 0
    %3311 = vmatpush1.bf16.xpose.msra.mxu0 0
    %3312 = vmatprep.subr.bf16.mxu0 0
    %3313 = vmatpush1.bf16.xpose.msra.mxu0 0
    %3314 = vmatprep.subr.bf16.mxu0 0
    %3315 = vmatpush1.bf16.xpose.msra.mxu0 0
    %3316 = vmatprep.subr.bf16.mxu0 0
    %3317 = vmatpush1.bf16.xpose.msra.mxu0 0
    %3318 = vmatprep.subr.bf16.mxu0 0
    %3319 = vmatpush1.bf16.xpose.msra.mxu0 0
    %3320 = vmatprep.subr.bf16.mxu0 0
    %3321 = vmatpush1.bf16.xpose.msra.mxu0 0
    %3322 = vmatprep.subr.bf16.mxu0 0
    %3323 = vmatpush1.bf16.xpose.msra.mxu0 0
    %3324 = vmatprep.subr.bf16.mxu0 0
    %3325 = vmatpush1.bf16.xpose.msra.mxu0 0
    %3326 = vmatprep.subr.bf16.mxu0 0
    %3327 = vmatpush1.bf16.xpose.msra.mxu0 0
    %3328 = vmatprep.subr.bf16.mxu0 0
    %3329 = vmatpush1.bf16.xpose.msra.mxu0 0
    %3330 = vmatprep.subr.bf16.mxu0 0
    %3331 = vmatpush1.bf16.xpose.msra.mxu0 0
    %3332 = vmatprep.subr.bf16.mxu0 0
    %3333 = vmatpush1.bf16.xpose.msra.mxu0 0
    %3334 = vmatprep.mubr.bf16.mxu0 0
    %3335 = vmatmul.mubr.bf16.gmra.mrb[0].mxu0 %v3297
    %v3336 = vpop.f32.mrb[0].mxu0
    %v3337 = vadd.f32 0.0, %v3336
    %v3338 = vpop.f32.mrb[0].mxu0
    %v3339 = vpop.f32.mrb[0].mxu0
    %v3340 = vpop.f32.mrb[0].mxu0
    %3341 = vdwg.mxu0
    %3342 = vrot.lane.b32.xlu0 %v3100, 96
    %v3343 = vpop.permute.xlu0 %3342
    %3344 = vrot.lane.b32.xlu0 %v3109, 96
    %v3345 = vpop.permute.xlu0 %3344
    %v3347 = vsel %vm713, %v3343, 0
    %v3350 = vsel %vm713, %v3345, 0
    %3352 = vmatprep.subr.bf16.mxu0 0
    %3353 = vmatpush1.bf16.xpose.msra.mxu0 %v3350
    %3354 = vmatprep.subr.bf16.mxu0 0
    %3355 = vmatpush1.bf16.xpose.msra.mxu0 0
    %3356 = vmatprep.subr.bf16.mxu0 0
    %3357 = vmatpush1.bf16.xpose.msra.mxu0 0
    %3358 = vmatprep.subr.bf16.mxu0 0
    %3359 = vmatpush1.bf16.xpose.msra.mxu0 0
    %3360 = vmatprep.subr.bf16.mxu0 0
    %3361 = vmatpush1.bf16.xpose.msra.mxu0 0
    %3362 = vmatprep.subr.bf16.mxu0 0
    %3363 = vmatpush1.bf16.xpose.msra.mxu0 0
    %3364 = vmatprep.subr.bf16.mxu0 0
    %3365 = vmatpush1.bf16.xpose.msra.mxu0 0
    %3366 = vmatprep.subr.bf16.mxu0 0
    %3367 = vmatpush1.bf16.xpose.msra.mxu0 0
    %3368 = vmatprep.subr.bf16.mxu0 0
    %3369 = vmatpush1.bf16.xpose.msra.mxu0 0
    %3370 = vmatprep.subr.bf16.mxu0 0
    %3371 = vmatpush1.bf16.xpose.msra.mxu0 0
    %3372 = vmatprep.subr.bf16.mxu0 0
    %3373 = vmatpush1.bf16.xpose.msra.mxu0 0
    %3374 = vmatprep.subr.bf16.mxu0 0
    %3375 = vmatpush1.bf16.xpose.msra.mxu0 0
    %3376 = vmatprep.subr.bf16.mxu0 0
    %3377 = vmatpush1.bf16.xpose.msra.mxu0 0
    %3378 = vmatprep.subr.bf16.mxu0 0
    %3379 = vmatpush1.bf16.xpose.msra.mxu0 0
    %3380 = vmatprep.subr.bf16.mxu0 0
    %3381 = vmatpush1.bf16.xpose.msra.mxu0 0
    %3382 = vmatprep.subr.bf16.mxu0 0
    %3383 = vmatpush1.bf16.xpose.msra.mxu0 0
    %3384 = vmatprep.mubr.bf16.mxu0 0
    %3385 = vmatmul.mubr.bf16.gmra.mrb[0].mxu0 %v3347
    %v3386 = vpop.f32.mrb[0].mxu0
    %v3387 = vadd.f32 0.0, %v3386
    %v3388 = vpop.f32.mrb[0].mxu0
    %v3389 = vpop.f32.mrb[0].mxu0
    %v3390 = vpop.f32.mrb[0].mxu0
    %3391 = vdwg.mxu0
    %v3392 = vsel %vm2911, %v3337, -inf
    %3393 = vmax.xlane.f32.xlu0 %v3392
    %v3394 = vpop.xlane.xlu0 %3393
    %v3395 = vsel %vm2911, %v3387, -inf
    %3396 = vmax.xlane.f32.xlu0 %v3395
    %v3397 = vpop.xlane.xlu0 %3396
    %v3398 = vsub.f32 %v3337, %v3394
    %v3399 = vsub.f32 %v3387, %v3397
    %v3400 = vmul.f32 %v3398, 1.442695
    %v3401 = vpow.pop %v3400
    %v3402 = vmul.f32 %v3399, 1.442695
    %v3403 = vpow.pop %v3402
    %v3404 = vsel %vm2911, %v3401, 0.0
    %3405 = vadd.xlane.f32.xlu0 %v3404
    %v3406 = vpop.xlane.xlu0 %3405
    %v3407 = vsel %vm2911, %v3403, 0.0
    %3408 = vadd.xlane.f32.xlu0 %v3407
    %v3409 = vpop.xlane.xlu0 %3408
    %v3410 = vrcp.pop %v3406
    %v3411 = vrcp.pop %v3409
    %v3412 = vmul.f32 %v3401, %v3410
    %v3413 = vmul.f32 %v3403, %v3411
    %v3414 = vpack.c.bf16 %v3412, %v3412
    %v3415 = vpack.c.bf16 %v3413, %v3413
    %3416 = vrot.lane.b32.xlu0 %v3188, 96
    %v3417 = vpop.permute.xlu0 %3416
    %v3419 = vsel %vm2936, %v3414, 0
    %v3422 = vsel %vm2940, %v3417, 0
    %3424 = vmatprep.subr.bf16.mxu0 0
    %3425 = vmatpush1.bf16.msra.mxu0 %v3422
    %3426 = vmatprep.subr.bf16.mxu0 0
    %3427 = vmatpush1.bf16.msra.mxu0 0
    %3428 = vmatprep.subr.bf16.mxu0 0
    %3429 = vmatpush1.bf16.msra.mxu0 0
    %3430 = vmatprep.subr.bf16.mxu0 0
    %3431 = vmatpush1.bf16.msra.mxu0 0
    %3432 = vmatprep.subr.bf16.mxu0 0
    %3433 = vmatpush1.bf16.msra.mxu0 0
    %3434 = vmatprep.subr.bf16.mxu0 0
    %3435 = vmatpush1.bf16.msra.mxu0 0
    %3436 = vmatprep.subr.bf16.mxu0 0
    %3437 = vmatpush1.bf16.msra.mxu0 0
    %3438 = vmatprep.subr.bf16.mxu0 0
    %3439 = vmatpush1.bf16.msra.mxu0 0
    %3440 = vmatprep.subr.bf16.mxu0 0
    %3441 = vmatpush1.bf16.msra.mxu0 0
    %3442 = vmatprep.subr.bf16.mxu0 0
    %3443 = vmatpush1.bf16.msra.mxu0 0
    %3444 = vmatprep.subr.bf16.mxu0 0
    %3445 = vmatpush1.bf16.msra.mxu0 0
    %3446 = vmatprep.subr.bf16.mxu0 0
    %3447 = vmatpush1.bf16.msra.mxu0 0
    %3448 = vmatprep.subr.bf16.mxu0 0
    %3449 = vmatpush1.bf16.msra.mxu0 0
    %3450 = vmatprep.subr.bf16.mxu0 0
    %3451 = vmatpush1.bf16.msra.mxu0 0
    %3452 = vmatprep.subr.bf16.mxu0 0
    %3453 = vmatpush1.bf16.msra.mxu0 0
    %3454 = vmatprep.subr.bf16.mxu0 0
    %3455 = vmatpush1.bf16.msra.mxu0 0
    %3456 = vmatprep.mubr.bf16.mxu0 0
    %3457 = vmatmul.mubr.bf16.gmra.mrb[0].mxu0 %v3419
    %v3458 = vpop.f32.mrb[0].mxu0
    %v3459 = vadd.f32 0.0, %v3458
    %v3460 = vpop.f32.mrb[0].mxu0
    %v3461 = vpop.f32.mrb[0].mxu0
    %v3462 = vpop.f32.mrb[0].mxu0
    %3463 = vdwg.mxu0
    %3464 = vrot.lane.b32.xlu0 %v3243, 96
    %v3465 = vpop.permute.xlu0 %3464
    %v3467 = vsel %vm2936, %v3415, 0
    %v3470 = vsel %vm2940, %v3465, 0
    %3472 = vmatprep.subr.bf16.mxu0 0
    %3473 = vmatpush1.bf16.msra.mxu0 %v3470
    %3474 = vmatprep.subr.bf16.mxu0 0
    %3475 = vmatpush1.bf16.msra.mxu0 0
    %3476 = vmatprep.subr.bf16.mxu0 0
    %3477 = vmatpush1.bf16.msra.mxu0 0
    %3478 = vmatprep.subr.bf16.mxu0 0
    %3479 = vmatpush1.bf16.msra.mxu0 0
    %3480 = vmatprep.subr.bf16.mxu0 0
    %3481 = vmatpush1.bf16.msra.mxu0 0
    %3482 = vmatprep.subr.bf16.mxu0 0
    %3483 = vmatpush1.bf16.msra.mxu0 0
    %3484 = vmatprep.subr.bf16.mxu0 0
    %3485 = vmatpush1.bf16.msra.mxu0 0
    %3486 = vmatprep.subr.bf16.mxu0 0
    %3487 = vmatpush1.bf16.msra.mxu0 0
    %3488 = vmatprep.subr.bf16.mxu0 0
    %3489 = vmatpush1.bf16.msra.mxu0 0
    %3490 = vmatprep.subr.bf16.mxu0 0
    %3491 = vmatpush1.bf16.msra.mxu0 0
    %3492 = vmatprep.subr.bf16.mxu0 0
    %3493 = vmatpush1.bf16.msra.mxu0 0
    %3494 = vmatprep.subr.bf16.mxu0 0
    %3495 = vmatpush1.bf16.msra.mxu0 0
    %3496 = vmatprep.subr.bf16.mxu0 0
    %3497 = vmatpush1.bf16.msra.mxu0 0
    %3498 = vmatprep.subr.bf16.mxu0 0
    %3499 = vmatpush1.bf16.msra.mxu0 0
    %3500 = vmatprep.subr.bf16.mxu0 0
    %3501 = vmatpush1.bf16.msra.mxu0 0
    %3502 = vmatprep.subr.bf16.mxu0 0
    %3503 = vmatpush1.bf16.msra.mxu0 0
    %3504 = vmatprep.mubr.bf16.mxu0 0
    %3505 = vmatmul.mubr.bf16.gmra.mrb[0].mxu0 %v3467
    %v3506 = vpop.f32.mrb[0].mxu0
    %v3507 = vadd.f32 0.0, %v3506
    %v3508 = vpop.f32.mrb[0].mxu0
    %v3509 = vpop.f32.mrb[0].mxu0
    %v3510 = vpop.f32.mrb[0].mxu0
    %3511 = vdwg.mxu0
    %3512 = vrot.lane.b32.xlu0 %v3036, 80
    %v3513 = vpop.permute.xlu0 %3512
    %3514 = vrot.lane.b32.xlu0 %v3045, 80
    %v3515 = vpop.permute.xlu0 %3514
    %v3517 = vsel %vm713, %v3513, 0
    %v3520 = vsel %vm713, %v3515, 0
    %3522 = vmatprep.subr.bf16.mxu0 0
    %3523 = vmatpush1.bf16.xpose.msra.mxu0 %v3520
    %3524 = vmatprep.subr.bf16.mxu0 0
    %3525 = vmatpush1.bf16.xpose.msra.mxu0 0
    %3526 = vmatprep.subr.bf16.mxu0 0
    %3527 = vmatpush1.bf16.xpose.msra.mxu0 0
    %3528 = vmatprep.subr.bf16.mxu0 0
    %3529 = vmatpush1.bf16.xpose.msra.mxu0 0
    %3530 = vmatprep.subr.bf16.mxu0 0
    %3531 = vmatpush1.bf16.xpose.msra.mxu0 0
    %3532 = vmatprep.subr.bf16.mxu0 0
    %3533 = vmatpush1.bf16.xpose.msra.mxu0 0
    %3534 = vmatprep.subr.bf16.mxu0 0
    %3535 = vmatpush1.bf16.xpose.msra.mxu0 0
    %3536 = vmatprep.subr.bf16.mxu0 0
    %3537 = vmatpush1.bf16.xpose.msra.mxu0 0
    %3538 = vmatprep.subr.bf16.mxu0 0
    %3539 = vmatpush1.bf16.xpose.msra.mxu0 0
    %3540 = vmatprep.subr.bf16.mxu0 0
    %3541 = vmatpush1.bf16.xpose.msra.mxu0 0
    %3542 = vmatprep.subr.bf16.mxu0 0
    %3543 = vmatpush1.bf16.xpose.msra.mxu0 0
    %3544 = vmatprep.subr.bf16.mxu0 0
    %3545 = vmatpush1.bf16.xpose.msra.mxu0 0
    %3546 = vmatprep.subr.bf16.mxu0 0
    %3547 = vmatpush1.bf16.xpose.msra.mxu0 0
    %3548 = vmatprep.subr.bf16.mxu0 0
    %3549 = vmatpush1.bf16.xpose.msra.mxu0 0
    %3550 = vmatprep.subr.bf16.mxu0 0
    %3551 = vmatpush1.bf16.xpose.msra.mxu0 0
    %3552 = vmatprep.subr.bf16.mxu0 0
    %3553 = vmatpush1.bf16.xpose.msra.mxu0 0
    %3554 = vmatprep.mubr.bf16.mxu0 0
    %3555 = vmatmul.mubr.bf16.gmra.mrb[0].mxu0 %v3517
    %v3556 = vpop.f32.mrb[0].mxu0
    %v3557 = vadd.f32 0.0, %v3556
    %v3558 = vpop.f32.mrb[0].mxu0
    %v3559 = vpop.f32.mrb[0].mxu0
    %v3560 = vpop.f32.mrb[0].mxu0
    %3561 = vdwg.mxu0
    %3562 = vrot.lane.b32.xlu0 %v3100, 80
    %v3563 = vpop.permute.xlu0 %3562
    %3564 = vrot.lane.b32.xlu0 %v3109, 80
    %v3565 = vpop.permute.xlu0 %3564
    %v3567 = vsel %vm713, %v3563, 0
    %v3570 = vsel %vm713, %v3565, 0
    %3572 = vmatprep.subr.bf16.mxu0 0
    %3573 = vmatpush1.bf16.xpose.msra.mxu0 %v3570
    %3574 = vmatprep.subr.bf16.mxu0 0
    %3575 = vmatpush1.bf16.xpose.msra.mxu0 0
    %3576 = vmatprep.subr.bf16.mxu0 0
    %3577 = vmatpush1.bf16.xpose.msra.mxu0 0
    %3578 = vmatprep.subr.bf16.mxu0 0
    %3579 = vmatpush1.bf16.xpose.msra.mxu0 0
    %3580 = vmatprep.subr.bf16.mxu0 0
    %3581 = vmatpush1.bf16.xpose.msra.mxu0 0
    %3582 = vmatprep.subr.bf16.mxu0 0
    %3583 = vmatpush1.bf16.xpose.msra.mxu0 0
    %3584 = vmatprep.subr.bf16.mxu0 0
    %3585 = vmatpush1.bf16.xpose.msra.mxu0 0
    %3586 = vmatprep.subr.bf16.mxu0 0
    %3587 = vmatpush1.bf16.xpose.msra.mxu0 0
    %3588 = vmatprep.subr.bf16.mxu0 0
    %3589 = vmatpush1.bf16.xpose.msra.mxu0 0
    %3590 = vmatprep.subr.bf16.mxu0 0
    %3591 = vmatpush1.bf16.xpose.msra.mxu0 0
    %3592 = vmatprep.subr.bf16.mxu0 0
    %3593 = vmatpush1.bf16.xpose.msra.mxu0 0
    %3594 = vmatprep.subr.bf16.mxu0 0
    %3595 = vmatpush1.bf16.xpose.msra.mxu0 0
    %3596 = vmatprep.subr.bf16.mxu0 0
    %3597 = vmatpush1.bf16.xpose.msra.mxu0 0
    %3598 = vmatprep.subr.bf16.mxu0 0
    %3599 = vmatpush1.bf16.xpose.msra.mxu0 0
    %3600 = vmatprep.subr.bf16.mxu0 0
    %3601 = vmatpush1.bf16.xpose.msra.mxu0 0
    %3602 = vmatprep.subr.bf16.mxu0 0
    %3603 = vmatpush1.bf16.xpose.msra.mxu0 0
    %3604 = vmatprep.mubr.bf16.mxu0 0
    %3605 = vmatmul.mubr.bf16.gmra.mrb[0].mxu0 %v3567
    %v3606 = vpop.f32.mrb[0].mxu0
    %v3607 = vadd.f32 0.0, %v3606
    %v3608 = vpop.f32.mrb[0].mxu0
    %v3609 = vpop.f32.mrb[0].mxu0
    %v3610 = vpop.f32.mrb[0].mxu0
    %3611 = vdwg.mxu0
    %v3612 = vsel %vm2911, %v3557, -inf
    %3613 = vmax.xlane.f32.xlu0 %v3612
    %v3614 = vpop.xlane.xlu0 %3613
    %v3615 = vsel %vm2911, %v3607, -inf
    %3616 = vmax.xlane.f32.xlu0 %v3615
    %v3617 = vpop.xlane.xlu0 %3616
    %v3618 = vsub.f32 %v3557, %v3614
    %v3619 = vsub.f32 %v3607, %v3617
    %v3620 = vmul.f32 %v3618, 1.442695
    %v3621 = vpow.pop %v3620
    %v3622 = vmul.f32 %v3619, 1.442695
    %v3623 = vpow.pop %v3622
    %v3624 = vsel %vm2911, %v3621, 0.0
    %3625 = vadd.xlane.f32.xlu0 %v3624
    %v3626 = vpop.xlane.xlu0 %3625
    %v3627 = vsel %vm2911, %v3623, 0.0
    %3628 = vadd.xlane.f32.xlu0 %v3627
    %v3629 = vpop.xlane.xlu0 %3628
    %v3630 = vrcp.pop %v3626
    %v3631 = vrcp.pop %v3629
    %v3632 = vmul.f32 %v3621, %v3630
    %v3633 = vmul.f32 %v3623, %v3631
    %v3634 = vpack.c.bf16 %v3632, %v3632
    %v3635 = vpack.c.bf16 %v3633, %v3633
    %3636 = vrot.lane.b32.xlu0 %v3188, 80
    %v3637 = vpop.permute.xlu0 %3636
    %v3639 = vsel %vm2936, %v3634, 0
    %v3642 = vsel %vm2940, %v3637, 0
    %3644 = vmatprep.subr.bf16.mxu0 0
    %3645 = vmatpush1.bf16.msra.mxu0 %v3642
    %3646 = vmatprep.subr.bf16.mxu0 0
    %3647 = vmatpush1.bf16.msra.mxu0 0
    %3648 = vmatprep.subr.bf16.mxu0 0
    %3649 = vmatpush1.bf16.msra.mxu0 0
    %3650 = vmatprep.subr.bf16.mxu0 0
    %3651 = vmatpush1.bf16.msra.mxu0 0
    %3652 = vmatprep.subr.bf16.mxu0 0
    %3653 = vmatpush1.bf16.msra.mxu0 0
    %3654 = vmatprep.subr.bf16.mxu0 0
    %3655 = vmatpush1.bf16.msra.mxu0 0
    %3656 = vmatprep.subr.bf16.mxu0 0
    %3657 = vmatpush1.bf16.msra.mxu0 0
    %3658 = vmatprep.subr.bf16.mxu0 0
    %3659 = vmatpush1.bf16.msra.mxu0 0
    %3660 = vmatprep.subr.bf16.mxu0 0
    %3661 = vmatpush1.bf16.msra.mxu0 0
    %3662 = vmatprep.subr.bf16.mxu0 0
    %3663 = vmatpush1.bf16.msra.mxu0 0
    %3664 = vmatprep.subr.bf16.mxu0 0
    %3665 = vmatpush1.bf16.msra.mxu0 0
    %3666 = vmatprep.subr.bf16.mxu0 0
    %3667 = vmatpush1.bf16.msra.mxu0 0
    %3668 = vmatprep.subr.bf16.mxu0 0
    %3669 = vmatpush1.bf16.msra.mxu0 0
    %3670 = vmatprep.subr.bf16.mxu0 0
    %3671 = vmatpush1.bf16.msra.mxu0 0
    %3672 = vmatprep.subr.bf16.mxu0 0
    %3673 = vmatpush1.bf16.msra.mxu0 0
    %3674 = vmatprep.subr.bf16.mxu0 0
    %3675 = vmatpush1.bf16.msra.mxu0 0
    %3676 = vmatprep.mubr.bf16.mxu0 0
    %3677 = vmatmul.mubr.bf16.gmra.mrb[0].mxu0 %v3639
    %v3678 = vpop.f32.mrb[0].mxu0
    %v3679 = vadd.f32 0.0, %v3678
    %v3680 = vpop.f32.mrb[0].mxu0
    %v3681 = vpop.f32.mrb[0].mxu0
    %v3682 = vpop.f32.mrb[0].mxu0
    %3683 = vdwg.mxu0
    %3684 = vrot.lane.b32.xlu0 %v3243, 80
    %v3685 = vpop.permute.xlu0 %3684
    %v3687 = vsel %vm2936, %v3635, 0
    %v3690 = vsel %vm2940, %v3685, 0
    %3692 = vmatprep.subr.bf16.mxu0 0
    %3693 = vmatpush1.bf16.msra.mxu0 %v3690
    %3694 = vmatprep.subr.bf16.mxu0 0
    %3695 = vmatpush1.bf16.msra.mxu0 0
    %3696 = vmatprep.subr.bf16.mxu0 0
    %3697 = vmatpush1.bf16.msra.mxu0 0
    %3698 = vmatprep.subr.bf16.mxu0 0
    %3699 = vmatpush1.bf16.msra.mxu0 0
    %3700 = vmatprep.subr.bf16.mxu0 0
    %3701 = vmatpush1.bf16.msra.mxu0 0
    %3702 = vmatprep.subr.bf16.mxu0 0
    %3703 = vmatpush1.bf16.msra.mxu0 0
    %3704 = vmatprep.subr.bf16.mxu0 0
    %3705 = vmatpush1.bf16.msra.mxu0 0
    %3706 = vmatprep.subr.bf16.mxu0 0
    %3707 = vmatpush1.bf16.msra.mxu0 0
    %3708 = vmatprep.subr.bf16.mxu0 0
    %3709 = vmatpush1.bf16.msra.mxu0 0
    %3710 = vmatprep.subr.bf16.mxu0 0
    %3711 = vmatpush1.bf16.msra.mxu0 0
    %3712 = vmatprep.subr.bf16.mxu0 0
    %3713 = vmatpush1.bf16.msra.mxu0 0
    %3714 = vmatprep.subr.bf16.mxu0 0
    %3715 = vmatpush1.bf16.msra.mxu0 0
    %3716 = vmatprep.subr.bf16.mxu0 0
    %3717 = vmatpush1.bf16.msra.mxu0 0
    %3718 = vmatprep.subr.bf16.mxu0 0
    %3719 = vmatpush1.bf16.msra.mxu0 0
    %3720 = vmatprep.subr.bf16.mxu0 0
    %3721 = vmatpush1.bf16.msra.mxu0 0
    %3722 = vmatprep.subr.bf16.mxu0 0
    %3723 = vmatpush1.bf16.msra.mxu0 0
    %3724 = vmatprep.mubr.bf16.mxu0 0
    %3725 = vmatmul.mubr.bf16.gmra.mrb[0].mxu0 %v3687
    %v3726 = vpop.f32.mrb[0].mxu0
    %v3727 = vadd.f32 0.0, %v3726
    %v3728 = vpop.f32.mrb[0].mxu0
    %v3729 = vpop.f32.mrb[0].mxu0
    %v3730 = vpop.f32.mrb[0].mxu0
    %3731 = vdwg.mxu0
    %3732 = vrot.lane.b32.xlu0 %v3036, 64
    %v3733 = vpop.permute.xlu0 %3732
    %3734 = vrot.lane.b32.xlu0 %v3045, 64
    %v3735 = vpop.permute.xlu0 %3734
    %v3737 = vsel %vm713, %v3733, 0
    %v3740 = vsel %vm713, %v3735, 0
    %3742 = vmatprep.subr.bf16.mxu0 0
    %3743 = vmatpush1.bf16.xpose.msra.mxu0 %v3740
    %3744 = vmatprep.subr.bf16.mxu0 0
    %3745 = vmatpush1.bf16.xpose.msra.mxu0 0
    %3746 = vmatprep.subr.bf16.mxu0 0
    %3747 = vmatpush1.bf16.xpose.msra.mxu0 0
    %3748 = vmatprep.subr.bf16.mxu0 0
    %3749 = vmatpush1.bf16.xpose.msra.mxu0 0
    %3750 = vmatprep.subr.bf16.mxu0 0
    %3751 = vmatpush1.bf16.xpose.msra.mxu0 0
    %3752 = vmatprep.subr.bf16.mxu0 0
    %3753 = vmatpush1.bf16.xpose.msra.mxu0 0
    %3754 = vmatprep.subr.bf16.mxu0 0
    %3755 = vmatpush1.bf16.xpose.msra.mxu0 0
    %3756 = vmatprep.subr.bf16.mxu0 0
    %3757 = vmatpush1.bf16.xpose.msra.mxu0 0
    %3758 = vmatprep.subr.bf16.mxu0 0
    %3759 = vmatpush1.bf16.xpose.msra.mxu0 0
    %3760 = vmatprep.subr.bf16.mxu0 0
    %3761 = vmatpush1.bf16.xpose.msra.mxu0 0
    %3762 = vmatprep.subr.bf16.mxu0 0
    %3763 = vmatpush1.bf16.xpose.msra.mxu0 0
    %3764 = vmatprep.subr.bf16.mxu0 0
    %3765 = vmatpush1.bf16.xpose.msra.mxu0 0
    %3766 = vmatprep.subr.bf16.mxu0 0
    %3767 = vmatpush1.bf16.xpose.msra.mxu0 0
    %3768 = vmatprep.subr.bf16.mxu0 0
    %3769 = vmatpush1.bf16.xpose.msra.mxu0 0
    %3770 = vmatprep.subr.bf16.mxu0 0
    %3771 = vmatpush1.bf16.xpose.msra.mxu0 0
    %3772 = vmatprep.subr.bf16.mxu0 0
    %3773 = vmatpush1.bf16.xpose.msra.mxu0 0
    %3774 = vmatprep.mubr.bf16.mxu0 0
    %3775 = vmatmul.mubr.bf16.gmra.mrb[0].mxu0 %v3737
    %v3776 = vpop.f32.mrb[0].mxu0
    %v3777 = vadd.f32 0.0, %v3776
    %v3778 = vpop.f32.mrb[0].mxu0
    %v3779 = vpop.f32.mrb[0].mxu0
    %v3780 = vpop.f32.mrb[0].mxu0
    %3781 = vdwg.mxu0
    %3782 = vrot.lane.b32.xlu0 %v3100, 64
    %v3783 = vpop.permute.xlu0 %3782
    %3784 = vrot.lane.b32.xlu0 %v3109, 64
    %v3785 = vpop.permute.xlu0 %3784
    %v3787 = vsel %vm713, %v3783, 0
    %v3790 = vsel %vm713, %v3785, 0
    %3792 = vmatprep.subr.bf16.mxu0 0
    %3793 = vmatpush1.bf16.xpose.msra.mxu0 %v3790
    %3794 = vmatprep.subr.bf16.mxu0 0
    %3795 = vmatpush1.bf16.xpose.msra.mxu0 0
    %3796 = vmatprep.subr.bf16.mxu0 0
    %3797 = vmatpush1.bf16.xpose.msra.mxu0 0
    %3798 = vmatprep.subr.bf16.mxu0 0
    %3799 = vmatpush1.bf16.xpose.msra.mxu0 0
    %3800 = vmatprep.subr.bf16.mxu0 0
    %3801 = vmatpush1.bf16.xpose.msra.mxu0 0
    %3802 = vmatprep.subr.bf16.mxu0 0
    %3803 = vmatpush1.bf16.xpose.msra.mxu0 0
    %3804 = vmatprep.subr.bf16.mxu0 0
    %3805 = vmatpush1.bf16.xpose.msra.mxu0 0
    %3806 = vmatprep.subr.bf16.mxu0 0
    %3807 = vmatpush1.bf16.xpose.msra.mxu0 0
    %3808 = vmatprep.subr.bf16.mxu0 0
    %3809 = vmatpush1.bf16.xpose.msra.mxu0 0
    %3810 = vmatprep.subr.bf16.mxu0 0
    %3811 = vmatpush1.bf16.xpose.msra.mxu0 0
    %3812 = vmatprep.subr.bf16.mxu0 0
    %3813 = vmatpush1.bf16.xpose.msra.mxu0 0
    %3814 = vmatprep.subr.bf16.mxu0 0
    %3815 = vmatpush1.bf16.xpose.msra.mxu0 0
    %3816 = vmatprep.subr.bf16.mxu0 0
    %3817 = vmatpush1.bf16.xpose.msra.mxu0 0
    %3818 = vmatprep.subr.bf16.mxu0 0
    %3819 = vmatpush1.bf16.xpose.msra.mxu0 0
    %3820 = vmatprep.subr.bf16.mxu0 0
    %3821 = vmatpush1.bf16.xpose.msra.mxu0 0
    %3822 = vmatprep.subr.bf16.mxu0 0
    %3823 = vmatpush1.bf16.xpose.msra.mxu0 0
    %3824 = vmatprep.mubr.bf16.mxu0 0
    %3825 = vmatmul.mubr.bf16.gmra.mrb[0].mxu0 %v3787
    %v3826 = vpop.f32.mrb[0].mxu0
    %v3827 = vadd.f32 0.0, %v3826
    %v3828 = vpop.f32.mrb[0].mxu0
    %v3829 = vpop.f32.mrb[0].mxu0
    %v3830 = vpop.f32.mrb[0].mxu0
    %3831 = vdwg.mxu0
    %v3832 = vsel %vm2911, %v3777, -inf
    %3833 = vmax.xlane.f32.xlu0 %v3832
    %v3834 = vpop.xlane.xlu0 %3833
    %v3835 = vsel %vm2911, %v3827, -inf
    %3836 = vmax.xlane.f32.xlu0 %v3835
    %v3837 = vpop.xlane.xlu0 %3836
    %v3838 = vsub.f32 %v3777, %v3834
    %v3839 = vsub.f32 %v3827, %v3837
    %v3840 = vmul.f32 %v3838, 1.442695
    %v3841 = vpow.pop %v3840
    %v3842 = vmul.f32 %v3839, 1.442695
    %v3843 = vpow.pop %v3842
    %v3844 = vsel %vm2911, %v3841, 0.0
    %3845 = vadd.xlane.f32.xlu0 %v3844
    %v3846 = vpop.xlane.xlu0 %3845
    %v3847 = vsel %vm2911, %v3843, 0.0
    %3848 = vadd.xlane.f32.xlu0 %v3847
    %v3849 = vpop.xlane.xlu0 %3848
    %v3850 = vrcp.pop %v3846
    %v3851 = vrcp.pop %v3849
    %v3852 = vmul.f32 %v3841, %v3850
    %v3853 = vmul.f32 %v3843, %v3851
    %v3854 = vpack.c.bf16 %v3852, %v3852
    %v3855 = vpack.c.bf16 %v3853, %v3853
    %3856 = vrot.lane.b32.xlu0 %v3188, 64
    %v3857 = vpop.permute.xlu0 %3856
    %v3859 = vsel %vm2936, %v3854, 0
    %v3862 = vsel %vm2940, %v3857, 0
    %3864 = vmatprep.subr.bf16.mxu0 0
    %3865 = vmatpush1.bf16.msra.mxu0 %v3862
    %3866 = vmatprep.subr.bf16.mxu0 0
    %3867 = vmatpush1.bf16.msra.mxu0 0
    %3868 = vmatprep.subr.bf16.mxu0 0
    %3869 = vmatpush1.bf16.msra.mxu0 0
    %3870 = vmatprep.subr.bf16.mxu0 0
    %3871 = vmatpush1.bf16.msra.mxu0 0
    %3872 = vmatprep.subr.bf16.mxu0 0
    %3873 = vmatpush1.bf16.msra.mxu0 0
    %3874 = vmatprep.subr.bf16.mxu0 0
    %3875 = vmatpush1.bf16.msra.mxu0 0
    %3876 = vmatprep.subr.bf16.mxu0 0
    %3877 = vmatpush1.bf16.msra.mxu0 0
    %3878 = vmatprep.subr.bf16.mxu0 0
    %3879 = vmatpush1.bf16.msra.mxu0 0
    %3880 = vmatprep.subr.bf16.mxu0 0
    %3881 = vmatpush1.bf16.msra.mxu0 0
    %3882 = vmatprep.subr.bf16.mxu0 0
    %3883 = vmatpush1.bf16.msra.mxu0 0
    %3884 = vmatprep.subr.bf16.mxu0 0
    %3885 = vmatpush1.bf16.msra.mxu0 0
    %3886 = vmatprep.subr.bf16.mxu0 0
    %3887 = vmatpush1.bf16.msra.mxu0 0
    %3888 = vmatprep.subr.bf16.mxu0 0
    %3889 = vmatpush1.bf16.msra.mxu0 0
    %3890 = vmatprep.subr.bf16.mxu0 0
    %3891 = vmatpush1.bf16.msra.mxu0 0
    %3892 = vmatprep.subr.bf16.mxu0 0
    %3893 = vmatpush1.bf16.msra.mxu0 0
    %3894 = vmatprep.subr.bf16.mxu0 0
    %3895 = vmatpush1.bf16.msra.mxu0 0
    %3896 = vmatprep.mubr.bf16.mxu0 0
    %3897 = vmatmul.mubr.bf16.gmra.mrb[0].mxu0 %v3859
    %v3898 = vpop.f32.mrb[0].mxu0
    %v3899 = vadd.f32 0.0, %v3898
    %v3900 = vpop.f32.mrb[0].mxu0
    %v3901 = vpop.f32.mrb[0].mxu0
    %v3902 = vpop.f32.mrb[0].mxu0
    %3903 = vdwg.mxu0
    %3904 = vrot.lane.b32.xlu0 %v3243, 64
    %v3905 = vpop.permute.xlu0 %3904
    %v3907 = vsel %vm2936, %v3855, 0
    %v3910 = vsel %vm2940, %v3905, 0
    %3912 = vmatprep.subr.bf16.mxu0 0
    %3913 = vmatpush1.bf16.msra.mxu0 %v3910
    %3914 = vmatprep.subr.bf16.mxu0 0
    %3915 = vmatpush1.bf16.msra.mxu0 0
    %3916 = vmatprep.subr.bf16.mxu0 0
    %3917 = vmatpush1.bf16.msra.mxu0 0
    %3918 = vmatprep.subr.bf16.mxu0 0
    %3919 = vmatpush1.bf16.msra.mxu0 0
    %3920 = vmatprep.subr.bf16.mxu0 0
    %3921 = vmatpush1.bf16.msra.mxu0 0
    %3922 = vmatprep.subr.bf16.mxu0 0
    %3923 = vmatpush1.bf16.msra.mxu0 0
    %3924 = vmatprep.subr.bf16.mxu0 0
    %3925 = vmatpush1.bf16.msra.mxu0 0
    %3926 = vmatprep.subr.bf16.mxu0 0
    %3927 = vmatpush1.bf16.msra.mxu0 0
    %3928 = vmatprep.subr.bf16.mxu0 0
    %3929 = vmatpush1.bf16.msra.mxu0 0
    %3930 = vmatprep.subr.bf16.mxu0 0
    %3931 = vmatpush1.bf16.msra.mxu0 0
    %3932 = vmatprep.subr.bf16.mxu0 0
    %3933 = vmatpush1.bf16.msra.mxu0 0
    %3934 = vmatprep.subr.bf16.mxu0 0
    %3935 = vmatpush1.bf16.msra.mxu0 0
    %3936 = vmatprep.subr.bf16.mxu0 0
    %3937 = vmatpush1.bf16.msra.mxu0 0
    %3938 = vmatprep.subr.bf16.mxu0 0
    %3939 = vmatpush1.bf16.msra.mxu0 0
    %3940 = vmatprep.subr.bf16.mxu0 0
    %3941 = vmatpush1.bf16.msra.mxu0 0
    %3942 = vmatprep.subr.bf16.mxu0 0
    %3943 = vmatpush1.bf16.msra.mxu0 0
    %3944 = vmatprep.mubr.bf16.mxu0 0
    %3945 = vmatmul.mubr.bf16.gmra.mrb[0].mxu0 %v3907
    %v3946 = vpop.f32.mrb[0].mxu0
    %v3947 = vadd.f32 0.0, %v3946
    %v3948 = vpop.f32.mrb[0].mxu0
    %v3949 = vpop.f32.mrb[0].mxu0
    %v3950 = vpop.f32.mrb[0].mxu0
    %3951 = vdwg.mxu0
    %3952 = vrot.lane.b32.xlu0 %v3036, 48
    %v3953 = vpop.permute.xlu0 %3952
    %3954 = vrot.lane.b32.xlu0 %v3045, 48
    %v3955 = vpop.permute.xlu0 %3954
    %v3957 = vsel %vm713, %v3953, 0
    %v3960 = vsel %vm713, %v3955, 0
    %3962 = vmatprep.subr.bf16.mxu0 0
    %3963 = vmatpush1.bf16.xpose.msra.mxu0 %v3960
    %3964 = vmatprep.subr.bf16.mxu0 0
    %3965 = vmatpush1.bf16.xpose.msra.mxu0 0
    %3966 = vmatprep.subr.bf16.mxu0 0
    %3967 = vmatpush1.bf16.xpose.msra.mxu0 0
    %3968 = vmatprep.subr.bf16.mxu0 0
    %3969 = vmatpush1.bf16.xpose.msra.mxu0 0
    %3970 = vmatprep.subr.bf16.mxu0 0
    %3971 = vmatpush1.bf16.xpose.msra.mxu0 0
    %3972 = vmatprep.subr.bf16.mxu0 0
    %3973 = vmatpush1.bf16.xpose.msra.mxu0 0
    %3974 = vmatprep.subr.bf16.mxu0 0
    %3975 = vmatpush1.bf16.xpose.msra.mxu0 0
    %3976 = vmatprep.subr.bf16.mxu0 0
    %3977 = vmatpush1.bf16.xpose.msra.mxu0 0
    %3978 = vmatprep.subr.bf16.mxu0 0
    %3979 = vmatpush1.bf16.xpose.msra.mxu0 0
    %3980 = vmatprep.subr.bf16.mxu0 0
    %3981 = vmatpush1.bf16.xpose.msra.mxu0 0
    %3982 = vmatprep.subr.bf16.mxu0 0
    %3983 = vmatpush1.bf16.xpose.msra.mxu0 0
    %3984 = vmatprep.subr.bf16.mxu0 0
    %3985 = vmatpush1.bf16.xpose.msra.mxu0 0
    %3986 = vmatprep.subr.bf16.mxu0 0
    %3987 = vmatpush1.bf16.xpose.msra.mxu0 0
    %3988 = vmatprep.subr.bf16.mxu0 0
    %3989 = vmatpush1.bf16.xpose.msra.mxu0 0
    %3990 = vmatprep.subr.bf16.mxu0 0
    %3991 = vmatpush1.bf16.xpose.msra.mxu0 0
    %3992 = vmatprep.subr.bf16.mxu0 0
    %3993 = vmatpush1.bf16.xpose.msra.mxu0 0
    %3994 = vmatprep.mubr.bf16.mxu0 0
    %3995 = vmatmul.mubr.bf16.gmra.mrb[0].mxu0 %v3957
    %v3996 = vpop.f32.mrb[0].mxu0
    %v3997 = vadd.f32 0.0, %v3996
    %v3998 = vpop.f32.mrb[0].mxu0
    %v3999 = vpop.f32.mrb[0].mxu0
    %v4000 = vpop.f32.mrb[0].mxu0
    %4001 = vdwg.mxu0
    %4002 = vrot.lane.b32.xlu0 %v3100, 48
    %v4003 = vpop.permute.xlu0 %4002
    %4004 = vrot.lane.b32.xlu0 %v3109, 48
    %v4005 = vpop.permute.xlu0 %4004
    %v4007 = vsel %vm713, %v4003, 0
    %v4010 = vsel %vm713, %v4005, 0
    %4012 = vmatprep.subr.bf16.mxu0 0
    %4013 = vmatpush1.bf16.xpose.msra.mxu0 %v4010
    %4014 = vmatprep.subr.bf16.mxu0 0
    %4015 = vmatpush1.bf16.xpose.msra.mxu0 0
    %4016 = vmatprep.subr.bf16.mxu0 0
    %4017 = vmatpush1.bf16.xpose.msra.mxu0 0
    %4018 = vmatprep.subr.bf16.mxu0 0
    %4019 = vmatpush1.bf16.xpose.msra.mxu0 0
    %4020 = vmatprep.subr.bf16.mxu0 0
    %4021 = vmatpush1.bf16.xpose.msra.mxu0 0
    %4022 = vmatprep.subr.bf16.mxu0 0
    %4023 = vmatpush1.bf16.xpose.msra.mxu0 0
    %4024 = vmatprep.subr.bf16.mxu0 0
    %4025 = vmatpush1.bf16.xpose.msra.mxu0 0
    %4026 = vmatprep.subr.bf16.mxu0 0
    %4027 = vmatpush1.bf16.xpose.msra.mxu0 0
    %4028 = vmatprep.subr.bf16.mxu0 0
    %4029 = vmatpush1.bf16.xpose.msra.mxu0 0
    %4030 = vmatprep.subr.bf16.mxu0 0
    %4031 = vmatpush1.bf16.xpose.msra.mxu0 0
    %4032 = vmatprep.subr.bf16.mxu0 0
    %4033 = vmatpush1.bf16.xpose.msra.mxu0 0
    %4034 = vmatprep.subr.bf16.mxu0 0
    %4035 = vmatpush1.bf16.xpose.msra.mxu0 0
    %4036 = vmatprep.subr.bf16.mxu0 0
    %4037 = vmatpush1.bf16.xpose.msra.mxu0 0
    %4038 = vmatprep.subr.bf16.mxu0 0
    %4039 = vmatpush1.bf16.xpose.msra.mxu0 0
    %4040 = vmatprep.subr.bf16.mxu0 0
    %4041 = vmatpush1.bf16.xpose.msra.mxu0 0
    %4042 = vmatprep.subr.bf16.mxu0 0
    %4043 = vmatpush1.bf16.xpose.msra.mxu0 0
    %4044 = vmatprep.mubr.bf16.mxu0 0
    %4045 = vmatmul.mubr.bf16.gmra.mrb[0].mxu0 %v4007
    %v4046 = vpop.f32.mrb[0].mxu0
    %v4047 = vadd.f32 0.0, %v4046
    %v4048 = vpop.f32.mrb[0].mxu0
    %v4049 = vpop.f32.mrb[0].mxu0
    %v4050 = vpop.f32.mrb[0].mxu0
    %4051 = vdwg.mxu0
    %v4052 = vsel %vm2911, %v3997, -inf
    %4053 = vmax.xlane.f32.xlu0 %v4052
    %v4054 = vpop.xlane.xlu0 %4053
    %v4055 = vsel %vm2911, %v4047, -inf
    %4056 = vmax.xlane.f32.xlu0 %v4055
    %v4057 = vpop.xlane.xlu0 %4056
    %v4058 = vsub.f32 %v3997, %v4054
    %v4059 = vsub.f32 %v4047, %v4057
    %v4060 = vmul.f32 %v4058, 1.442695
    %v4061 = vpow.pop %v4060
    %v4062 = vmul.f32 %v4059, 1.442695
    %v4063 = vpow.pop %v4062
    %v4064 = vsel %vm2911, %v4061, 0.0
    %4065 = vadd.xlane.f32.xlu0 %v4064
    %v4066 = vpop.xlane.xlu0 %4065
    %v4067 = vsel %vm2911, %v4063, 0.0
    %4068 = vadd.xlane.f32.xlu0 %v4067
    %v4069 = vpop.xlane.xlu0 %4068
    %v4070 = vrcp.pop %v4066
    %v4071 = vrcp.pop %v4069
    %v4072 = vmul.f32 %v4061, %v4070
    %v4073 = vmul.f32 %v4063, %v4071
    %v4074 = vpack.c.bf16 %v4072, %v4072
    %v4075 = vpack.c.bf16 %v4073, %v4073
    %4076 = vrot.lane.b32.xlu0 %v3188, 48
    %v4077 = vpop.permute.xlu0 %4076
    %v4079 = vsel %vm2936, %v4074, 0
    %v4082 = vsel %vm2940, %v4077, 0
    %4084 = vmatprep.subr.bf16.mxu0 0
    %4085 = vmatpush1.bf16.msra.mxu0 %v4082
    %4086 = vmatprep.subr.bf16.mxu0 0
    %4087 = vmatpush1.bf16.msra.mxu0 0
    %4088 = vmatprep.subr.bf16.mxu0 0
    %4089 = vmatpush1.bf16.msra.mxu0 0
    %4090 = vmatprep.subr.bf16.mxu0 0
    %4091 = vmatpush1.bf16.msra.mxu0 0
    %4092 = vmatprep.subr.bf16.mxu0 0
    %4093 = vmatpush1.bf16.msra.mxu0 0
    %4094 = vmatprep.subr.bf16.mxu0 0
    %4095 = vmatpush1.bf16.msra.mxu0 0
    %4096 = vmatprep.subr.bf16.mxu0 0
    %4097 = vmatpush1.bf16.msra.mxu0 0
    %4098 = vmatprep.subr.bf16.mxu0 0
    %4099 = vmatpush1.bf16.msra.mxu0 0
    %4100 = vmatprep.subr.bf16.mxu0 0
    %4101 = vmatpush1.bf16.msra.mxu0 0
    %4102 = vmatprep.subr.bf16.mxu0 0
    %4103 = vmatpush1.bf16.msra.mxu0 0
    %4104 = vmatprep.subr.bf16.mxu0 0
    %4105 = vmatpush1.bf16.msra.mxu0 0
    %4106 = vmatprep.subr.bf16.mxu0 0
    %4107 = vmatpush1.bf16.msra.mxu0 0
    %4108 = vmatprep.subr.bf16.mxu0 0
    %4109 = vmatpush1.bf16.msra.mxu0 0
    %4110 = vmatprep.subr.bf16.mxu0 0
    %4111 = vmatpush1.bf16.msra.mxu0 0
    %4112 = vmatprep.subr.bf16.mxu0 0
    %4113 = vmatpush1.bf16.msra.mxu0 0
    %4114 = vmatprep.subr.bf16.mxu0 0
    %4115 = vmatpush1.bf16.msra.mxu0 0
    %4116 = vmatprep.mubr.bf16.mxu0 0
    %4117 = vmatmul.mubr.bf16.gmra.mrb[0].mxu0 %v4079
    %v4118 = vpop.f32.mrb[0].mxu0
    %v4119 = vadd.f32 0.0, %v4118
    %v4120 = vpop.f32.mrb[0].mxu0
    %v4121 = vpop.f32.mrb[0].mxu0
    %v4122 = vpop.f32.mrb[0].mxu0
    %4123 = vdwg.mxu0
    %4124 = vrot.lane.b32.xlu0 %v3243, 48
    %v4125 = vpop.permute.xlu0 %4124
    %v4127 = vsel %vm2936, %v4075, 0
    %v4130 = vsel %vm2940, %v4125, 0
    %4132 = vmatprep.subr.bf16.mxu0 0
    %4133 = vmatpush1.bf16.msra.mxu0 %v4130
    %4134 = vmatprep.subr.bf16.mxu0 0
    %4135 = vmatpush1.bf16.msra.mxu0 0
    %4136 = vmatprep.subr.bf16.mxu0 0
    %4137 = vmatpush1.bf16.msra.mxu0 0
    %4138 = vmatprep.subr.bf16.mxu0 0
    %4139 = vmatpush1.bf16.msra.mxu0 0
    %4140 = vmatprep.subr.bf16.mxu0 0
    %4141 = vmatpush1.bf16.msra.mxu0 0
    %4142 = vmatprep.subr.bf16.mxu0 0
    %4143 = vmatpush1.bf16.msra.mxu0 0
    %4144 = vmatprep.subr.bf16.mxu0 0
    %4145 = vmatpush1.bf16.msra.mxu0 0
    %4146 = vmatprep.subr.bf16.mxu0 0
    %4147 = vmatpush1.bf16.msra.mxu0 0
    %4148 = vmatprep.subr.bf16.mxu0 0
    %4149 = vmatpush1.bf16.msra.mxu0 0
    %4150 = vmatprep.subr.bf16.mxu0 0
    %4151 = vmatpush1.bf16.msra.mxu0 0
    %4152 = vmatprep.subr.bf16.mxu0 0
    %4153 = vmatpush1.bf16.msra.mxu0 0
    %4154 = vmatprep.subr.bf16.mxu0 0
    %4155 = vmatpush1.bf16.msra.mxu0 0
    %4156 = vmatprep.subr.bf16.mxu0 0
    %4157 = vmatpush1.bf16.msra.mxu0 0
    %4158 = vmatprep.subr.bf16.mxu0 0
    %4159 = vmatpush1.bf16.msra.mxu0 0
    %4160 = vmatprep.subr.bf16.mxu0 0
    %4161 = vmatpush1.bf16.msra.mxu0 0
    %4162 = vmatprep.subr.bf16.mxu0 0
    %4163 = vmatpush1.bf16.msra.mxu0 0
    %4164 = vmatprep.mubr.bf16.mxu0 0
    %4165 = vmatmul.mubr.bf16.gmra.mrb[0].mxu0 %v4127
    %v4166 = vpop.f32.mrb[0].mxu0
    %v4167 = vadd.f32 0.0, %v4166
    %v4168 = vpop.f32.mrb[0].mxu0
    %v4169 = vpop.f32.mrb[0].mxu0
    %v4170 = vpop.f32.mrb[0].mxu0
    %4171 = vdwg.mxu0
    %4172 = vrot.lane.b32.xlu0 %v3036, 32
    %v4173 = vpop.permute.xlu0 %4172
    %4174 = vrot.lane.b32.xlu0 %v3045, 32
    %v4175 = vpop.permute.xlu0 %4174
    %v4177 = vsel %vm713, %v4173, 0
    %v4180 = vsel %vm713, %v4175, 0
    %4182 = vmatprep.subr.bf16.mxu0 0
    %4183 = vmatpush1.bf16.xpose.msra.mxu0 %v4180
    %4184 = vmatprep.subr.bf16.mxu0 0
    %4185 = vmatpush1.bf16.xpose.msra.mxu0 0
    %4186 = vmatprep.subr.bf16.mxu0 0
    %4187 = vmatpush1.bf16.xpose.msra.mxu0 0
    %4188 = vmatprep.subr.bf16.mxu0 0
    %4189 = vmatpush1.bf16.xpose.msra.mxu0 0
    %4190 = vmatprep.subr.bf16.mxu0 0
    %4191 = vmatpush1.bf16.xpose.msra.mxu0 0
    %4192 = vmatprep.subr.bf16.mxu0 0
    %4193 = vmatpush1.bf16.xpose.msra.mxu0 0
    %4194 = vmatprep.subr.bf16.mxu0 0
    %4195 = vmatpush1.bf16.xpose.msra.mxu0 0
    %4196 = vmatprep.subr.bf16.mxu0 0
    %4197 = vmatpush1.bf16.xpose.msra.mxu0 0
    %4198 = vmatprep.subr.bf16.mxu0 0
    %4199 = vmatpush1.bf16.xpose.msra.mxu0 0
    %4200 = vmatprep.subr.bf16.mxu0 0
    %4201 = vmatpush1.bf16.xpose.msra.mxu0 0
    %4202 = vmatprep.subr.bf16.mxu0 0
    %4203 = vmatpush1.bf16.xpose.msra.mxu0 0
    %4204 = vmatprep.subr.bf16.mxu0 0
    %4205 = vmatpush1.bf16.xpose.msra.mxu0 0
    %4206 = vmatprep.subr.bf16.mxu0 0
    %4207 = vmatpush1.bf16.xpose.msra.mxu0 0
    %4208 = vmatprep.subr.bf16.mxu0 0
    %4209 = vmatpush1.bf16.xpose.msra.mxu0 0
    %4210 = vmatprep.subr.bf16.mxu0 0
    %4211 = vmatpush1.bf16.xpose.msra.mxu0 0
    %4212 = vmatprep.subr.bf16.mxu0 0
    %4213 = vmatpush1.bf16.xpose.msra.mxu0 0
    %4214 = vmatprep.mubr.bf16.mxu0 0
    %4215 = vmatmul.mubr.bf16.gmra.mrb[0].mxu0 %v4177
    %v4216 = vpop.f32.mrb[0].mxu0
    %v4217 = vadd.f32 0.0, %v4216
    %v4218 = vpop.f32.mrb[0].mxu0
    %v4219 = vpop.f32.mrb[0].mxu0
    %v4220 = vpop.f32.mrb[0].mxu0
    %4221 = vdwg.mxu0
    %4222 = vrot.lane.b32.xlu0 %v3100, 32
    %v4223 = vpop.permute.xlu0 %4222
    %4224 = vrot.lane.b32.xlu0 %v3109, 32
    %v4225 = vpop.permute.xlu0 %4224
    %v4227 = vsel %vm713, %v4223, 0
    %v4230 = vsel %vm713, %v4225, 0
    %4232 = vmatprep.subr.bf16.mxu0 0
    %4233 = vmatpush1.bf16.xpose.msra.mxu0 %v4230
    %4234 = vmatprep.subr.bf16.mxu0 0
    %4235 = vmatpush1.bf16.xpose.msra.mxu0 0
    %4236 = vmatprep.subr.bf16.mxu0 0
    %4237 = vmatpush1.bf16.xpose.msra.mxu0 0
    %4238 = vmatprep.subr.bf16.mxu0 0
    %4239 = vmatpush1.bf16.xpose.msra.mxu0 0
    %4240 = vmatprep.subr.bf16.mxu0 0
    %4241 = vmatpush1.bf16.xpose.msra.mxu0 0
    %4242 = vmatprep.subr.bf16.mxu0 0
    %4243 = vmatpush1.bf16.xpose.msra.mxu0 0
    %4244 = vmatprep.subr.bf16.mxu0 0
    %4245 = vmatpush1.bf16.xpose.msra.mxu0 0
    %4246 = vmatprep.subr.bf16.mxu0 0
    %4247 = vmatpush1.bf16.xpose.msra.mxu0 0
    %4248 = vmatprep.subr.bf16.mxu0 0
    %4249 = vmatpush1.bf16.xpose.msra.mxu0 0
    %4250 = vmatprep.subr.bf16.mxu0 0
    %4251 = vmatpush1.bf16.xpose.msra.mxu0 0
    %4252 = vmatprep.subr.bf16.mxu0 0
    %4253 = vmatpush1.bf16.xpose.msra.mxu0 0
    %4254 = vmatprep.subr.bf16.mxu0 0
    %4255 = vmatpush1.bf16.xpose.msra.mxu0 0
    %4256 = vmatprep.subr.bf16.mxu0 0
    %4257 = vmatpush1.bf16.xpose.msra.mxu0 0
    %4258 = vmatprep.subr.bf16.mxu0 0
    %4259 = vmatpush1.bf16.xpose.msra.mxu0 0
    %4260 = vmatprep.subr.bf16.mxu0 0
    %4261 = vmatpush1.bf16.xpose.msra.mxu0 0
    %4262 = vmatprep.subr.bf16.mxu0 0
    %4263 = vmatpush1.bf16.xpose.msra.mxu0 0
    %4264 = vmatprep.mubr.bf16.mxu0 0
    %4265 = vmatmul.mubr.bf16.gmra.mrb[0].mxu0 %v4227
    %v4266 = vpop.f32.mrb[0].mxu0
    %v4267 = vadd.f32 0.0, %v4266
    %v4268 = vpop.f32.mrb[0].mxu0
    %v4269 = vpop.f32.mrb[0].mxu0
    %v4270 = vpop.f32.mrb[0].mxu0
    %4271 = vdwg.mxu0
    %v4272 = vsel %vm2911, %v4217, -inf
    %4273 = vmax.xlane.f32.xlu0 %v4272
    %v4274 = vpop.xlane.xlu0 %4273
    %v4275 = vsel %vm2911, %v4267, -inf
    %4276 = vmax.xlane.f32.xlu0 %v4275
    %v4277 = vpop.xlane.xlu0 %4276
    %v4278 = vsub.f32 %v4217, %v4274
    %v4279 = vsub.f32 %v4267, %v4277
    %v4280 = vmul.f32 %v4278, 1.442695
    %v4281 = vpow.pop %v4280
    %v4282 = vmul.f32 %v4279, 1.442695
    %v4283 = vpow.pop %v4282
    %v4284 = vsel %vm2911, %v4281, 0.0
    %4285 = vadd.xlane.f32.xlu0 %v4284
    %v4286 = vpop.xlane.xlu0 %4285
    %v4287 = vsel %vm2911, %v4283, 0.0
    %4288 = vadd.xlane.f32.xlu0 %v4287
    %v4289 = vpop.xlane.xlu0 %4288
    %v4290 = vrcp.pop %v4286
    %v4291 = vrcp.pop %v4289
    %v4292 = vmul.f32 %v4281, %v4290
    %v4293 = vmul.f32 %v4283, %v4291
    %v4294 = vpack.c.bf16 %v4292, %v4292
    %v4295 = vpack.c.bf16 %v4293, %v4293
    %4296 = vrot.lane.b32.xlu0 %v3188, 32
    %v4297 = vpop.permute.xlu0 %4296
    %v4299 = vsel %vm2936, %v4294, 0
    %v4302 = vsel %vm2940, %v4297, 0
    %4304 = vmatprep.subr.bf16.mxu0 0
    %4305 = vmatpush1.bf16.msra.mxu0 %v4302
    %4306 = vmatprep.subr.bf16.mxu0 0
    %4307 = vmatpush1.bf16.msra.mxu0 0
    %4308 = vmatprep.subr.bf16.mxu0 0
    %4309 = vmatpush1.bf16.msra.mxu0 0
    %4310 = vmatprep.subr.bf16.mxu0 0
    %4311 = vmatpush1.bf16.msra.mxu0 0
    %4312 = vmatprep.subr.bf16.mxu0 0
    %4313 = vmatpush1.bf16.msra.mxu0 0
    %4314 = vmatprep.subr.bf16.mxu0 0
    %4315 = vmatpush1.bf16.msra.mxu0 0
    %4316 = vmatprep.subr.bf16.mxu0 0
    %4317 = vmatpush1.bf16.msra.mxu0 0
    %4318 = vmatprep.subr.bf16.mxu0 0
    %4319 = vmatpush1.bf16.msra.mxu0 0
    %4320 = vmatprep.subr.bf16.mxu0 0
    %4321 = vmatpush1.bf16.msra.mxu0 0
    %4322 = vmatprep.subr.bf16.mxu0 0
    %4323 = vmatpush1.bf16.msra.mxu0 0
    %4324 = vmatprep.subr.bf16.mxu0 0
    %4325 = vmatpush1.bf16.msra.mxu0 0
    %4326 = vmatprep.subr.bf16.mxu0 0
    %4327 = vmatpush1.bf16.msra.mxu0 0
    %4328 = vmatprep.subr.bf16.mxu0 0
    %4329 = vmatpush1.bf16.msra.mxu0 0
    %4330 = vmatprep.subr.bf16.mxu0 0
    %4331 = vmatpush1.bf16.msra.mxu0 0
    %4332 = vmatprep.subr.bf16.mxu0 0
    %4333 = vmatpush1.bf16.msra.mxu0 0
    %4334 = vmatprep.subr.bf16.mxu0 0
    %4335 = vmatpush1.bf16.msra.mxu0 0
    %4336 = vmatprep.mubr.bf16.mxu0 0
    %4337 = vmatmul.mubr.bf16.gmra.mrb[0].mxu0 %v4299
    %v4338 = vpop.f32.mrb[0].mxu0
    %v4339 = vadd.f32 0.0, %v4338
    %v4340 = vpop.f32.mrb[0].mxu0
    %v4341 = vpop.f32.mrb[0].mxu0
    %v4342 = vpop.f32.mrb[0].mxu0
    %4343 = vdwg.mxu0
    %4344 = vrot.lane.b32.xlu0 %v3243, 32
    %v4345 = vpop.permute.xlu0 %4344
    %v4347 = vsel %vm2936, %v4295, 0
    %v4350 = vsel %vm2940, %v4345, 0
    %4352 = vmatprep.subr.bf16.mxu0 0
    %4353 = vmatpush1.bf16.msra.mxu0 %v4350
    %4354 = vmatprep.subr.bf16.mxu0 0
    %4355 = vmatpush1.bf16.msra.mxu0 0
    %4356 = vmatprep.subr.bf16.mxu0 0
    %4357 = vmatpush1.bf16.msra.mxu0 0
    %4358 = vmatprep.subr.bf16.mxu0 0
    %4359 = vmatpush1.bf16.msra.mxu0 0
    %4360 = vmatprep.subr.bf16.mxu0 0
    %4361 = vmatpush1.bf16.msra.mxu0 0
    %4362 = vmatprep.subr.bf16.mxu0 0
    %4363 = vmatpush1.bf16.msra.mxu0 0
    %4364 = vmatprep.subr.bf16.mxu0 0
    %4365 = vmatpush1.bf16.msra.mxu0 0
    %4366 = vmatprep.subr.bf16.mxu0 0
    %4367 = vmatpush1.bf16.msra.mxu0 0
    %4368 = vmatprep.subr.bf16.mxu0 0
    %4369 = vmatpush1.bf16.msra.mxu0 0
    %4370 = vmatprep.subr.bf16.mxu0 0
    %4371 = vmatpush1.bf16.msra.mxu0 0
    %4372 = vmatprep.subr.bf16.mxu0 0
    %4373 = vmatpush1.bf16.msra.mxu0 0
    %4374 = vmatprep.subr.bf16.mxu0 0
    %4375 = vmatpush1.bf16.msra.mxu0 0
    %4376 = vmatprep.subr.bf16.mxu0 0
    %4377 = vmatpush1.bf16.msra.mxu0 0
    %4378 = vmatprep.subr.bf16.mxu0 0
    %4379 = vmatpush1.bf16.msra.mxu0 0
    %4380 = vmatprep.subr.bf16.mxu0 0
    %4381 = vmatpush1.bf16.msra.mxu0 0
    %4382 = vmatprep.subr.bf16.mxu0 0
    %4383 = vmatpush1.bf16.msra.mxu0 0
    %4384 = vmatprep.mubr.bf16.mxu0 0
    %4385 = vmatmul.mubr.bf16.gmra.mrb[0].mxu0 %v4347
    %v4386 = vpop.f32.mrb[0].mxu0
    %v4387 = vadd.f32 0.0, %v4386
    %v4388 = vpop.f32.mrb[0].mxu0
    %v4389 = vpop.f32.mrb[0].mxu0
    %v4390 = vpop.f32.mrb[0].mxu0
    %4391 = vdwg.mxu0
    %4392 = vrot.lane.b32.xlu0 %v3036, 16
    %v4393 = vpop.permute.xlu0 %4392
    %4394 = vrot.lane.b32.xlu0 %v3045, 16
    %v4395 = vpop.permute.xlu0 %4394
    %v4397 = vsel %vm713, %v4393, 0
    %v4400 = vsel %vm713, %v4395, 0
    %4402 = vmatprep.subr.bf16.mxu0 0
    %4403 = vmatpush1.bf16.xpose.msra.mxu0 %v4400
    %4404 = vmatprep.subr.bf16.mxu0 0
    %4405 = vmatpush1.bf16.xpose.msra.mxu0 0
    %4406 = vmatprep.subr.bf16.mxu0 0
    %4407 = vmatpush1.bf16.xpose.msra.mxu0 0
    %4408 = vmatprep.subr.bf16.mxu0 0
    %4409 = vmatpush1.bf16.xpose.msra.mxu0 0
    %4410 = vmatprep.subr.bf16.mxu0 0
    %4411 = vmatpush1.bf16.xpose.msra.mxu0 0
    %4412 = vmatprep.subr.bf16.mxu0 0
    %4413 = vmatpush1.bf16.xpose.msra.mxu0 0
    %4414 = vmatprep.subr.bf16.mxu0 0
    %4415 = vmatpush1.bf16.xpose.msra.mxu0 0
    %4416 = vmatprep.subr.bf16.mxu0 0
    %4417 = vmatpush1.bf16.xpose.msra.mxu0 0
    %4418 = vmatprep.subr.bf16.mxu0 0
    %4419 = vmatpush1.bf16.xpose.msra.mxu0 0
    %4420 = vmatprep.subr.bf16.mxu0 0
    %4421 = vmatpush1.bf16.xpose.msra.mxu0 0
    %4422 = vmatprep.subr.bf16.mxu0 0
    %4423 = vmatpush1.bf16.xpose.msra.mxu0 0
    %4424 = vmatprep.subr.bf16.mxu0 0
    %4425 = vmatpush1.bf16.xpose.msra.mxu0 0
    %4426 = vmatprep.subr.bf16.mxu0 0
    %4427 = vmatpush1.bf16.xpose.msra.mxu0 0
    %4428 = vmatprep.subr.bf16.mxu0 0
    %4429 = vmatpush1.bf16.xpose.msra.mxu0 0
    %4430 = vmatprep.subr.bf16.mxu0 0
    %4431 = vmatpush1.bf16.xpose.msra.mxu0 0
    %4432 = vmatprep.subr.bf16.mxu0 0
    %4433 = vmatpush1.bf16.xpose.msra.mxu0 0
    %4434 = vmatprep.mubr.bf16.mxu0 0
    %4435 = vmatmul.mubr.bf16.gmra.mrb[0].mxu0 %v4397
    %v4436 = vpop.f32.mrb[0].mxu0
    %v4437 = vadd.f32 0.0, %v4436
    %v4438 = vpop.f32.mrb[0].mxu0
    %v4439 = vpop.f32.mrb[0].mxu0
    %v4440 = vpop.f32.mrb[0].mxu0
    %4441 = vdwg.mxu0
    %4442 = vrot.lane.b32.xlu0 %v3100, 16
    %v4443 = vpop.permute.xlu0 %4442
    %4444 = vrot.lane.b32.xlu0 %v3109, 16
    %v4445 = vpop.permute.xlu0 %4444
    %v4447 = vsel %vm713, %v4443, 0
    %v4450 = vsel %vm713, %v4445, 0
    %4452 = vmatprep.subr.bf16.mxu0 0
    %4453 = vmatpush1.bf16.xpose.msra.mxu0 %v4450
    %4454 = vmatprep.subr.bf16.mxu0 0
    %4455 = vmatpush1.bf16.xpose.msra.mxu0 0
    %4456 = vmatprep.subr.bf16.mxu0 0
    %4457 = vmatpush1.bf16.xpose.msra.mxu0 0
    %4458 = vmatprep.subr.bf16.mxu0 0
    %4459 = vmatpush1.bf16.xpose.msra.mxu0 0
    %4460 = vmatprep.subr.bf16.mxu0 0
    %4461 = vmatpush1.bf16.xpose.msra.mxu0 0
    %4462 = vmatprep.subr.bf16.mxu0 0
    %4463 = vmatpush1.bf16.xpose.msra.mxu0 0
    %4464 = vmatprep.subr.bf16.mxu0 0
    %4465 = vmatpush1.bf16.xpose.msra.mxu0 0
    %4466 = vmatprep.subr.bf16.mxu0 0
    %4467 = vmatpush1.bf16.xpose.msra.mxu0 0
    %4468 = vmatprep.subr.bf16.mxu0 0
    %4469 = vmatpush1.bf16.xpose.msra.mxu0 0
    %4470 = vmatprep.subr.bf16.mxu0 0
    %4471 = vmatpush1.bf16.xpose.msra.mxu0 0
    %4472 = vmatprep.subr.bf16.mxu0 0
    %4473 = vmatpush1.bf16.xpose.msra.mxu0 0
    %4474 = vmatprep.subr.bf16.mxu0 0
    %4475 = vmatpush1.bf16.xpose.msra.mxu0 0
    %4476 = vmatprep.subr.bf16.mxu0 0
    %4477 = vmatpush1.bf16.xpose.msra.mxu0 0
    %4478 = vmatprep.subr.bf16.mxu0 0
    %4479 = vmatpush1.bf16.xpose.msra.mxu0 0
    %4480 = vmatprep.subr.bf16.mxu0 0
    %4481 = vmatpush1.bf16.xpose.msra.mxu0 0
    %4482 = vmatprep.subr.bf16.mxu0 0
    %4483 = vmatpush1.bf16.xpose.msra.mxu0 0
    %4484 = vmatprep.mubr.bf16.mxu0 0
    %4485 = vmatmul.mubr.bf16.gmra.mrb[0].mxu0 %v4447
    %v4486 = vpop.f32.mrb[0].mxu0
    %v4487 = vadd.f32 0.0, %v4486
    %v4488 = vpop.f32.mrb[0].mxu0
    %v4489 = vpop.f32.mrb[0].mxu0
    %v4490 = vpop.f32.mrb[0].mxu0
    %4491 = vdwg.mxu0
    %v4492 = vsel %vm2911, %v4437, -inf
    %4493 = vmax.xlane.f32.xlu0 %v4492
    %v4494 = vpop.xlane.xlu0 %4493
    %v4495 = vsel %vm2911, %v4487, -inf
    %4496 = vmax.xlane.f32.xlu0 %v4495
    %v4497 = vpop.xlane.xlu0 %4496
    %v4498 = vsub.f32 %v4437, %v4494
    %v4499 = vsub.f32 %v4487, %v4497
    %v4500 = vmul.f32 %v4498, 1.442695
    %v4501 = vpow.pop %v4500
    %v4502 = vmul.f32 %v4499, 1.442695
    %v4503 = vpow.pop %v4502
    %v4504 = vsel %vm2911, %v4501, 0.0
    %4505 = vadd.xlane.f32.xlu0 %v4504
    %v4506 = vpop.xlane.xlu0 %4505
    %v4507 = vsel %vm2911, %v4503, 0.0
    %4508 = vadd.xlane.f32.xlu0 %v4507
    %v4509 = vpop.xlane.xlu0 %4508
    %v4510 = vrcp.pop %v4506
    %v4511 = vrcp.pop %v4509
    %v4512 = vmul.f32 %v4501, %v4510
    %v4513 = vmul.f32 %v4503, %v4511
    %v4514 = vpack.c.bf16 %v4512, %v4512
    %v4515 = vpack.c.bf16 %v4513, %v4513
    %4516 = vrot.lane.b32.xlu0 %v3188, 16
    %v4517 = vpop.permute.xlu0 %4516
    %v4519 = vsel %vm2936, %v4514, 0
    %v4522 = vsel %vm2940, %v4517, 0
    %4524 = vmatprep.subr.bf16.mxu0 0
    %4525 = vmatpush1.bf16.msra.mxu0 %v4522
    %4526 = vmatprep.subr.bf16.mxu0 0
    %4527 = vmatpush1.bf16.msra.mxu0 0
    %4528 = vmatprep.subr.bf16.mxu0 0
    %4529 = vmatpush1.bf16.msra.mxu0 0
    %4530 = vmatprep.subr.bf16.mxu0 0
    %4531 = vmatpush1.bf16.msra.mxu0 0
    %4532 = vmatprep.subr.bf16.mxu0 0
    %4533 = vmatpush1.bf16.msra.mxu0 0
    %4534 = vmatprep.subr.bf16.mxu0 0
    %4535 = vmatpush1.bf16.msra.mxu0 0
    %4536 = vmatprep.subr.bf16.mxu0 0
    %4537 = vmatpush1.bf16.msra.mxu0 0
    %4538 = vmatprep.subr.bf16.mxu0 0
    %4539 = vmatpush1.bf16.msra.mxu0 0
    %4540 = vmatprep.subr.bf16.mxu0 0
    %4541 = vmatpush1.bf16.msra.mxu0 0
    %4542 = vmatprep.subr.bf16.mxu0 0
    %4543 = vmatpush1.bf16.msra.mxu0 0
    %4544 = vmatprep.subr.bf16.mxu0 0
    %4545 = vmatpush1.bf16.msra.mxu0 0
    %4546 = vmatprep.subr.bf16.mxu0 0
    %4547 = vmatpush1.bf16.msra.mxu0 0
    %4548 = vmatprep.subr.bf16.mxu0 0
    %4549 = vmatpush1.bf16.msra.mxu0 0
    %4550 = vmatprep.subr.bf16.mxu0 0
    %4551 = vmatpush1.bf16.msra.mxu0 0
    %4552 = vmatprep.subr.bf16.mxu0 0
    %4553 = vmatpush1.bf16.msra.mxu0 0
    %4554 = vmatprep.subr.bf16.mxu0 0
    %4555 = vmatpush1.bf16.msra.mxu0 0
    %4556 = vmatprep.mubr.bf16.mxu0 0
    %4557 = vmatmul.mubr.bf16.gmra.mrb[0].mxu0 %v4519
    %v4558 = vpop.f32.mrb[0].mxu0
    %v4559 = vadd.f32 0.0, %v4558
    %v4560 = vpop.f32.mrb[0].mxu0
    %v4561 = vpop.f32.mrb[0].mxu0
    %v4562 = vpop.f32.mrb[0].mxu0
    %4563 = vdwg.mxu0
    %4564 = vrot.lane.b32.xlu0 %v3243, 16
    %v4565 = vpop.permute.xlu0 %4564
    %v4567 = vsel %vm2936, %v4515, 0
    %v4570 = vsel %vm2940, %v4565, 0
    %4572 = vmatprep.subr.bf16.mxu0 0
    %4573 = vmatpush1.bf16.msra.mxu0 %v4570
    %4574 = vmatprep.subr.bf16.mxu0 0
    %4575 = vmatpush1.bf16.msra.mxu0 0
    %4576 = vmatprep.subr.bf16.mxu0 0
    %4577 = vmatpush1.bf16.msra.mxu0 0
    %4578 = vmatprep.subr.bf16.mxu0 0
    %4579 = vmatpush1.bf16.msra.mxu0 0
    %4580 = vmatprep.subr.bf16.mxu0 0
    %4581 = vmatpush1.bf16.msra.mxu0 0
    %4582 = vmatprep.subr.bf16.mxu0 0
    %4583 = vmatpush1.bf16.msra.mxu0 0
    %4584 = vmatprep.subr.bf16.mxu0 0
    %4585 = vmatpush1.bf16.msra.mxu0 0
    %4586 = vmatprep.subr.bf16.mxu0 0
    %4587 = vmatpush1.bf16.msra.mxu0 0
    %4588 = vmatprep.subr.bf16.mxu0 0
    %4589 = vmatpush1.bf16.msra.mxu0 0
    %4590 = vmatprep.subr.bf16.mxu0 0
    %4591 = vmatpush1.bf16.msra.mxu0 0
    %4592 = vmatprep.subr.bf16.mxu0 0
    %4593 = vmatpush1.bf16.msra.mxu0 0
    %4594 = vmatprep.subr.bf16.mxu0 0
    %4595 = vmatpush1.bf16.msra.mxu0 0
    %4596 = vmatprep.subr.bf16.mxu0 0
    %4597 = vmatpush1.bf16.msra.mxu0 0
    %4598 = vmatprep.subr.bf16.mxu0 0
    %4599 = vmatpush1.bf16.msra.mxu0 0
    %4600 = vmatprep.subr.bf16.mxu0 0
    %4601 = vmatpush1.bf16.msra.mxu0 0
    %4602 = vmatprep.subr.bf16.mxu0 0
    %4603 = vmatpush1.bf16.msra.mxu0 0
    %4604 = vmatprep.mubr.bf16.mxu0 0
    %4605 = vmatmul.mubr.bf16.gmra.mrb[0].mxu0 %v4567
    %v4606 = vpop.f32.mrb[0].mxu0
    %v4607 = vadd.f32 0.0, %v4606
    %v4608 = vpop.f32.mrb[0].mxu0
    %v4609 = vpop.f32.mrb[0].mxu0
    %v4610 = vpop.f32.mrb[0].mxu0
    %4611 = vdwg.mxu0
    %4614 = vrot.lane.b32.xlu0 %v3232, 16
    %v4615 = vpop.permute.xlu0 %4614
    %4616 = vrot.lane.b32.xlu0 %v3287, 16
    %v4617 = vpop.permute.xlu0 %4616
    %4622 = vrot.lane.b32.xlu0 %v3459, 32
    %v4623 = vpop.permute.xlu0 %4622
    %4624 = vrot.lane.b32.xlu0 %v3507, 32
    %v4625 = vpop.permute.xlu0 %4624
    %4630 = vrot.lane.b32.xlu0 %v3679, 48
    %v4631 = vpop.permute.xlu0 %4630
    %4632 = vrot.lane.b32.xlu0 %v3727, 48
    %v4633 = vpop.permute.xlu0 %4632
    %4638 = vrot.lane.b32.xlu0 %v3899, 64
    %v4639 = vpop.permute.xlu0 %4638
    %4640 = vrot.lane.b32.xlu0 %v3947, 64
    %v4641 = vpop.permute.xlu0 %4640
    %4646 = vrot.lane.b32.xlu0 %v4119, 80
    %v4647 = vpop.permute.xlu0 %4646
    %4648 = vrot.lane.b32.xlu0 %v4167, 80
    %v4649 = vpop.permute.xlu0 %4648
    %4654 = vrot.lane.b32.xlu0 %v4339, 96
    %v4655 = vpop.permute.xlu0 %4654
    %4656 = vrot.lane.b32.xlu0 %v4387, 96
    %v4657 = vpop.permute.xlu0 %4656
    %4662 = vrot.lane.b32.xlu0 %v4559, 112
    %v4663 = vpop.permute.xlu0 %4662
    %4664 = vrot.lane.b32.xlu0 %v4607, 112
    %v4665 = vpop.permute.xlu0 %4664
    %v4668 = vsel %vm713, %v2979, %v4615
    %v4669 = vsel %vm713, %v3025, %v4617
    %v4670 = vsel %vm726, %v4668, %v4623
    %v4671 = vsel %vm726, %v4669, %v4625
    %v4672 = vsel %vm784, %v4670, %v4631
    %v4673 = vsel %vm784, %v4671, %v4633
    %v4674 = vsel %vm1663, %v4672, %v4639
    %v4675 = vsel %vm1663, %v4673, %v4641
    %vm4676 = vcmask 654336
    %v4677 = vsel %vm4676, %v4674, %v4647
    %v4678 = vsel %vm4676, %v4675, %v4649
    %v4679 = vsel %vm1963, %v4677, %v4655
    %v4680 = vsel %vm1963, %v4678, %v4657
    %vm4681 = vcmask 916480
    %v4682 = vsel %vm4681, %v4679, %v4663
    %v4683 = vsel %vm4681, %v4680, %v4665
    %v4684 = vpack.c.bf16 %v4682, %v4682
    %v4685 = vpack.c.bf16 %v4683, %v4683
    %v4686 = vld [vmem:[#allocation5 + $0xc0] sm:$0xff]
    %v4687 = vld [vmem:[#allocation5 + $0xcc] sm:$0xff]
    %v4688 = vld [vmem:[#allocation5 + $0xd8] sm:$0xff]
    %v4689 = vld [vmem:[#allocation5 + $0xe4] sm:$0xff]
    %v4690 = vld [vmem:[#allocation5 + $0xf0] sm:$0xff]
    %v4691 = vld [vmem:[#allocation5 + $0xfc] sm:$0xff]
    %v4692 = vld [vmem:[#allocation5 + $0x108] sm:$0xff]
    %v4693 = vld [vmem:[#allocation5 + $0x114] sm:$0xff]
    %v4694 = vld [vmem:[#allocation5 + $0x120] sm:$0xff]
    %v4695 = vld [vmem:[#allocation5 + $0x12c] sm:$0xff]
    %v4696 = vld [vmem:[#allocation5 + $0x138] sm:$0xff]
    %v4697 = vld [vmem:[#allocation5 + $0x144] sm:$0xff]
    %v4698 = vld [vmem:[#allocation5 + $0x150] sm:$0xff]
    %v4699 = vld [vmem:[#allocation5 + $0x15c] sm:$0xff]
    %v4700 = vld [vmem:[#allocation5 + $0x168] sm:$0xff]
    %v4701 = vld [vmem:[#allocation5 + $0x174] sm:$0xff]
    %v4702 = vld [vmem:[#allocation5 + $0x180] sm:$0xff]
    %v4703 = vld [vmem:[#allocation5 + $0x18c] sm:$0xff]
    %v4704 = vld [vmem:[#allocation5 + $0x198] sm:$0xff]
    %v4705 = vld [vmem:[#allocation5 + $0x1a4] sm:$0xff]
    %v4706 = vld [vmem:[#allocation5 + $0x1b0] sm:$0xff]
    %v4707 = vld [vmem:[#allocation5 + $0x1bc] sm:$0xff]
    %v4708 = vld [vmem:[#allocation5 + $0x1c8] sm:$0xff]
    %v4709 = vld [vmem:[#allocation5 + $0x1d4] sm:$0xff]
    %v4710 = vld [vmem:[#allocation5 + $0x1e0] sm:$0xff]
    %v4711 = vld [vmem:[#allocation5 + $0x1ec] sm:$0xff]
    %v4712 = vld [vmem:[#allocation5 + $0x1f8] sm:$0xff]
    %v4713 = vld [vmem:[#allocation5 + $0x204] sm:$0xff]
    %v4714 = vld [vmem:[#allocation5 + $0x210] sm:$0xff]
    %v4715 = vld [vmem:[#allocation5 + $0x21c] sm:$0xff]
    %v4716 = vld [vmem:[#allocation5 + $0x228] sm:$0xff]
    %v4717 = vld [vmem:[#allocation5 + $0x234] sm:$0xff]
    %v4720 = vunpack.c.l.b16 %v4684
    %v4721 = vunpack.c.l.b16 %v4685
    %v4722 = vrot.slane %v4720, 1
    %v4723 = vsel %vm1518, %v4721, %v4722
    %v4724 = vpack.c.b16 %v4723, %v4723
    %v4742 = vunpack.c.l.b16 %v4702
    %v4743 = vunpack.c.h.b16 %v4702
    %v4744 = vunpack.c.l.b16 %v4703
    %v4745 = vunpack.c.h.b16 %v4703
    %v4746 = vunpack.c.l.b16 %v4704
    %v4747 = vunpack.c.h.b16 %v4704
    %v4748 = vunpack.c.l.b16 %v4705
    %v4749 = vunpack.c.h.b16 %v4705
    %v4750 = vunpack.c.l.b16 %v4706
    %v4751 = vunpack.c.h.b16 %v4706
    %v4752 = vunpack.c.l.b16 %v4707
    %v4753 = vunpack.c.h.b16 %v4707
    %v4754 = vunpack.c.l.b16 %v4708
    %v4755 = vunpack.c.h.b16 %v4708
    %v4756 = vunpack.c.l.b16 %v4709
    %v4757 = vunpack.c.h.b16 %v4709
    %v4758 = vunpack.c.l.b16 %v4710
    %v4759 = vunpack.c.h.b16 %v4710
    %v4760 = vunpack.c.l.b16 %v4711
    %v4761 = vunpack.c.h.b16 %v4711
    %v4762 = vunpack.c.l.b16 %v4712
    %v4763 = vunpack.c.h.b16 %v4712
    %v4764 = vunpack.c.l.b16 %v4713
    %v4765 = vunpack.c.h.b16 %v4713
    %v4766 = vunpack.c.l.b16 %v4714
    %v4767 = vunpack.c.h.b16 %v4714
    %v4768 = vunpack.c.l.b16 %v4715
    %v4769 = vunpack.c.h.b16 %v4715
    %v4770 = vunpack.c.l.b16 %v4716
    %v4771 = vunpack.c.h.b16 %v4716
    %v4772 = vunpack.c.l.b16 %v4717
    %v4773 = vunpack.c.h.b16 %v4717
    %v4774 = vpack.c.b16 %v4744, %v4742
    %v4775 = vpack.c.b16 %v4745, %v4743
    %v4776 = vpack.c.b16 %v4748, %v4746
    %v4777 = vpack.c.b16 %v4749, %v4747
    %v4778 = vpack.c.b16 %v4752, %v4750
    %v4779 = vpack.c.b16 %v4753, %v4751
    %v4780 = vpack.c.b16 %v4756, %v4754
    %v4781 = vpack.c.b16 %v4757, %v4755
    %v4782 = vpack.c.b16 %v4760, %v4758
    %v4783 = vpack.c.b16 %v4761, %v4759
    %v4784 = vpack.c.b16 %v4764, %v4762
    %v4785 = vpack.c.b16 %v4765, %v4763
    %v4786 = vpack.c.b16 %v4768, %v4766
    %v4787 = vpack.c.b16 %v4769, %v4767
    %v4788 = vpack.c.b16 %v4772, %v4770
    %v4789 = vpack.c.b16 %v4773, %v4771
    %4806 = vmatprep.subr.bf16.mxu0 %v4775
    %4807 = vmatpush1.bf16.msra.mxu0 %v4774
    %4808 = vmatprep.subr.bf16.mxu0 %v4777
    %4809 = vmatpush1.bf16.msra.mxu0 %v4776
    %4810 = vmatprep.subr.bf16.mxu0 %v4779
    %4811 = vmatpush1.bf16.msra.mxu0 %v4778
    %4812 = vmatprep.subr.bf16.mxu0 %v4781
    %4813 = vmatpush1.bf16.msra.mxu0 %v4780
    %4814 = vmatprep.subr.bf16.mxu0 %v4783
    %4815 = vmatpush1.bf16.msra.mxu0 %v4782
    %4816 = vmatprep.subr.bf16.mxu0 %v4785
    %4817 = vmatpush1.bf16.msra.mxu0 %v4784
    %4818 = vmatprep.subr.bf16.mxu0 %v4787
    %4819 = vmatpush1.bf16.msra.mxu0 %v4786
    %4820 = vmatprep.subr.bf16.mxu0 %v4789
    %4821 = vmatpush1.bf16.msra.mxu0 %v4788
    %4822 = vmatprep.subr.bf16.mxu0 0
    %4823 = vmatpush1.bf16.msra.mxu0 0
    %4824 = vmatprep.subr.bf16.mxu0 0
    %4825 = vmatpush1.bf16.msra.mxu0 0
    %4826 = vmatprep.subr.bf16.mxu0 0
    %4827 = vmatpush1.bf16.msra.mxu0 0
    %4828 = vmatprep.subr.bf16.mxu0 0
    %4829 = vmatpush1.bf16.msra.mxu0 0
    %4830 = vmatprep.subr.bf16.mxu0 0
    %4831 = vmatpush1.bf16.msra.mxu0 0
    %4832 = vmatprep.subr.bf16.mxu0 0
    %4833 = vmatpush1.bf16.msra.mxu0 0
    %4834 = vmatprep.subr.bf16.mxu0 0
    %4835 = vmatpush1.bf16.msra.mxu0 0
    %4836 = vmatprep.subr.bf16.mxu0 0
    %4837 = vmatpush1.bf16.msra.mxu0 0
    %4838 = vmatprep.mubr.bf16.mxu0 0
    %4839 = vmatmul.mubr.bf16.gmra.mrb[0].mxu0 %v4724
    %v4840 = vpop.f32.mrb[0].mxu0
    %v4841 = vadd.f32 0.0, %v4840
    %v4842 = vpop.f32.mrb[0].mxu0
    %v4843 = vadd.f32 0.0, %v4842
    %v4844 = vpop.f32.mrb[0].mxu0
    %v4845 = vpop.f32.mrb[0].mxu0
    %4846 = vdwg.mxu0
    %v4847 = vrot.slane %v4721, 7
    %v4848 = vsel %vm1518, %v4847, %v4720
    %v4849 = vpack.c.b16 %v4848, %v4848
    %v4867 = vunpack.c.l.b16 %v4686
    %v4868 = vunpack.c.h.b16 %v4686
    %v4869 = vunpack.c.l.b16 %v4687
    %v4870 = vunpack.c.h.b16 %v4687
    %v4871 = vunpack.c.l.b16 %v4688
    %v4872 = vunpack.c.h.b16 %v4688
    %v4873 = vunpack.c.l.b16 %v4689
    %v4874 = vunpack.c.h.b16 %v4689
    %v4875 = vunpack.c.l.b16 %v4690
    %v4876 = vunpack.c.h.b16 %v4690
    %v4877 = vunpack.c.l.b16 %v4691
    %v4878 = vunpack.c.h.b16 %v4691
    %v4879 = vunpack.c.l.b16 %v4692
    %v4880 = vunpack.c.h.b16 %v4692
    %v4881 = vunpack.c.l.b16 %v4693
    %v4882 = vunpack.c.h.b16 %v4693
    %v4883 = vunpack.c.l.b16 %v4694
    %v4884 = vunpack.c.h.b16 %v4694
    %v4885 = vunpack.c.l.b16 %v4695
    %v4886 = vunpack.c.h.b16 %v4695
    %v4887 = vunpack.c.l.b16 %v4696
    %v4888 = vunpack.c.h.b16 %v4696
    %v4889 = vunpack.c.l.b16 %v4697
    %v4890 = vunpack.c.h.b16 %v4697
    %v4891 = vunpack.c.l.b16 %v4698
    %v4892 = vunpack.c.h.b16 %v4698
    %v4893 = vunpack.c.l.b16 %v4699
    %v4894 = vunpack.c.h.b16 %v4699
    %v4895 = vunpack.c.l.b16 %v4700
    %v4896 = vunpack.c.h.b16 %v4700
    %v4897 = vunpack.c.l.b16 %v4701
    %v4898 = vunpack.c.h.b16 %v4701
    %v4899 = vpack.c.b16 %v4869, %v4867
    %v4900 = vpack.c.b16 %v4870, %v4868
    %v4901 = vpack.c.b16 %v4873, %v4871
    %v4902 = vpack.c.b16 %v4874, %v4872
    %v4903 = vpack.c.b16 %v4877, %v4875
    %v4904 = vpack.c.b16 %v4878, %v4876
    %v4905 = vpack.c.b16 %v4881, %v4879
    %v4906 = vpack.c.b16 %v4882, %v4880
    %v4907 = vpack.c.b16 %v4885, %v4883
    %v4908 = vpack.c.b16 %v4886, %v4884
    %v4909 = vpack.c.b16 %v4889, %v4887
    %v4910 = vpack.c.b16 %v4890, %v4888
    %v4911 = vpack.c.b16 %v4893, %v4891
    %v4912 = vpack.c.b16 %v4894, %v4892
    %v4913 = vpack.c.b16 %v4897, %v4895
    %v4914 = vpack.c.b16 %v4898, %v4896
    %4931 = vmatprep.subr.bf16.mxu0 %v4900
    %4932 = vmatpush1.bf16.msra.mxu0 %v4899
    %4933 = vmatprep.subr.bf16.mxu0 %v4902
    %4934 = vmatpush1.bf16.msra.mxu0 %v4901
    %4935 = vmatprep.subr.bf16.mxu0 %v4904
    %4936 = vmatpush1.bf16.msra.mxu0 %v4903
    %4937 = vmatprep.subr.bf16.mxu0 %v4906
    %4938 = vmatpush1.bf16.msra.mxu0 %v4905
    %4939 = vmatprep.subr.bf16.mxu0 %v4908
    %4940 = vmatpush1.bf16.msra.mxu0 %v4907
    %4941 = vmatprep.subr.bf16.mxu0 %v4910
    %4942 = vmatpush1.bf16.msra.mxu0 %v4909
    %4943 = vmatprep.subr.bf16.mxu0 %v4912
    %4944 = vmatpush1.bf16.msra.mxu0 %v4911
    %4945 = vmatprep.subr.bf16.mxu0 %v4914
    %4946 = vmatpush1.bf16.msra.mxu0 %v4913
    %4947 = vmatprep.subr.bf16.mxu0 0
    %4948 = vmatpush1.bf16.msra.mxu0 0
    %4949 = vmatprep.subr.bf16.mxu0 0
    %4950 = vmatpush1.bf16.msra.mxu0 0
    %4951 = vmatprep.subr.bf16.mxu0 0
    %4952 = vmatpush1.bf16.msra.mxu0 0
    %4953 = vmatprep.subr.bf16.mxu0 0
    %4954 = vmatpush1.bf16.msra.mxu0 0
    %4955 = vmatprep.subr.bf16.mxu0 0
    %4956 = vmatpush1.bf16.msra.mxu0 0
    %4957 = vmatprep.subr.bf16.mxu0 0
    %4958 = vmatpush1.bf16.msra.mxu0 0
    %4959 = vmatprep.subr.bf16.mxu0 0
    %4960 = vmatpush1.bf16.msra.mxu0 0
    %4961 = vmatprep.subr.bf16.mxu0 0
    %4962 = vmatpush1.bf16.msra.mxu0 0
    %4963 = vmatprep.mubr.bf16.mxu0 0
    %4964 = vmatmul.mubr.bf16.gmra.mrb[0].mxu0 %v4849
    %v4965 = vpop.f32.mrb[0].mxu0
    %v4966 = vadd.f32 %v4841, %v4965
    %v4967 = vpop.f32.mrb[0].mxu0
    %v4968 = vadd.f32 %v4843, %v4967
    %v4969 = vpop.f32.mrb[0].mxu0
    %v4970 = vpop.f32.mrb[0].mxu0
    %4971 = vdwg.mxu0
    %v4972 = vld [vmem:[#allocation5 + $0x240] sm:$0xff]
    %v4973 = vld [vmem:[#allocation5 + $0x24c] sm:$0xff]
    %v4974 = vld [vmem:[#allocation5 + $0x258] sm:$0xff]
    %v4975 = vld [vmem:[#allocation5 + $0x264] sm:$0xff]
    %v4976 = vld [vmem:[#allocation5 + $0x270] sm:$0xff]
    %v4977 = vld [vmem:[#allocation5 + $0x27c] sm:$0xff]
    %v4978 = vld [vmem:[#allocation5 + $0x288] sm:$0xff]
    %v4979 = vld [vmem:[#allocation5 + $0x294] sm:$0xff]
    %v4980 = vld [vmem:[#allocation5 + $0x2a0] sm:$0xff]
    %v4981 = vld [vmem:[#allocation5 + $0x2ac] sm:$0xff]
    %v4982 = vld [vmem:[#allocation5 + $0x2b8] sm:$0xff]
    %v4983 = vld [vmem:[#allocation5 + $0x2c4] sm:$0xff]
    %v4984 = vld [vmem:[#allocation5 + $0x2d0] sm:$0xff]
    %v4985 = vld [vmem:[#allocation5 + $0x2dc] sm:$0xff]
    %v4986 = vld [vmem:[#allocation5 + $0x2e8] sm:$0xff]
    %v4987 = vld [vmem:[#allocation5 + $0x2f4] sm:$0xff]
    %v4988 = vrot.slane %v4720, 2
    %v4989 = vrot.slane %v4721, 1
    %v4990 = vsel %vm1518, %v4989, %v4988
    %v4991 = vpack.c.b16 %v4990, %v4990
    %v5009 = vunpack.c.l.b16 %v4972
    %v5010 = vunpack.c.h.b16 %v4972
    %v5011 = vunpack.c.l.b16 %v4973
    %v5012 = vunpack.c.h.b16 %v4973
    %v5013 = vunpack.c.l.b16 %v4974
    %v5014 = vunpack.c.h.b16 %v4974
    %v5015 = vunpack.c.l.b16 %v4975
    %v5016 = vunpack.c.h.b16 %v4975
    %v5017 = vunpack.c.l.b16 %v4976
    %v5018 = vunpack.c.h.b16 %v4976
    %v5019 = vunpack.c.l.b16 %v4977
    %v5020 = vunpack.c.h.b16 %v4977
    %v5021 = vunpack.c.l.b16 %v4978
    %v5022 = vunpack.c.h.b16 %v4978
    %v5023 = vunpack.c.l.b16 %v4979
    %v5024 = vunpack.c.h.b16 %v4979
    %v5025 = vunpack.c.l.b16 %v4980
    %v5026 = vunpack.c.h.b16 %v4980
    %v5027 = vunpack.c.l.b16 %v4981
    %v5028 = vunpack.c.h.b16 %v4981
    %v5029 = vunpack.c.l.b16 %v4982
    %v5030 = vunpack.c.h.b16 %v4982
    %v5031 = vunpack.c.l.b16 %v4983
    %v5032 = vunpack.c.h.b16 %v4983
    %v5033 = vunpack.c.l.b16 %v4984
    %v5034 = vunpack.c.h.b16 %v4984
    %v5035 = vunpack.c.l.b16 %v4985
    %v5036 = vunpack.c.h.b16 %v4985
    %v5037 = vunpack.c.l.b16 %v4986
    %v5038 = vunpack.c.h.b16 %v4986
    %v5039 = vunpack.c.l.b16 %v4987
    %v5040 = vunpack.c.h.b16 %v4987
    %v5041 = vpack.c.b16 %v5011, %v5009
    %v5042 = vpack.c.b16 %v5012, %v5010
    %v5043 = vpack.c.b16 %v5015, %v5013
    %v5044 = vpack.c.b16 %v5016, %v5014
    %v5045 = vpack.c.b16 %v5019, %v5017
    %v5046 = vpack.c.b16 %v5020, %v5018
    %v5047 = vpack.c.b16 %v5023, %v5021
    %v5048 = vpack.c.b16 %v5024, %v5022
    %v5049 = vpack.c.b16 %v5027, %v5025
    %v5050 = vpack.c.b16 %v5028, %v5026
    %v5051 = vpack.c.b16 %v5031, %v5029
    %v5052 = vpack.c.b16 %v5032, %v5030
    %v5053 = vpack.c.b16 %v5035, %v5033
    %v5054 = vpack.c.b16 %v5036, %v5034
    %v5055 = vpack.c.b16 %v5039, %v5037
    %v5056 = vpack.c.b16 %v5040, %v5038
    %5073 = vmatprep.subr.bf16.mxu0 %v5042
    %5074 = vmatpush1.bf16.msra.mxu0 %v5041
    %5075 = vmatprep.subr.bf16.mxu0 %v5044
    %5076 = vmatpush1.bf16.msra.mxu0 %v5043
    %5077 = vmatprep.subr.bf16.mxu0 %v5046
    %5078 = vmatpush1.bf16.msra.mxu0 %v5045
    %5079 = vmatprep.subr.bf16.mxu0 %v5048
    %5080 = vmatpush1.bf16.msra.mxu0 %v5047
    %5081 = vmatprep.subr.bf16.mxu0 %v5050
    %5082 = vmatpush1.bf16.msra.mxu0 %v5049
    %5083 = vmatprep.subr.bf16.mxu0 %v5052
    %5084 = vmatpush1.bf16.msra.mxu0 %v5051
    %5085 = vmatprep.subr.bf16.mxu0 %v5054
    %5086 = vmatpush1.bf16.msra.mxu0 %v5053
    %5087 = vmatprep.subr.bf16.mxu0 %v5056
    %5088 = vmatpush1.bf16.msra.mxu0 %v5055
    %5089 = vmatprep.subr.bf16.mxu0 0
    %5090 = vmatpush1.bf16.msra.mxu0 0
    %5091 = vmatprep.subr.bf16.mxu0 0
    %5092 = vmatpush1.bf16.msra.mxu0 0
    %5093 = vmatprep.subr.bf16.mxu0 0
    %5094 = vmatpush1.bf16.msra.mxu0 0
    %5095 = vmatprep.subr.bf16.mxu0 0
    %5096 = vmatpush1.bf16.msra.mxu0 0
    %5097 = vmatprep.subr.bf16.mxu0 0
    %5098 = vmatpush1.bf16.msra.mxu0 0
    %5099 = vmatprep.subr.bf16.mxu0 0
    %5100 = vmatpush1.bf16.msra.mxu0 0
    %5101 = vmatprep.subr.bf16.mxu0 0
    %5102 = vmatpush1.bf16.msra.mxu0 0
    %5103 = vmatprep.subr.bf16.mxu0 0
    %5104 = vmatpush1.bf16.msra.mxu0 0
    %5105 = vmatprep.mubr.bf16.mxu0 0
    %5106 = vmatmul.mubr.bf16.gmra.mrb[0].mxu0 %v4991
    %v5107 = vpop.f32.mrb[0].mxu0
    %v5108 = vadd.f32 0.0, %v5107
    %v5109 = vpop.f32.mrb[0].mxu0
    %v5110 = vadd.f32 0.0, %v5109
    %v5111 = vpop.f32.mrb[0].mxu0
    %v5112 = vpop.f32.mrb[0].mxu0
    %5113 = vdwg.mxu0
    %v5114 = vadd.f32 %v4966, %v5108
    %v5115 = vadd.f32 %v4968, %v5110
    %v5116 = vld [vmem:[#allocation5 + $0x300] sm:$0xff]
    %v5117 = vld [vmem:[#allocation5 + $0x30c] sm:$0xff]
    %v5118 = vld [vmem:[#allocation5 + $0x318] sm:$0xff]
    %v5119 = vld [vmem:[#allocation5 + $0x324] sm:$0xff]
    %v5120 = vld [vmem:[#allocation5 + $0x330] sm:$0xff]
    %v5121 = vld [vmem:[#allocation5 + $0x33c] sm:$0xff]
    %v5122 = vld [vmem:[#allocation5 + $0x348] sm:$0xff]
    %v5123 = vld [vmem:[#allocation5 + $0x354] sm:$0xff]
    %v5124 = vld [vmem:[#allocation5 + $0x360] sm:$0xff]
    %v5125 = vld [vmem:[#allocation5 + $0x36c] sm:$0xff]
    %v5126 = vld [vmem:[#allocation5 + $0x378] sm:$0xff]
    %v5127 = vld [vmem:[#allocation5 + $0x384] sm:$0xff]
    %v5128 = vld [vmem:[#allocation5 + $0x390] sm:$0xff]
    %v5129 = vld [vmem:[#allocation5 + $0x39c] sm:$0xff]
    %v5130 = vld [vmem:[#allocation5 + $0x3a8] sm:$0xff]
    %v5131 = vld [vmem:[#allocation5 + $0x3b4] sm:$0xff]
    %v5132 = vrot.slane %v4720, 3
    %v5133 = vrot.slane %v4721, 2
    %v5134 = vsel %vm1518, %v5133, %v5132
    %v5135 = vpack.c.b16 %v5134, %v5134
    %v5153 = vunpack.c.l.b16 %v5116
    %v5154 = vunpack.c.h.b16 %v5116
    %v5155 = vunpack.c.l.b16 %v5117
    %v5156 = vunpack.c.h.b16 %v5117
    %v5157 = vunpack.c.l.b16 %v5118
    %v5158 = vunpack.c.h.b16 %v5118
    %v5159 = vunpack.c.l.b16 %v5119
    %v5160 = vunpack.c.h.b16 %v5119
    %v5161 = vunpack.c.l.b16 %v5120
    %v5162 = vunpack.c.h.b16 %v5120
    %v5163 = vunpack.c.l.b16 %v5121
    %v5164 = vunpack.c.h.b16 %v5121
    %v5165 = vunpack.c.l.b16 %v5122
    %v5166 = vunpack.c.h.b16 %v5122
    %v5167 = vunpack.c.l.b16 %v5123
    %v5168 = vunpack.c.h.b16 %v5123
    %v5169 = vunpack.c.l.b16 %v5124
    %v5170 = vunpack.c.h.b16 %v5124
    %v5171 = vunpack.c.l.b16 %v5125
    %v5172 = vunpack.c.h.b16 %v5125
    %v5173 = vunpack.c.l.b16 %v5126
    %v5174 = vunpack.c.h.b16 %v5126
    %v5175 = vunpack.c.l.b16 %v5127
    %v5176 = vunpack.c.h.b16 %v5127
    %v5177 = vunpack.c.l.b16 %v5128
    %v5178 = vunpack.c.h.b16 %v5128
    %v5179 = vunpack.c.l.b16 %v5129
    %v5180 = vunpack.c.h.b16 %v5129
    %v5181 = vunpack.c.l.b16 %v5130
    %v5182 = vunpack.c.h.b16 %v5130
    %v5183 = vunpack.c.l.b16 %v5131
    %v5184 = vunpack.c.h.b16 %v5131
    %v5185 = vpack.c.b16 %v5155, %v5153
    %v5186 = vpack.c.b16 %v5156, %v5154
    %v5187 = vpack.c.b16 %v5159, %v5157
    %v5188 = vpack.c.b16 %v5160, %v5158
    %v5189 = vpack.c.b16 %v5163, %v5161
    %v5190 = vpack.c.b16 %v5164, %v5162
    %v5191 = vpack.c.b16 %v5167, %v5165
    %v5192 = vpack.c.b16 %v5168, %v5166
    %v5193 = vpack.c.b16 %v5171, %v5169
    %v5194 = vpack.c.b16 %v5172, %v5170
    %v5195 = vpack.c.b16 %v5175, %v5173
    %v5196 = vpack.c.b16 %v5176, %v5174
    %v5197 = vpack.c.b16 %v5179, %v5177
    %v5198 = vpack.c.b16 %v5180, %v5178
    %v5199 = vpack.c.b16 %v5183, %v5181
    %v5200 = vpack.c.b16 %v5184, %v5182
    %5217 = vmatprep.subr.bf16.mxu0 %v5186
    %5218 = vmatpush1.bf16.msra.mxu0 %v5185
    %5219 = vmatprep.subr.bf16.mxu0 %v5188
    %5220 = vmatpush1.bf16.msra.mxu0 %v5187
    %5221 = vmatprep.subr.bf16.mxu0 %v5190
    %5222 = vmatpush1.bf16.msra.mxu0 %v5189
    %5223 = vmatprep.subr.bf16.mxu0 %v5192
    %5224 = vmatpush1.bf16.msra.mxu0 %v5191
    %5225 = vmatprep.subr.bf16.mxu0 %v5194
    %5226 = vmatpush1.bf16.msra.mxu0 %v5193
    %5227 = vmatprep.subr.bf16.mxu0 %v5196
    %5228 = vmatpush1.bf16.msra.mxu0 %v5195
    %5229 = vmatprep.subr.bf16.mxu0 %v5198
    %5230 = vmatpush1.bf16.msra.mxu0 %v5197
    %5231 = vmatprep.subr.bf16.mxu0 %v5200
    %5232 = vmatpush1.bf16.msra.mxu0 %v5199
    %5233 = vmatprep.subr.bf16.mxu0 0
    %5234 = vmatpush1.bf16.msra.mxu0 0
    %5235 = vmatprep.subr.bf16.mxu0 0
    %5236 = vmatpush1.bf16.msra.mxu0 0
    %5237 = vmatprep.subr.bf16.mxu0 0
    %5238 = vmatpush1.bf16.msra.mxu0 0
    %5239 = vmatprep.subr.bf16.mxu0 0
    %5240 = vmatpush1.bf16.msra.mxu0 0
    %5241 = vmatprep.subr.bf16.mxu0 0
    %5242 = vmatpush1.bf16.msra.mxu0 0
    %5243 = vmatprep.subr.bf16.mxu0 0
    %5244 = vmatpush1.bf16.msra.mxu0 0
    %5245 = vmatprep.subr.bf16.mxu0 0
    %5246 = vmatpush1.bf16.msra.mxu0 0
    %5247 = vmatprep.subr.bf16.mxu0 0
    %5248 = vmatpush1.bf16.msra.mxu0 0
    %5249 = vmatprep.mubr.bf16.mxu0 0
    %5250 = vmatmul.mubr.bf16.gmra.mrb[0].mxu0 %v5135
    %v5251 = vpop.f32.mrb[0].mxu0
    %v5252 = vadd.f32 0.0, %v5251
    %v5253 = vpop.f32.mrb[0].mxu0
    %v5254 = vadd.f32 0.0, %v5253
    %v5255 = vpop.f32.mrb[0].mxu0
    %v5256 = vpop.f32.mrb[0].mxu0
    %5257 = vdwg.mxu0
    %v5258 = vadd.f32 %v5114, %v5252
    %v5259 = vadd.f32 %v5115, %v5254
    %s5260 = scalar_lea.vmem %s3, 25
    %v5261 = vld [vmem:[%s5260] ss:$8 sm:$0x3]
    %v5263 = vlaneseq
    %v5264 = vshrl.u32 %v5263, 7
    %v5265 = vsub.s32 0, %v5264
    %v5266 = vrot.slane %v5261, %v5265
    %v5267 = vlaneseq
    %v5268 = vshrl.u32 %v5267, 7
    %v5269 = vsub.s32 1, %v5268
    %v5270 = vrot.slane %v5261, %v5269
    %v5273 = vadd.f32 %v5258, %v5266
    %v5274 = vadd.f32 %v5259, %v5270
    %v5275 = vmax.f32 %v5273, 0.0
    %v5276 = vmax.f32 %v5274, 0.0
    %v5279 = vcombine.low %v5275, %v5276
    %v5281 = vunpack.c.l.s4 1983009808
    %v5282 = vunpack.c.0.s8 %v5281
    %v5283 = vlaneseq
    %v5284 = vshrl.u32 %v5283, 7
    %v5285 = vsub.s32 %v5282, %v5284
    %v5286 = vrot.slane %v5279, %v5285
    %5288 = vst [vmem:[#allocation7] sm:$0xf] %v5286
    // Predicated region
    $region26: #{cnn_forward.1} parent=1 // pred_check
      _
    $region27: #{cnn_forward.1} parent=1 // pred_check_branch
      %5290 = sbr.rel (0) target = $region29
    $region28: #{cnn_forward.1} parent=1 // pred_region
      %s5292 = ssub.s32 64, 64
      %5293 = vsyncadd [#allocation4], %s5292
      %s5295 = sshll.u32 [#allocation7], 4
      %s5296 = int_to_ptr.vmem [resolvable:$true] %s5295
      %5298 = dma.vmem_to_hbm [thread:$0]  %s5296, 64, %s4, [#allocation4]
    $region29: #{cnn_forward.1} parent=1 // pred_fallthru
      _
    // Predicated region
    $region30: #{cnn_forward.1} parent=1 // pred_check
      _
    $region31: #{cnn_forward.1} parent=1 // pred_check_branch
      %5300 = sbr.rel (0) target = $region33
    $region32: #{cnn_forward.1} parent=1 // pred_region
      %5301 = dma.done [#allocation4], 64
    $region33: #{cnn_forward.1} parent=1 // pred_fallthru
      _
    %5302 = vsyncpa [#allocation3], 1
    %5303 = vsyncpa [#allocation6], 1
    %5304 = vsyncpa [#allocation4], 1

</llo_original>
